<compile_context>
chip_gen: v7x
topology: tpu7x:2x2x1
jax: 0.10.0
libtpu: 0.0.40
codegen_flags: <defaults>
</compile_context>

<pallas_src>
import math

import jax
import jax.numpy as jnp
import numpy as np
from jax.experimental import pallas as pl
from jax.experimental.pallas import tpu as pltpu

# ----------------------------- model config ----------------------------------
VOCAB    = 100     # synthetic vocab
MAX_POS  = 64
D        = 32      # manager.plm_dim (hidden size)
H        = 2       # attention heads
HD       = D // H
FFN      = 64      # intermediate size
N_LAYERS = 2
LN_EPS   = 1e-12
NEG_BIG  = -1e30

LANES     = 128            # lane-dense slab width (and padded hidden width)
N_WBLOCKS = 8              # wq0 wq1 wk0 wk1 wvo0 wvo1 w1 w2
WROWS     = N_WBLOCKS * LANES   # rows of the bf16 per-layer weight slab
VROWS     = 16             # rows of the f32 per-layer bias/LN slab (11 used)


# ----------------------------- fused Pallas kernel ----------------------------
def fused_encoder_kernel(emb_ref, amask_ref, pkeep_ref, misc_ref,
                         wm_ref, wv_ref, out_ref):
    BL = emb_ref.shape[0]            # flattened batch * seq
    B = pkeep_ref.shape[0]
    inv_d = 1.0 / D
    scale = 1.0 / math.sqrt(HD)

    h = emb_ref[...]                 # [BL, 128] f32, lanes D:128 are zero
    amask = amask_ref[...]           # [BL, BL] additive mask (0 / -10000)
    pkeep = pkeep_ref[...]           # [B, BL]  pooling keep mask (1 / 0)

    emb_g = misc_ref[0:1, :]         # [1, 128] (zero-padded past D)
    emb_b = misc_ref[1:2, :]
    pq    = misc_ref[2:3, :]         # pooler query

    def ln(x, g, b):
        # Single-pass moments (both reductions issue in parallel).  Zero-padded
        # lanes stay exactly zero because g/b are zero there.
        s1 = jnp.sum(x, axis=-1, keepdims=True)
        s2 = jnp.sum(x * x, axis=-1, keepdims=True)
        mu = s1 * inv_d
        var = s2 * inv_d - mu * mu
        return (x - mu) * jax.lax.rsqrt(var + LN_EPS) * g + b

    def softmax_rows(s):
        m = jnp.max(s, axis=-1, keepdims=True)
        e = jnp.exp(s - m)
        den = jnp.sum(e, axis=-1, keepdims=True)
        return e * pl.reciprocal(den, approx=True)

    # embedding layernorm
    h = ln(h, emb_g, emb_b)

    for l in range(N_LAYERS):                       # static unrolled loop
        def wblk(idx, _l=l):
            return wm_ref[_l, idx * LANES:(idx + 1) * LANES, :]   # [128,128] bf16
        wq0, wq1, wk0, wk1, wvo0, wvo1, w1, w2 = (wblk(i) for i in range(N_WBLOCKS))

        bq0 = wv_ref[l, 0:1, :]
        bq1 = wv_ref[l, 1:2, :]
        bk0 = wv_ref[l, 2:3, :]
        bk1 = wv_ref[l, 3:4, :]
        bvo = wv_ref[l, 4:5, :]       # bv @ Wo + bo (precomputed at pack time)
        b1  = wv_ref[l, 5:6, :]
        b2  = wv_ref[l, 6:7, :]
        g1  = wv_ref[l, 7:8, :]
        be1 = wv_ref[l, 8:9, :]
        g2  = wv_ref[l, 9:10, :]
        be2 = wv_ref[l, 10:11, :]

        hb = h.astype(jnp.bfloat16)   # cast once, reused by 6 weight dots

        # per-head Q/K projections (weight blocks already head-split + padded)
        q0 = jnp.dot(hb, wq0, preferred_element_type=jnp.float32) + bq0
        q1 = jnp.dot(hb, wq1, preferred_element_type=jnp.float32) + bq1
        k0 = jnp.dot(hb, wk0, preferred_element_type=jnp.float32) + bk0
        k1 = jnp.dot(hb, wk1, preferred_element_type=jnp.float32) + bk1
        # fused V*Wo projection per head
        hv0 = jnp.dot(hb, wvo0, preferred_element_type=jnp.float32)
        hv1 = jnp.dot(hb, wvo1, preferred_element_type=jnp.float32)

        # flattened-batch scores + block-diagonal / key-padding additive mask
        s0 = jnp.einsum("ld,md->lm", q0, k0,
                        preferred_element_type=jnp.float32) * scale + amask
        s1 = jnp.einsum("ld,md->lm", q1, k1,
                        preferred_element_type=jnp.float32) * scale + amask
        p0 = softmax_rows(s0)
        p1 = softmax_rows(s1)

        ctx = (jnp.dot(p0, hv0, preferred_element_type=jnp.float32)
               + jnp.dot(p1, hv1, preferred_element_type=jnp.float32) + bvo)

        h1 = ln(ctx + h, g1, be1)

        # FFN over the whole [BL, 128] slab (zero-padded weights keep padding 0)
        mid = jnp.dot(h1.astype(jnp.bfloat16), w1,
                      preferred_element_type=jnp.float32) + b1
        # TODO(synk): HF BERT defaults to exact (erf) GELU; tanh-approx kept for
        # guaranteed Mosaic transcendental support (matches in-script reference).
        mid = jax.nn.gelu(mid, approximate=True)
        ffn = jnp.dot(mid.astype(jnp.bfloat16), w2,
                      preferred_element_type=jnp.float32) + b2

        h = ln(ffn + h1, g2, be2)

    # learned-query attention pooling (scaled_dp_attention with pooler_query)
    pqB = jnp.broadcast_to(pq, (B, LANES))
    sp = jnp.einsum("bd,jd->bj", pqB, h,
                    preferred_element_type=jnp.float32) * (1.0 / math.sqrt(D))
    sp = jnp.where(pkeep > 0, sp, NEG_BIG)
    pp = softmax_rows(sp)
    out_ref[...] = jnp.dot(pp, h,
                           preferred_element_type=jnp.float32).astype(out_ref.dtype)


# ----------------------------- pallas_call wrapper ----------------------------
def fused_encoder(emb_pad, attn_add, pool_keep, packed):
    BL = emb_pad.shape[0]
    B = pool_keep.shape[0]

    out = pl.pallas_call(
        fused_encoder_kernel,
        out_shape=jax.ShapeDtypeStruct((B, LANES), jnp.float32),
        grid=(1,),
        in_specs=[
            pl.BlockSpec((BL, LANES), lambda i: (0, 0)),
            pl.BlockSpec((BL, BL), lambda i: (0, 0)),
            pl.BlockSpec((B, BL), lambda i: (0, 0)),
            pl.BlockSpec((8, LANES), lambda i: (0, 0)),
            pl.BlockSpec((N_LAYERS, WROWS, LANES), lambda i: (0, 0, 0)),
            pl.BlockSpec((N_LAYERS, VROWS, LANES), lambda i: (0, 0, 0)),
        ],
        out_specs=pl.BlockSpec((B, LANES), lambda i: (0, 0)),
        compiler_params=pltpu.CompilerParams(dimension_semantics=("arbitrary",)),
    )(emb_pad, attn_add, pool_keep,
      packed["misc"], packed["layers_w"], packed["layers_v"])
    return out[:, :D]        # lane-dense store in kernel; slice in the wrapper


# ----------------------------- parameters ------------------------------------
def init_params(key):
    ks = iter(jax.random.split(key, 128))

    def nrm(shape, std=0.02):
        return jax.random.normal(next(ks), shape, jnp.float32) * std

    params = {
        "word_emb": nrm((VOCAB, D)),
        "pos_emb": nrm((MAX_POS, D)),
        "type_emb": nrm((2, D)),
        "emb_ln_g": jnp.ones((D,), jnp.float32),
        "emb_ln_b": jnp.zeros((D,), jnp.float32),
        # xavier_normal_ on a (1, D) parameter: std = sqrt(2 / (1 + D))
        "pooler_query": jax.random.normal(next(ks), (1, D), jnp.float32)
                        * math.sqrt(2.0 / (1 + D)),
        "layers": [],
    }
    for _ in range(N_LAYERS):
        lp = {
            "wq": nrm((D, D)), "bq": nrm((D,)),
            "wk": nrm((D, D)), "bk": nrm((D,)),
            "wv": nrm((D, D)), "bv": nrm((D,)),
            "wo": nrm((D, D)), "bo": nrm((D,)),
            "ln1_g": jnp.ones((D,), jnp.float32), "ln1_b": jnp.zeros((D,), jnp.float32),
            "w1": nrm((D, FFN)), "b1": nrm((FFN,)),
            "w2": nrm((FFN, D)), "b2": nrm((D,)),
            "ln2_g": jnp.ones((D,), jnp.float32), "ln2_b": jnp.zeros((D,), jnp.float32),
        }
        params["layers"].append(lp)
    return params


def pack_params(params):
    """Pack weights into lane-dense, zero-padded slabs for the fused kernel.

    Per layer:
      layers_w (bf16) : 8 blocks of [128,128] stacked along rows:
          wq_head0, wq_head1, wk_head0, wk_head1,
          wvo_head0 (=Wv_h0 @ Wo_h0), wvo_head1, w1, w2   (all zero-padded)
      layers_v (f32)  : bias / LN rows (128-lane, zero-padded):
          bq0, bq1, bk0, bk1, bvo(=bv@Wo+bo), b1, b2, ln1_g, ln1_b, ln2_g, ln2_b
    """
    misc = jnp.zeros((8, LANES), jnp.float32)
    misc = misc.at[0, :D].set(params["emb_ln_g"])
    misc = misc.at[1, :D].set(params["emb_ln_b"])
    misc = misc.at[2, :D].set(params["pooler_query"][0])

    def blk(w):
        r, c = w.shape
        b = jnp.zeros((LANES, LANES), jnp.float32)
        return b.at[:r, :c].set(w)

    w_slabs, v_slabs = [], []
    for lp in params["layers"]:
        blocks = [
            blk(lp["wq"][:, :HD]), blk(lp["wq"][:, HD:]),
            blk(lp["wk"][:, :HD]), blk(lp["wk"][:, HD:]),
            blk(lp["wv"][:, :HD] @ lp["wo"][:HD, :]),
            blk(lp["wv"][:, HD:] @ lp["wo"][HD:, :]),
            blk(lp["w1"]), blk(lp["w2"]),
        ]
        w_slabs.append(jnp.concatenate(blocks, axis=0).astype(jnp.bfloat16))

        v = jnp.zeros((VROWS, LANES), jnp.float32)
        v = v.at[0, :HD].set(lp["bq"][:HD])
        v = v.at[1, :HD].set(lp["bq"][HD:])
        v = v.at[2, :HD].set(lp["bk"][:HD])
        v = v.at[3, :HD].set(lp["bk"][HD:])
        v = v.at[4, :D].set(lp["bv"] @ lp["wo"] + lp["bo"])
        v = v.at[5, :FFN].set(lp["b1"])
        v = v.at[6, :D].set(lp["b2"])
        v = v.at[7, :D].set(lp["ln1_g"])
        v = v.at[8, :D].set(lp["ln1_b"])
        v = v.at[9, :D].set(lp["ln2_g"])
        v = v.at[10, :D].set(lp["ln2_b"])
        v_slabs.append(v)

    return {"misc": misc,
            "layers_w": jnp.stack(w_slabs, axis=0),
            "layers_v": jnp.stack(v_slabs, axis=0)}


# ----------------------------- forward (glue + fused kernel) ------------------
def gated_bert_encoder_forward(params, packed, token_id, attn_mask, token_weight=None):
    original_shape = token_id.shape
    L = original_shape[-1]
    token_id = token_id.reshape(-1, L)
    attn_mask = attn_mask.reshape(-1, L)
    B = token_id.shape[0]
    BL = B * L

    # BERT embeddings: word + position + token_type (gathers stay in plain JAX)
    we = jnp.take(params["word_emb"], token_id, axis=0)            # [B, L, D]
    pe = params["pos_emb"][:L][None]                               # [1, L, D]
    te = params["type_emb"][0][None, None]                         # [1, 1, D]
    emb = we + pe + te
    if token_weight is not None:
        tw = token_weight.reshape(-1, L)[..., None]
        # forward value of (w + (1 - detach(w))) is exactly 1 (gradient trick only)
        emb = emb * (tw + (1.0 - jax.lax.stop_gradient(tw)))

    # Flatten + zero-pad lanes to 128 in the wrapper (free XLA layout plumbing).
    emb_pad = jnp.pad(emb.reshape(BL, D).astype(jnp.float32),
                      ((0, 0), (0, LANES - D)))

    # Block-diagonal (same sequence) + key-padding additive mask, built ONCE.
    mask_f = attn_mask.astype(jnp.float32)                         # [B, L]
    seq_id = jnp.repeat(jnp.arange(B), L)                          # [BL]
    same_seq = seq_id[:, None] == seq_id[None, :]                  # [BL, BL]
    key_ok = (mask_f.reshape(BL) > 0)[None, :]                     # [1, BL]
    attn_add = jnp.where(same_seq & key_ok, 0.0, -10000.0).astype(jnp.float32)

    # Pooling keep mask: query b may attend key j iff j is a non-pad token of b.
    pool_keep = ((jnp.arange(B)[:, None] == seq_id[None, :]) & key_ok)
    pool_keep = pool_keep.astype(jnp.float32)                      # [B, BL]

    pooled = fused_encoder(emb_pad, attn_add, pool_keep, packed)   # [B, D]
    return pooled.reshape(*original_shape[:-1], D)


# ----------------------------- pure-JAX reference -----------------------------
def reference_forward(params, token_id, attn_mask):
    original_shape = token_id.shape
    L = original_shape[-1]
    token_id = token_id.reshape(-1, L)
    attn_mask_f = attn_mask.reshape(-1, L).astype(jnp.float32)
    B = token_id.shape[0]

    def ln(x, g, b):
        mu = jnp.mean(x, -1, keepdims=True)
        var = jnp.mean((x - mu) ** 2, -1, keepdims=True)
        return (x - mu) * jax.lax.rsqrt(var + LN_EPS) * g + b

    we = jnp.take(params["word_emb"], token_id, axis=0)
    emb = we + params["pos_emb"][:L][None] + params["type_emb"][0][None, None]
    hidden = ln(emb, params["emb_ln_g"], params["emb_ln_b"])

    amask = (1.0 - attn_mask_f) * -10000.0                         # [B, L]
    for lp in params["layers"]:
        q = hidden @ lp["wq"] + lp["bq"]
        k = hidden @ lp["wk"] + lp["bk"]
        v = hidden @ lp["wv"] + lp["bv"]
        qh = q.reshape(B, L, H, HD)
        kh = k.reshape(B, L, H, HD)
        vh = v.reshape(B, L, H, HD)
        s = jnp.einsum("blhd,bmhd->bhlm", qh, kh) / math.sqrt(HD)
        s = s + amask[:, None, None, :]
        p = jax.nn.softmax(s, -1)
        ctx = jnp.einsum("bhlm,bmhd->blhd", p, vh).reshape(B, L, D)
        attn = ctx @ lp["wo"] + lp["bo"]
        h1 = ln(attn + hidden, lp["ln1_g"], lp["ln1_b"])
        mid = jax.nn.gelu(h1 @ lp["w1"] + lp["b1"], approximate=True)
        hidden = ln(mid @ lp["w2"] + lp["b2"] + h1, lp["ln2_g"], lp["ln2_b"])

    pq = params["pooler_query"]
    s = jnp.einsum("qd,bld->bql", pq, hidden) / math.sqrt(D)
    s = jnp.where(attn_mask_f[:, None, :] > 0, s, NEG_BIG)
    p = jax.nn.softmax(s, -1)
    out = jnp.einsum("bql,bld->bqd", p, hidden)[:, 0, :]
    return out.reshape(*original_shape[:-1], D)


# ----------------------------- main -------------------------------------------
if __name__ == "__main__":
    key = jax.random.PRNGKey(0)
    pkey, dkey = jax.random.split(key)
    params = init_params(pkey)
    packed = pack_params(params)

    B0, N0, L0 = 2, 3, 8                      # token_id: [batch, num_views, seq_len]
    token_id = jax.random.randint(dkey, (B0, N0, L0), 0, VOCAB, dtype=jnp.int32)
    lens = jnp.array([[8, 6, 4], [7, 8, 5]], dtype=jnp.int32)
    attn_mask = (jnp.arange(L0)[None, None, :] < lens[..., None]).astype(jnp.int32)

    out = gated_bert_encoder_forward(params, packed, token_id, attn_mask)
    out = jax.block_until_ready(out)
    assert out.shape == (B0, N0, D), out.shape

    ref = reference_forward(params, token_id, attn_mask)
    np.testing.assert_allclose(np.asarray(out), np.asarray(ref), rtol=1e-2, atol=1e-2)

    print("KERNEL_OK")
</pallas_src>

<mosaic_0001>
module attributes {stable_mosaic.version = 11 : i64} {
  func.func @fused_encoder_kernel(%arg0: i32, %arg1: memref<48x128xf32, #tpu.memory_space<vmem>>, %arg2: memref<48x48xf32, #tpu.memory_space<vmem>>, %arg3: memref<6x48xf32, #tpu.memory_space<vmem>>, %arg4: memref<8x128xf32, #tpu.memory_space<vmem>>, %arg5: memref<2x1024x128xbf16, #tpu.memory_space<vmem>>, %arg6: memref<2x16x128xf32, #tpu.memory_space<vmem>>, %arg7: memref<6x128xf32, #tpu.memory_space<vmem>>) attributes {dimension_semantics = [#tpu.dimension_semantics<arbitrary>], iteration_bounds = array<i64: 1>, scalar_prefetch = 0 : i64, scratch_operands = 0 : i64, tpu.core_type = #tpu.core_type<tc>, window_params = [{pipeline_mode = #tpu.pipeline_mode<synchronous>, transform_indices = @transform_0, window_bounds = array<i64: 48, 128>}, {pipeline_mode = #tpu.pipeline_mode<synchronous>, transform_indices = @transform_1, window_bounds = array<i64: 48, 48>}, {pipeline_mode = #tpu.pipeline_mode<synchronous>, transform_indices = @transform_2, window_bounds = array<i64: 6, 48>}, {pipeline_mode = #tpu.pipeline_mode<synchronous>, transform_indices = @transform_3, window_bounds = array<i64: 8, 128>}, {pipeline_mode = #tpu.pipeline_mode<synchronous>, transform_indices = @transform_4, window_bounds = array<i64: 2, 1024, 128>}, {pipeline_mode = #tpu.pipeline_mode<synchronous>, transform_indices = @transform_5, window_bounds = array<i64: 2, 16, 128>}, {pipeline_mode = #tpu.pipeline_mode<synchronous>, transform_indices = @transform_6, window_bounds = array<i64: 6, 128>}]} {
    %c0 = arith.constant 0 : index
    %c0_0 = arith.constant 0 : index
    %0 = vector.load %arg1[%c0, %c0_0] : memref<48x128xf32, #tpu.memory_space<vmem>>, vector<48x128xf32>
    %c0_1 = arith.constant 0 : index
    %c0_2 = arith.constant 0 : index
    %1 = vector.load %arg2[%c0_1, %c0_2] : memref<48x48xf32, #tpu.memory_space<vmem>>, vector<48x48xf32>
    %c0_3 = arith.constant 0 : index
    %c0_4 = arith.constant 0 : index
    %2 = vector.load %arg3[%c0_3, %c0_4] : memref<6x48xf32, #tpu.memory_space<vmem>>, vector<6x48xf32>
    %c0_5 = arith.constant 0 : index
    %c0_6 = arith.constant 0 : index
    %3 = vector.load %arg4[%c0_5, %c0_6] : memref<8x128xf32, #tpu.memory_space<vmem>>, vector<1x128xf32>
    %c1 = arith.constant 1 : index
    %c0_7 = arith.constant 0 : index
    %4 = vector.load %arg4[%c1, %c0_7] : memref<8x128xf32, #tpu.memory_space<vmem>>, vector<1x128xf32>
    %c2 = arith.constant 2 : index
    %c0_8 = arith.constant 0 : index
    %5 = vector.load %arg4[%c2, %c0_8] : memref<8x128xf32, #tpu.memory_space<vmem>>, vector<1x128xf32>
    %cst = arith.constant dense<0.000000e+00> : vector<48xf32>
    %6 = vector.multi_reduction <add>, %0, %cst [1] : vector<48x128xf32> to vector<48xf32>
    %7 = vector.shape_cast %6 : vector<48xf32> to vector<48x1xf32>
    %8 = arith.mulf %0, %0 : vector<48x128xf32>
    %cst_9 = arith.constant dense<0.000000e+00> : vector<48xf32>
    %9 = vector.multi_reduction <add>, %8, %cst_9 [1] : vector<48x128xf32> to vector<48xf32>
    %10 = vector.shape_cast %9 : vector<48xf32> to vector<48x1xf32>
    %cst_10 = arith.constant 3.125000e-02 : f32
    %11 = vector.broadcast %cst_10 : f32 to vector<48x1xf32>
    %12 = arith.mulf %7, %11 : vector<48x1xf32>
    %cst_11 = arith.constant 3.125000e-02 : f32
    %13 = vector.broadcast %cst_11 : f32 to vector<48x1xf32>
    %14 = arith.mulf %10, %13 : vector<48x1xf32>
    %15 = arith.mulf %12, %12 : vector<48x1xf32>
    %16 = arith.subf %14, %15 : vector<48x1xf32>
    %17 = vector.broadcast %12 : vector<48x1xf32> to vector<48x128xf32>
    %18 = arith.subf %0, %17 : vector<48x128xf32>
    %cst_12 = arith.constant 9.99999996E-13 : f32
    %19 = vector.broadcast %cst_12 : f32 to vector<48x1xf32>
    %20 = arith.addf %16, %19 : vector<48x1xf32>
    %21 = math.rsqrt %20 : vector<48x1xf32>
    %22 = vector.broadcast %21 : vector<48x1xf32> to vector<48x128xf32>
    %23 = arith.mulf %18, %22 : vector<48x128xf32>
    %24 = vector.broadcast %3 : vector<1x128xf32> to vector<48x128xf32>
    %25 = arith.mulf %23, %24 : vector<48x128xf32>
    %26 = vector.broadcast %4 : vector<1x128xf32> to vector<48x128xf32>
    %27 = arith.addf %25, %26 : vector<48x128xf32>
    %c0_13 = arith.constant 0 : index
    %c0_14 = arith.constant 0 : index
    %c0_15 = arith.constant 0 : index
    %28 = vector.load %arg5[%c0_13, %c0_14, %c0_15] : memref<2x1024x128xbf16, #tpu.memory_space<vmem>>, vector<1x128x128xbf16>
    %29 = vector.shape_cast %28 : vector<1x128x128xbf16> to vector<128x128xbf16>
    %c0_16 = arith.constant 0 : index
    %c128 = arith.constant 128 : index
    %c0_17 = arith.constant 0 : index
    %30 = vector.load %arg5[%c0_16, %c128, %c0_17] : memref<2x1024x128xbf16, #tpu.memory_space<vmem>>, vector<1x128x128xbf16>
    %31 = vector.shape_cast %30 : vector<1x128x128xbf16> to vector<128x128xbf16>
    %c0_18 = arith.constant 0 : index
    %c256 = arith.constant 256 : index
    %c0_19 = arith.constant 0 : index
    %32 = vector.load %arg5[%c0_18, %c256, %c0_19] : memref<2x1024x128xbf16, #tpu.memory_space<vmem>>, vector<1x128x128xbf16>
    %33 = vector.shape_cast %32 : vector<1x128x128xbf16> to vector<128x128xbf16>
    %c0_20 = arith.constant 0 : index
    %c384 = arith.constant 384 : index
    %c0_21 = arith.constant 0 : index
    %34 = vector.load %arg5[%c0_20, %c384, %c0_21] : memref<2x1024x128xbf16, #tpu.memory_space<vmem>>, vector<1x128x128xbf16>
    %35 = vector.shape_cast %34 : vector<1x128x128xbf16> to vector<128x128xbf16>
    %c0_22 = arith.constant 0 : index
    %c512 = arith.constant 512 : index
    %c0_23 = arith.constant 0 : index
    %36 = vector.load %arg5[%c0_22, %c512, %c0_23] : memref<2x1024x128xbf16, #tpu.memory_space<vmem>>, vector<1x128x128xbf16>
    %37 = vector.shape_cast %36 : vector<1x128x128xbf16> to vector<128x128xbf16>
    %c0_24 = arith.constant 0 : index
    %c640 = arith.constant 640 : index
    %c0_25 = arith.constant 0 : index
    %38 = vector.load %arg5[%c0_24, %c640, %c0_25] : memref<2x1024x128xbf16, #tpu.memory_space<vmem>>, vector<1x128x128xbf16>
    %39 = vector.shape_cast %38 : vector<1x128x128xbf16> to vector<128x128xbf16>
    %c0_26 = arith.constant 0 : index
    %c768 = arith.constant 768 : index
    %c0_27 = arith.constant 0 : index
    %40 = vector.load %arg5[%c0_26, %c768, %c0_27] : memref<2x1024x128xbf16, #tpu.memory_space<vmem>>, vector<1x128x128xbf16>
    %41 = vector.shape_cast %40 : vector<1x128x128xbf16> to vector<128x128xbf16>
    %c0_28 = arith.constant 0 : index
    %c896 = arith.constant 896 : index
    %c0_29 = arith.constant 0 : index
    %42 = vector.load %arg5[%c0_28, %c896, %c0_29] : memref<2x1024x128xbf16, #tpu.memory_space<vmem>>, vector<1x128x128xbf16>
    %43 = vector.shape_cast %42 : vector<1x128x128xbf16> to vector<128x128xbf16>
    %c0_30 = arith.constant 0 : index
    %c0_31 = arith.constant 0 : index
    %c0_32 = arith.constant 0 : index
    %44 = vector.load %arg6[%c0_30, %c0_31, %c0_32] : memref<2x16x128xf32, #tpu.memory_space<vmem>>, vector<1x1x128xf32>
    %45 = vector.shape_cast %44 : vector<1x1x128xf32> to vector<1x128xf32>
    %c0_33 = arith.constant 0 : index
    %c1_34 = arith.constant 1 : index
    %c0_35 = arith.constant 0 : index
    %46 = vector.load %arg6[%c0_33, %c1_34, %c0_35] : memref<2x16x128xf32, #tpu.memory_space<vmem>>, vector<1x1x128xf32>
    %47 = vector.shape_cast %46 : vector<1x1x128xf32> to vector<1x128xf32>
    %c0_36 = arith.constant 0 : index
    %c2_37 = arith.constant 2 : index
    %c0_38 = arith.constant 0 : index
    %48 = vector.load %arg6[%c0_36, %c2_37, %c0_38] : memref<2x16x128xf32, #tpu.memory_space<vmem>>, vector<1x1x128xf32>
    %49 = vector.shape_cast %48 : vector<1x1x128xf32> to vector<1x128xf32>
    %c0_39 = arith.constant 0 : index
    %c3 = arith.constant 3 : index
    %c0_40 = arith.constant 0 : index
    %50 = vector.load %arg6[%c0_39, %c3, %c0_40] : memref<2x16x128xf32, #tpu.memory_space<vmem>>, vector<1x1x128xf32>
    %51 = vector.shape_cast %50 : vector<1x1x128xf32> to vector<1x128xf32>
    %c0_41 = arith.constant 0 : index
    %c4 = arith.constant 4 : index
    %c0_42 = arith.constant 0 : index
    %52 = vector.load %arg6[%c0_41, %c4, %c0_42] : memref<2x16x128xf32, #tpu.memory_space<vmem>>, vector<1x1x128xf32>
    %53 = vector.shape_cast %52 : vector<1x1x128xf32> to vector<1x128xf32>
    %c0_43 = arith.constant 0 : index
    %c5 = arith.constant 5 : index
    %c0_44 = arith.constant 0 : index
    %54 = vector.load %arg6[%c0_43, %c5, %c0_44] : memref<2x16x128xf32, #tpu.memory_space<vmem>>, vector<1x1x128xf32>
    %55 = vector.shape_cast %54 : vector<1x1x128xf32> to vector<1x128xf32>
    %c0_45 = arith.constant 0 : index
    %c6 = arith.constant 6 : index
    %c0_46 = arith.constant 0 : index
    %56 = vector.load %arg6[%c0_45, %c6, %c0_46] : memref<2x16x128xf32, #tpu.memory_space<vmem>>, vector<1x1x128xf32>
    %57 = vector.shape_cast %56 : vector<1x1x128xf32> to vector<1x128xf32>
    %c0_47 = arith.constant 0 : index
    %c7 = arith.constant 7 : index
    %c0_48 = arith.constant 0 : index
    %58 = vector.load %arg6[%c0_47, %c7, %c0_48] : memref<2x16x128xf32, #tpu.memory_space<vmem>>, vector<1x1x128xf32>
    %59 = vector.shape_cast %58 : vector<1x1x128xf32> to vector<1x128xf32>
    %c0_49 = arith.constant 0 : index
    %c8 = arith.constant 8 : index
    %c0_50 = arith.constant 0 : index
    %60 = vector.load %arg6[%c0_49, %c8, %c0_50] : memref<2x16x128xf32, #tpu.memory_space<vmem>>, vector<1x1x128xf32>
    %61 = vector.shape_cast %60 : vector<1x1x128xf32> to vector<1x128xf32>
    %c0_51 = arith.constant 0 : index
    %c9 = arith.constant 9 : index
    %c0_52 = arith.constant 0 : index
    %62 = vector.load %arg6[%c0_51, %c9, %c0_52] : memref<2x16x128xf32, #tpu.memory_space<vmem>>, vector<1x1x128xf32>
    %63 = vector.shape_cast %62 : vector<1x1x128xf32> to vector<1x128xf32>
    %c0_53 = arith.constant 0 : index
    %c10 = arith.constant 10 : index
    %c0_54 = arith.constant 0 : index
    %64 = vector.load %arg6[%c0_53, %c10, %c0_54] : memref<2x16x128xf32, #tpu.memory_space<vmem>>, vector<1x1x128xf32>
    %65 = vector.shape_cast %64 : vector<1x1x128xf32> to vector<1x128xf32>
    %66 = arith.truncf %27 : vector<48x128xf32> to vector<48x128xbf16>
    %cst_55 = arith.constant dense<0.000000e+00> : vector<48x128xf32>
    %67 = tpu.matmul %66, %29, %cst_55 {dimension_numbers = #tpu.dot_dimension_numbers<[1], [0], [0], [1], [0, 0, 1, 1], [], []>} : vector<48x128xbf16>, vector<128x128xbf16>, vector<48x128xf32> -> vector<48x128xf32>
    %68 = vector.broadcast %45 : vector<1x128xf32> to vector<48x128xf32>
    %69 = arith.addf %67, %68 : vector<48x128xf32>
    %cst_56 = arith.constant dense<0.000000e+00> : vector<48x128xf32>
    %70 = tpu.matmul %66, %31, %cst_56 {dimension_numbers = #tpu.dot_dimension_numbers<[1], [0], [0], [1], [0, 0, 1, 1], [], []>} : vector<48x128xbf16>, vector<128x128xbf16>, vector<48x128xf32> -> vector<48x128xf32>
    %71 = vector.broadcast %47 : vector<1x128xf32> to vector<48x128xf32>
    %72 = arith.addf %70, %71 : vector<48x128xf32>
    %cst_57 = arith.constant dense<0.000000e+00> : vector<48x128xf32>
    %73 = tpu.matmul %66, %33, %cst_57 {dimension_numbers = #tpu.dot_dimension_numbers<[1], [0], [0], [1], [0, 0, 1, 1], [], []>} : vector<48x128xbf16>, vector<128x128xbf16>, vector<48x128xf32> -> vector<48x128xf32>
    %74 = vector.broadcast %49 : vector<1x128xf32> to vector<48x128xf32>
    %75 = arith.addf %73, %74 : vector<48x128xf32>
    %cst_58 = arith.constant dense<0.000000e+00> : vector<48x128xf32>
    %76 = tpu.matmul %66, %35, %cst_58 {dimension_numbers = #tpu.dot_dimension_numbers<[1], [0], [0], [1], [0, 0, 1, 1], [], []>} : vector<48x128xbf16>, vector<128x128xbf16>, vector<48x128xf32> -> vector<48x128xf32>
    %77 = vector.broadcast %51 : vector<1x128xf32> to vector<48x128xf32>
    %78 = arith.addf %76, %77 : vector<48x128xf32>
    %cst_59 = arith.constant dense<0.000000e+00> : vector<48x128xf32>
    %79 = tpu.matmul %66, %37, %cst_59 {dimension_numbers = #tpu.dot_dimension_numbers<[1], [0], [0], [1], [0, 0, 1, 1], [], []>} : vector<48x128xbf16>, vector<128x128xbf16>, vector<48x128xf32> -> vector<48x128xf32>
    %cst_60 = arith.constant dense<0.000000e+00> : vector<48x128xf32>
    %80 = tpu.matmul %66, %39, %cst_60 {dimension_numbers = #tpu.dot_dimension_numbers<[1], [0], [0], [1], [0, 0, 1, 1], [], []>} : vector<48x128xbf16>, vector<128x128xbf16>, vector<48x128xf32> -> vector<48x128xf32>
    "tpu.trace_start"() <{level = 10 : i32, message = "ld,md->lm"}> : () -> ()
    %cst_61 = arith.constant dense<0.000000e+00> : vector<48x48xf32>
    %81 = tpu.matmul %69, %75, %cst_61 {dimension_numbers = #tpu.dot_dimension_numbers<[1], [1], [0], [0], [0, 0, 1, 0], [], []>} : vector<48x128xf32>, vector<48x128xf32>, vector<48x48xf32> -> vector<48x48xf32>
    "tpu.trace_stop"() : () -> ()
    %cst_62 = arith.constant 2.500000e-01 : f32
    %82 = vector.broadcast %cst_62 : f32 to vector<48x48xf32>
    %83 = arith.mulf %81, %82 : vector<48x48xf32>
    %84 = arith.addf %83, %1 : vector<48x48xf32>
    "tpu.trace_start"() <{level = 10 : i32, message = "ld,md->lm"}> : () -> ()
    %cst_63 = arith.constant dense<0.000000e+00> : vector<48x48xf32>
    %85 = tpu.matmul %72, %78, %cst_63 {dimension_numbers = #tpu.dot_dimension_numbers<[1], [1], [0], [0], [0, 0, 1, 0], [], []>} : vector<48x128xf32>, vector<48x128xf32>, vector<48x48xf32> -> vector<48x48xf32>
    "tpu.trace_stop"() : () -> ()
    %cst_64 = arith.constant 2.500000e-01 : f32
    %86 = vector.broadcast %cst_64 : f32 to vector<48x48xf32>
    %87 = arith.mulf %85, %86 : vector<48x48xf32>
    %88 = arith.addf %87, %1 : vector<48x48xf32>
    %cst_65 = arith.constant dense<0xFF800000> : vector<48xf32>
    %89 = vector.multi_reduction <maximumf>, %84, %cst_65 [1] : vector<48x48xf32> to vector<48xf32>
    %90 = vector.shape_cast %89 : vector<48xf32> to vector<48x1xf32>
    %91 = vector.broadcast %90 : vector<48x1xf32> to vector<48x48xf32>
    %92 = arith.subf %84, %91 : vector<48x48xf32>
    %93 = math.exp %92 : vector<48x48xf32>
    %cst_66 = arith.constant dense<0.000000e+00> : vector<48xf32>
    %94 = vector.multi_reduction <add>, %93, %cst_66 [1] : vector<48x48xf32> to vector<48xf32>
    %95 = vector.shape_cast %94 : vector<48xf32> to vector<48x1xf32>
    %96 = tpu.reciprocal %95 {approx = true} : vector<48x1xf32> -> vector<48x1xf32>
    %97 = vector.broadcast %96 : vector<48x1xf32> to vector<48x48xf32>
    %98 = arith.mulf %93, %97 : vector<48x48xf32>
    %cst_67 = arith.constant dense<0xFF800000> : vector<48xf32>
    %99 = vector.multi_reduction <maximumf>, %88, %cst_67 [1] : vector<48x48xf32> to vector<48xf32>
    %100 = vector.shape_cast %99 : vector<48xf32> to vector<48x1xf32>
    %101 = vector.broadcast %100 : vector<48x1xf32> to vector<48x48xf32>
    %102 = arith.subf %88, %101 : vector<48x48xf32>
    %103 = math.exp %102 : vector<48x48xf32>
    %cst_68 = arith.constant dense<0.000000e+00> : vector<48xf32>
    %104 = vector.multi_reduction <add>, %103, %cst_68 [1] : vector<48x48xf32> to vector<48xf32>
    %105 = vector.shape_cast %104 : vector<48xf32> to vector<48x1xf32>
    %106 = tpu.reciprocal %105 {approx = true} : vector<48x1xf32> -> vector<48x1xf32>
    %107 = vector.broadcast %106 : vector<48x1xf32> to vector<48x48xf32>
    %108 = arith.mulf %103, %107 : vector<48x48xf32>
    %cst_69 = arith.constant dense<0.000000e+00> : vector<48x128xf32>
    %109 = tpu.matmul %98, %79, %cst_69 {dimension_numbers = #tpu.dot_dimension_numbers<[1], [0], [0], [1], [0, 0, 1, 1], [], []>} : vector<48x48xf32>, vector<48x128xf32>, vector<48x128xf32> -> vector<48x128xf32>
    %cst_70 = arith.constant dense<0.000000e+00> : vector<48x128xf32>
    %110 = tpu.matmul %108, %80, %cst_70 {dimension_numbers = #tpu.dot_dimension_numbers<[1], [0], [0], [1], [0, 0, 1, 1], [], []>} : vector<48x48xf32>, vector<48x128xf32>, vector<48x128xf32> -> vector<48x128xf32>
    %111 = arith.addf %109, %110 : vector<48x128xf32>
    %112 = vector.broadcast %53 : vector<1x128xf32> to vector<48x128xf32>
    %113 = arith.addf %111, %112 : vector<48x128xf32>
    %114 = arith.addf %113, %27 : vector<48x128xf32>
    %cst_71 = arith.constant dense<0.000000e+00> : vector<48xf32>
    %115 = vector.multi_reduction <add>, %114, %cst_71 [1] : vector<48x128xf32> to vector<48xf32>
    %116 = vector.shape_cast %115 : vector<48xf32> to vector<48x1xf32>
    %117 = arith.mulf %114, %114 : vector<48x128xf32>
    %cst_72 = arith.constant dense<0.000000e+00> : vector<48xf32>
    %118 = vector.multi_reduction <add>, %117, %cst_72 [1] : vector<48x128xf32> to vector<48xf32>
    %119 = vector.shape_cast %118 : vector<48xf32> to vector<48x1xf32>
    %cst_73 = arith.constant 3.125000e-02 : f32
    %120 = vector.broadcast %cst_73 : f32 to vector<48x1xf32>
    %121 = arith.mulf %116, %120 : vector<48x1xf32>
    %cst_74 = arith.constant 3.125000e-02 : f32
    %122 = vector.broadcast %cst_74 : f32 to vector<48x1xf32>
    %123 = arith.mulf %119, %122 : vector<48x1xf32>
    %124 = arith.mulf %121, %121 : vector<48x1xf32>
    %125 = arith.subf %123, %124 : vector<48x1xf32>
    %126 = vector.broadcast %121 : vector<48x1xf32> to vector<48x128xf32>
    %127 = arith.subf %114, %126 : vector<48x128xf32>
    %cst_75 = arith.constant 9.99999996E-13 : f32
    %128 = vector.broadcast %cst_75 : f32 to vector<48x1xf32>
    %129 = arith.addf %125, %128 : vector<48x1xf32>
    %130 = math.rsqrt %129 : vector<48x1xf32>
    %131 = vector.broadcast %130 : vector<48x1xf32> to vector<48x128xf32>
    %132 = arith.mulf %127, %131 : vector<48x128xf32>
    %133 = vector.broadcast %59 : vector<1x128xf32> to vector<48x128xf32>
    %134 = arith.mulf %132, %133 : vector<48x128xf32>
    %135 = vector.broadcast %61 : vector<1x128xf32> to vector<48x128xf32>
    %136 = arith.addf %134, %135 : vector<48x128xf32>
    %137 = arith.truncf %136 : vector<48x128xf32> to vector<48x128xbf16>
    %cst_76 = arith.constant dense<0.000000e+00> : vector<48x128xf32>
    %138 = tpu.matmul %137, %41, %cst_76 {dimension_numbers = #tpu.dot_dimension_numbers<[1], [0], [0], [1], [0, 0, 1, 1], [], []>} : vector<48x128xbf16>, vector<128x128xbf16>, vector<48x128xf32> -> vector<48x128xf32>
    %139 = vector.broadcast %55 : vector<1x128xf32> to vector<48x128xf32>
    %140 = arith.addf %138, %139 : vector<48x128xf32>
    %141 = arith.mulf %140, %140 : vector<48x128xf32>
    %142 = arith.mulf %140, %141 : vector<48x128xf32>
    %cst_77 = arith.constant 4.471500e-02 : f32
    %143 = vector.broadcast %cst_77 : f32 to vector<48x128xf32>
    %144 = arith.mulf %143, %142 : vector<48x128xf32>
    %145 = arith.addf %140, %144 : vector<48x128xf32>
    %cst_78 = arith.constant 0.797884583 : f32
    %146 = vector.broadcast %cst_78 : f32 to vector<48x128xf32>
    %147 = arith.mulf %146, %145 : vector<48x128xf32>
    %148 = math.tanh %147 : vector<48x128xf32>
    %cst_79 = arith.constant 1.000000e+00 : f32
    %149 = vector.broadcast %cst_79 : f32 to vector<48x128xf32>
    %150 = arith.addf %149, %148 : vector<48x128xf32>
    %cst_80 = arith.constant 5.000000e-01 : f32
    %151 = vector.broadcast %cst_80 : f32 to vector<48x128xf32>
    %152 = arith.mulf %151, %150 : vector<48x128xf32>
    %153 = arith.mulf %140, %152 : vector<48x128xf32>
    %154 = arith.truncf %153 : vector<48x128xf32> to vector<48x128xbf16>
    %cst_81 = arith.constant dense<0.000000e+00> : vector<48x128xf32>
    %155 = tpu.matmul %154, %43, %cst_81 {dimension_numbers = #tpu.dot_dimension_numbers<[1], [0], [0], [1], [0, 0, 1, 1], [], []>} : vector<48x128xbf16>, vector<128x128xbf16>, vector<48x128xf32> -> vector<48x128xf32>
    %156 = vector.broadcast %57 : vector<1x128xf32> to vector<48x128xf32>
    %157 = arith.addf %155, %156 : vector<48x128xf32>
    %158 = arith.addf %157, %136 : vector<48x128xf32>
    %cst_82 = arith.constant dense<0.000000e+00> : vector<48xf32>
    %159 = vector.multi_reduction <add>, %158, %cst_82 [1] : vector<48x128xf32> to vector<48xf32>
    %160 = vector.shape_cast %159 : vector<48xf32> to vector<48x1xf32>
    %161 = arith.mulf %158, %158 : vector<48x128xf32>
    %cst_83 = arith.constant dense<0.000000e+00> : vector<48xf32>
    %162 = vector.multi_reduction <add>, %161, %cst_83 [1] : vector<48x128xf32> to vector<48xf32>
    %163 = vector.shape_cast %162 : vector<48xf32> to vector<48x1xf32>
    %cst_84 = arith.constant 3.125000e-02 : f32
    %164 = vector.broadcast %cst_84 : f32 to vector<48x1xf32>
    %165 = arith.mulf %160, %164 : vector<48x1xf32>
    %cst_85 = arith.constant 3.125000e-02 : f32
    %166 = vector.broadcast %cst_85 : f32 to vector<48x1xf32>
    %167 = arith.mulf %163, %166 : vector<48x1xf32>
    %168 = arith.mulf %165, %165 : vector<48x1xf32>
    %169 = arith.subf %167, %168 : vector<48x1xf32>
    %170 = vector.broadcast %165 : vector<48x1xf32> to vector<48x128xf32>
    %171 = arith.subf %158, %170 : vector<48x128xf32>
    %cst_86 = arith.constant 9.99999996E-13 : f32
    %172 = vector.broadcast %cst_86 : f32 to vector<48x1xf32>
    %173 = arith.addf %169, %172 : vector<48x1xf32>
    %174 = math.rsqrt %173 : vector<48x1xf32>
    %175 = vector.broadcast %174 : vector<48x1xf32> to vector<48x128xf32>
    %176 = arith.mulf %171, %175 : vector<48x128xf32>
    %177 = vector.broadcast %63 : vector<1x128xf32> to vector<48x128xf32>
    %178 = arith.mulf %176, %177 : vector<48x128xf32>
    %179 = vector.broadcast %65 : vector<1x128xf32> to vector<48x128xf32>
    %180 = arith.addf %178, %179 : vector<48x128xf32>
    %c1_87 = arith.constant 1 : index
    %c0_88 = arith.constant 0 : index
    %c0_89 = arith.constant 0 : index
    %181 = vector.load %arg5[%c1_87, %c0_88, %c0_89] : memref<2x1024x128xbf16, #tpu.memory_space<vmem>>, vector<1x128x128xbf16>
    %182 = vector.shape_cast %181 : vector<1x128x128xbf16> to vector<128x128xbf16>
    %c1_90 = arith.constant 1 : index
    %c128_91 = arith.constant 128 : index
    %c0_92 = arith.constant 0 : index
    %183 = vector.load %arg5[%c1_90, %c128_91, %c0_92] : memref<2x1024x128xbf16, #tpu.memory_space<vmem>>, vector<1x128x128xbf16>
    %184 = vector.shape_cast %183 : vector<1x128x128xbf16> to vector<128x128xbf16>
    %c1_93 = arith.constant 1 : index
    %c256_94 = arith.constant 256 : index
    %c0_95 = arith.constant 0 : index
    %185 = vector.load %arg5[%c1_93, %c256_94, %c0_95] : memref<2x1024x128xbf16, #tpu.memory_space<vmem>>, vector<1x128x128xbf16>
    %186 = vector.shape_cast %185 : vector<1x128x128xbf16> to vector<128x128xbf16>
    %c1_96 = arith.constant 1 : index
    %c384_97 = arith.constant 384 : index
    %c0_98 = arith.constant 0 : index
    %187 = vector.load %arg5[%c1_96, %c384_97, %c0_98] : memref<2x1024x128xbf16, #tpu.memory_space<vmem>>, vector<1x128x128xbf16>
    %188 = vector.shape_cast %187 : vector<1x128x128xbf16> to vector<128x128xbf16>
    %c1_99 = arith.constant 1 : index
    %c512_100 = arith.constant 512 : index
    %c0_101 = arith.constant 0 : index
    %189 = vector.load %arg5[%c1_99, %c512_100, %c0_101] : memref<2x1024x128xbf16, #tpu.memory_space<vmem>>, vector<1x128x128xbf16>
    %190 = vector.shape_cast %189 : vector<1x128x128xbf16> to vector<128x128xbf16>
    %c1_102 = arith.constant 1 : index
    %c640_103 = arith.constant 640 : index
    %c0_104 = arith.constant 0 : index
    %191 = vector.load %arg5[%c1_102, %c640_103, %c0_104] : memref<2x1024x128xbf16, #tpu.memory_space<vmem>>, vector<1x128x128xbf16>
    %192 = vector.shape_cast %191 : vector<1x128x128xbf16> to vector<128x128xbf16>
    %c1_105 = arith.constant 1 : index
    %c768_106 = arith.constant 768 : index
    %c0_107 = arith.constant 0 : index
    %193 = vector.load %arg5[%c1_105, %c768_106, %c0_107] : memref<2x1024x128xbf16, #tpu.memory_space<vmem>>, vector<1x128x128xbf16>
    %194 = vector.shape_cast %193 : vector<1x128x128xbf16> to vector<128x128xbf16>
    %c1_108 = arith.constant 1 : index
    %c896_109 = arith.constant 896 : index
    %c0_110 = arith.constant 0 : index
    %195 = vector.load %arg5[%c1_108, %c896_109, %c0_110] : memref<2x1024x128xbf16, #tpu.memory_space<vmem>>, vector<1x128x128xbf16>
    %196 = vector.shape_cast %195 : vector<1x128x128xbf16> to vector<128x128xbf16>
    %c1_111 = arith.constant 1 : index
    %c0_112 = arith.constant 0 : index
    %c0_113 = arith.constant 0 : index
    %197 = vector.load %arg6[%c1_111, %c0_112, %c0_113] : memref<2x16x128xf32, #tpu.memory_space<vmem>>, vector<1x1x128xf32>
    %198 = vector.shape_cast %197 : vector<1x1x128xf32> to vector<1x128xf32>
    %c1_114 = arith.constant 1 : index
    %c1_115 = arith.constant 1 : index
    %c0_116 = arith.constant 0 : index
    %199 = vector.load %arg6[%c1_114, %c1_115, %c0_116] : memref<2x16x128xf32, #tpu.memory_space<vmem>>, vector<1x1x128xf32>
    %200 = vector.shape_cast %199 : vector<1x1x128xf32> to vector<1x128xf32>
    %c1_117 = arith.constant 1 : index
    %c2_118 = arith.constant 2 : index
    %c0_119 = arith.constant 0 : index
    %201 = vector.load %arg6[%c1_117, %c2_118, %c0_119] : memref<2x16x128xf32, #tpu.memory_space<vmem>>, vector<1x1x128xf32>
    %202 = vector.shape_cast %201 : vector<1x1x128xf32> to vector<1x128xf32>
    %c1_120 = arith.constant 1 : index
    %c3_121 = arith.constant 3 : index
    %c0_122 = arith.constant 0 : index
    %203 = vector.load %arg6[%c1_120, %c3_121, %c0_122] : memref<2x16x128xf32, #tpu.memory_space<vmem>>, vector<1x1x128xf32>
    %204 = vector.shape_cast %203 : vector<1x1x128xf32> to vector<1x128xf32>
    %c1_123 = arith.constant 1 : index
    %c4_124 = arith.constant 4 : index
    %c0_125 = arith.constant 0 : index
    %205 = vector.load %arg6[%c1_123, %c4_124, %c0_125] : memref<2x16x128xf32, #tpu.memory_space<vmem>>, vector<1x1x128xf32>
    %206 = vector.shape_cast %205 : vector<1x1x128xf32> to vector<1x128xf32>
    %c1_126 = arith.constant 1 : index
    %c5_127 = arith.constant 5 : index
    %c0_128 = arith.constant 0 : index
    %207 = vector.load %arg6[%c1_126, %c5_127, %c0_128] : memref<2x16x128xf32, #tpu.memory_space<vmem>>, vector<1x1x128xf32>
    %208 = vector.shape_cast %207 : vector<1x1x128xf32> to vector<1x128xf32>
    %c1_129 = arith.constant 1 : index
    %c6_130 = arith.constant 6 : index
    %c0_131 = arith.constant 0 : index
    %209 = vector.load %arg6[%c1_129, %c6_130, %c0_131] : memref<2x16x128xf32, #tpu.memory_space<vmem>>, vector<1x1x128xf32>
    %210 = vector.shape_cast %209 : vector<1x1x128xf32> to vector<1x128xf32>
    %c1_132 = arith.constant 1 : index
    %c7_133 = arith.constant 7 : index
    %c0_134 = arith.constant 0 : index
    %211 = vector.load %arg6[%c1_132, %c7_133, %c0_134] : memref<2x16x128xf32, #tpu.memory_space<vmem>>, vector<1x1x128xf32>
    %212 = vector.shape_cast %211 : vector<1x1x128xf32> to vector<1x128xf32>
    %c1_135 = arith.constant 1 : index
    %c8_136 = arith.constant 8 : index
    %c0_137 = arith.constant 0 : index
    %213 = vector.load %arg6[%c1_135, %c8_136, %c0_137] : memref<2x16x128xf32, #tpu.memory_space<vmem>>, vector<1x1x128xf32>
    %214 = vector.shape_cast %213 : vector<1x1x128xf32> to vector<1x128xf32>
    %c1_138 = arith.constant 1 : index
    %c9_139 = arith.constant 9 : index
    %c0_140 = arith.constant 0 : index
    %215 = vector.load %arg6[%c1_138, %c9_139, %c0_140] : memref<2x16x128xf32, #tpu.memory_space<vmem>>, vector<1x1x128xf32>
    %216 = vector.shape_cast %215 : vector<1x1x128xf32> to vector<1x128xf32>
    %c1_141 = arith.constant 1 : index
    %c10_142 = arith.constant 10 : index
    %c0_143 = arith.constant 0 : index
    %217 = vector.load %arg6[%c1_141, %c10_142, %c0_143] : memref<2x16x128xf32, #tpu.memory_space<vmem>>, vector<1x1x128xf32>
    %218 = vector.shape_cast %217 : vector<1x1x128xf32> to vector<1x128xf32>
    %219 = arith.truncf %180 : vector<48x128xf32> to vector<48x128xbf16>
    %cst_144 = arith.constant dense<0.000000e+00> : vector<48x128xf32>
    %220 = tpu.matmul %219, %182, %cst_144 {dimension_numbers = #tpu.dot_dimension_numbers<[1], [0], [0], [1], [0, 0, 1, 1], [], []>} : vector<48x128xbf16>, vector<128x128xbf16>, vector<48x128xf32> -> vector<48x128xf32>
    %221 = vector.broadcast %198 : vector<1x128xf32> to vector<48x128xf32>
    %222 = arith.addf %220, %221 : vector<48x128xf32>
    %cst_145 = arith.constant dense<0.000000e+00> : vector<48x128xf32>
    %223 = tpu.matmul %219, %184, %cst_145 {dimension_numbers = #tpu.dot_dimension_numbers<[1], [0], [0], [1], [0, 0, 1, 1], [], []>} : vector<48x128xbf16>, vector<128x128xbf16>, vector<48x128xf32> -> vector<48x128xf32>
    %224 = vector.broadcast %200 : vector<1x128xf32> to vector<48x128xf32>
    %225 = arith.addf %223, %224 : vector<48x128xf32>
    %cst_146 = arith.constant dense<0.000000e+00> : vector<48x128xf32>
    %226 = tpu.matmul %219, %186, %cst_146 {dimension_numbers = #tpu.dot_dimension_numbers<[1], [0], [0], [1], [0, 0, 1, 1], [], []>} : vector<48x128xbf16>, vector<128x128xbf16>, vector<48x128xf32> -> vector<48x128xf32>
    %227 = vector.broadcast %202 : vector<1x128xf32> to vector<48x128xf32>
    %228 = arith.addf %226, %227 : vector<48x128xf32>
    %cst_147 = arith.constant dense<0.000000e+00> : vector<48x128xf32>
    %229 = tpu.matmul %219, %188, %cst_147 {dimension_numbers = #tpu.dot_dimension_numbers<[1], [0], [0], [1], [0, 0, 1, 1], [], []>} : vector<48x128xbf16>, vector<128x128xbf16>, vector<48x128xf32> -> vector<48x128xf32>
    %230 = vector.broadcast %204 : vector<1x128xf32> to vector<48x128xf32>
    %231 = arith.addf %229, %230 : vector<48x128xf32>
    %cst_148 = arith.constant dense<0.000000e+00> : vector<48x128xf32>
    %232 = tpu.matmul %219, %190, %cst_148 {dimension_numbers = #tpu.dot_dimension_numbers<[1], [0], [0], [1], [0, 0, 1, 1], [], []>} : vector<48x128xbf16>, vector<128x128xbf16>, vector<48x128xf32> -> vector<48x128xf32>
    %cst_149 = arith.constant dense<0.000000e+00> : vector<48x128xf32>
    %233 = tpu.matmul %219, %192, %cst_149 {dimension_numbers = #tpu.dot_dimension_numbers<[1], [0], [0], [1], [0, 0, 1, 1], [], []>} : vector<48x128xbf16>, vector<128x128xbf16>, vector<48x128xf32> -> vector<48x128xf32>
    "tpu.trace_start"() <{level = 10 : i32, message = "ld,md->lm"}> : () -> ()
    %cst_150 = arith.constant dense<0.000000e+00> : vector<48x48xf32>
    %234 = tpu.matmul %222, %228, %cst_150 {dimension_numbers = #tpu.dot_dimension_numbers<[1], [1], [0], [0], [0, 0, 1, 0], [], []>} : vector<48x128xf32>, vector<48x128xf32>, vector<48x48xf32> -> vector<48x48xf32>
    "tpu.trace_stop"() : () -> ()
    %cst_151 = arith.constant 2.500000e-01 : f32
    %235 = vector.broadcast %cst_151 : f32 to vector<48x48xf32>
    %236 = arith.mulf %234, %235 : vector<48x48xf32>
    %237 = arith.addf %236, %1 : vector<48x48xf32>
    "tpu.trace_start"() <{level = 10 : i32, message = "ld,md->lm"}> : () -> ()
    %cst_152 = arith.constant dense<0.000000e+00> : vector<48x48xf32>
    %238 = tpu.matmul %225, %231, %cst_152 {dimension_numbers = #tpu.dot_dimension_numbers<[1], [1], [0], [0], [0, 0, 1, 0], [], []>} : vector<48x128xf32>, vector<48x128xf32>, vector<48x48xf32> -> vector<48x48xf32>
    "tpu.trace_stop"() : () -> ()
    %cst_153 = arith.constant 2.500000e-01 : f32
    %239 = vector.broadcast %cst_153 : f32 to vector<48x48xf32>
    %240 = arith.mulf %238, %239 : vector<48x48xf32>
    %241 = arith.addf %240, %1 : vector<48x48xf32>
    %cst_154 = arith.constant dense<0xFF800000> : vector<48xf32>
    %242 = vector.multi_reduction <maximumf>, %237, %cst_154 [1] : vector<48x48xf32> to vector<48xf32>
    %243 = vector.shape_cast %242 : vector<48xf32> to vector<48x1xf32>
    %244 = vector.broadcast %243 : vector<48x1xf32> to vector<48x48xf32>
    %245 = arith.subf %237, %244 : vector<48x48xf32>
    %246 = math.exp %245 : vector<48x48xf32>
    %cst_155 = arith.constant dense<0.000000e+00> : vector<48xf32>
    %247 = vector.multi_reduction <add>, %246, %cst_155 [1] : vector<48x48xf32> to vector<48xf32>
    %248 = vector.shape_cast %247 : vector<48xf32> to vector<48x1xf32>
    %249 = tpu.reciprocal %248 {approx = true} : vector<48x1xf32> -> vector<48x1xf32>
    %250 = vector.broadcast %249 : vector<48x1xf32> to vector<48x48xf32>
    %251 = arith.mulf %246, %250 : vector<48x48xf32>
    %cst_156 = arith.constant dense<0xFF800000> : vector<48xf32>
    %252 = vector.multi_reduction <maximumf>, %241, %cst_156 [1] : vector<48x48xf32> to vector<48xf32>
    %253 = vector.shape_cast %252 : vector<48xf32> to vector<48x1xf32>
    %254 = vector.broadcast %253 : vector<48x1xf32> to vector<48x48xf32>
    %255 = arith.subf %241, %254 : vector<48x48xf32>
    %256 = math.exp %255 : vector<48x48xf32>
    %cst_157 = arith.constant dense<0.000000e+00> : vector<48xf32>
    %257 = vector.multi_reduction <add>, %256, %cst_157 [1] : vector<48x48xf32> to vector<48xf32>
    %258 = vector.shape_cast %257 : vector<48xf32> to vector<48x1xf32>
    %259 = tpu.reciprocal %258 {approx = true} : vector<48x1xf32> -> vector<48x1xf32>
    %260 = vector.broadcast %259 : vector<48x1xf32> to vector<48x48xf32>
    %261 = arith.mulf %256, %260 : vector<48x48xf32>
    %cst_158 = arith.constant dense<0.000000e+00> : vector<48x128xf32>
    %262 = tpu.matmul %251, %232, %cst_158 {dimension_numbers = #tpu.dot_dimension_numbers<[1], [0], [0], [1], [0, 0, 1, 1], [], []>} : vector<48x48xf32>, vector<48x128xf32>, vector<48x128xf32> -> vector<48x128xf32>
    %cst_159 = arith.constant dense<0.000000e+00> : vector<48x128xf32>
    %263 = tpu.matmul %261, %233, %cst_159 {dimension_numbers = #tpu.dot_dimension_numbers<[1], [0], [0], [1], [0, 0, 1, 1], [], []>} : vector<48x48xf32>, vector<48x128xf32>, vector<48x128xf32> -> vector<48x128xf32>
    %264 = arith.addf %262, %263 : vector<48x128xf32>
    %265 = vector.broadcast %206 : vector<1x128xf32> to vector<48x128xf32>
    %266 = arith.addf %264, %265 : vector<48x128xf32>
    %267 = arith.addf %266, %180 : vector<48x128xf32>
    %cst_160 = arith.constant dense<0.000000e+00> : vector<48xf32>
    %268 = vector.multi_reduction <add>, %267, %cst_160 [1] : vector<48x128xf32> to vector<48xf32>
    %269 = vector.shape_cast %268 : vector<48xf32> to vector<48x1xf32>
    %270 = arith.mulf %267, %267 : vector<48x128xf32>
    %cst_161 = arith.constant dense<0.000000e+00> : vector<48xf32>
    %271 = vector.multi_reduction <add>, %270, %cst_161 [1] : vector<48x128xf32> to vector<48xf32>
    %272 = vector.shape_cast %271 : vector<48xf32> to vector<48x1xf32>
    %cst_162 = arith.constant 3.125000e-02 : f32
    %273 = vector.broadcast %cst_162 : f32 to vector<48x1xf32>
    %274 = arith.mulf %269, %273 : vector<48x1xf32>
    %cst_163 = arith.constant 3.125000e-02 : f32
    %275 = vector.broadcast %cst_163 : f32 to vector<48x1xf32>
    %276 = arith.mulf %272, %275 : vector<48x1xf32>
    %277 = arith.mulf %274, %274 : vector<48x1xf32>
    %278 = arith.subf %276, %277 : vector<48x1xf32>
    %279 = vector.broadcast %274 : vector<48x1xf32> to vector<48x128xf32>
    %280 = arith.subf %267, %279 : vector<48x128xf32>
    %cst_164 = arith.constant 9.99999996E-13 : f32
    %281 = vector.broadcast %cst_164 : f32 to vector<48x1xf32>
    %282 = arith.addf %278, %281 : vector<48x1xf32>
    %283 = math.rsqrt %282 : vector<48x1xf32>
    %284 = vector.broadcast %283 : vector<48x1xf32> to vector<48x128xf32>
    %285 = arith.mulf %280, %284 : vector<48x128xf32>
    %286 = vector.broadcast %212 : vector<1x128xf32> to vector<48x128xf32>
    %287 = arith.mulf %285, %286 : vector<48x128xf32>
    %288 = vector.broadcast %214 : vector<1x128xf32> to vector<48x128xf32>
    %289 = arith.addf %287, %288 : vector<48x128xf32>
    %290 = arith.truncf %289 : vector<48x128xf32> to vector<48x128xbf16>
    %cst_165 = arith.constant dense<0.000000e+00> : vector<48x128xf32>
    %291 = tpu.matmul %290, %194, %cst_165 {dimension_numbers = #tpu.dot_dimension_numbers<[1], [0], [0], [1], [0, 0, 1, 1], [], []>} : vector<48x128xbf16>, vector<128x128xbf16>, vector<48x128xf32> -> vector<48x128xf32>
    %292 = vector.broadcast %208 : vector<1x128xf32> to vector<48x128xf32>
    %293 = arith.addf %291, %292 : vector<48x128xf32>
    %294 = arith.mulf %293, %293 : vector<48x128xf32>
    %295 = arith.mulf %293, %294 : vector<48x128xf32>
    %cst_166 = arith.constant 4.471500e-02 : f32
    %296 = vector.broadcast %cst_166 : f32 to vector<48x128xf32>
    %297 = arith.mulf %296, %295 : vector<48x128xf32>
    %298 = arith.addf %293, %297 : vector<48x128xf32>
    %cst_167 = arith.constant 0.797884583 : f32
    %299 = vector.broadcast %cst_167 : f32 to vector<48x128xf32>
    %300 = arith.mulf %299, %298 : vector<48x128xf32>
    %301 = math.tanh %300 : vector<48x128xf32>
    %cst_168 = arith.constant 1.000000e+00 : f32
    %302 = vector.broadcast %cst_168 : f32 to vector<48x128xf32>
    %303 = arith.addf %302, %301 : vector<48x128xf32>
    %cst_169 = arith.constant 5.000000e-01 : f32
    %304 = vector.broadcast %cst_169 : f32 to vector<48x128xf32>
    %305 = arith.mulf %304, %303 : vector<48x128xf32>
    %306 = arith.mulf %293, %305 : vector<48x128xf32>
    %307 = arith.truncf %306 : vector<48x128xf32> to vector<48x128xbf16>
    %cst_170 = arith.constant dense<0.000000e+00> : vector<48x128xf32>
    %308 = tpu.matmul %307, %196, %cst_170 {dimension_numbers = #tpu.dot_dimension_numbers<[1], [0], [0], [1], [0, 0, 1, 1], [], []>} : vector<48x128xbf16>, vector<128x128xbf16>, vector<48x128xf32> -> vector<48x128xf32>
    %309 = vector.broadcast %210 : vector<1x128xf32> to vector<48x128xf32>
    %310 = arith.addf %308, %309 : vector<48x128xf32>
    %311 = arith.addf %310, %289 : vector<48x128xf32>
    %cst_171 = arith.constant dense<0.000000e+00> : vector<48xf32>
    %312 = vector.multi_reduction <add>, %311, %cst_171 [1] : vector<48x128xf32> to vector<48xf32>
    %313 = vector.shape_cast %312 : vector<48xf32> to vector<48x1xf32>
    %314 = arith.mulf %311, %311 : vector<48x128xf32>
    %cst_172 = arith.constant dense<0.000000e+00> : vector<48xf32>
    %315 = vector.multi_reduction <add>, %314, %cst_172 [1] : vector<48x128xf32> to vector<48xf32>
    %316 = vector.shape_cast %315 : vector<48xf32> to vector<48x1xf32>
    %cst_173 = arith.constant 3.125000e-02 : f32
    %317 = vector.broadcast %cst_173 : f32 to vector<48x1xf32>
    %318 = arith.mulf %313, %317 : vector<48x1xf32>
    %cst_174 = arith.constant 3.125000e-02 : f32
    %319 = vector.broadcast %cst_174 : f32 to vector<48x1xf32>
    %320 = arith.mulf %316, %319 : vector<48x1xf32>
    %321 = arith.mulf %318, %318 : vector<48x1xf32>
    %322 = arith.subf %320, %321 : vector<48x1xf32>
    %323 = vector.broadcast %318 : vector<48x1xf32> to vector<48x128xf32>
    %324 = arith.subf %311, %323 : vector<48x128xf32>
    %cst_175 = arith.constant 9.99999996E-13 : f32
    %325 = vector.broadcast %cst_175 : f32 to vector<48x1xf32>
    %326 = arith.addf %322, %325 : vector<48x1xf32>
    %327 = math.rsqrt %326 : vector<48x1xf32>
    %328 = vector.broadcast %327 : vector<48x1xf32> to vector<48x128xf32>
    %329 = arith.mulf %324, %328 : vector<48x128xf32>
    %330 = vector.broadcast %216 : vector<1x128xf32> to vector<48x128xf32>
    %331 = arith.mulf %329, %330 : vector<48x128xf32>
    %332 = vector.broadcast %218 : vector<1x128xf32> to vector<48x128xf32>
    %333 = arith.addf %331, %332 : vector<48x128xf32>
    %334 = vector.shape_cast %5 : vector<1x128xf32> to vector<1x128xf32>
    %335 = vector.broadcast %334 : vector<1x128xf32> to vector<6x128xf32>
    "tpu.trace_start"() <{level = 10 : i32, message = "bd,jd->bj"}> : () -> ()
    %cst_176 = arith.constant dense<0.000000e+00> : vector<6x48xf32>
    %336 = tpu.matmul %335, %333, %cst_176 {dimension_numbers = #tpu.dot_dimension_numbers<[1], [1], [0], [0], [0, 0, 1, 0], [], []>} : vector<6x128xf32>, vector<48x128xf32>, vector<6x48xf32> -> vector<6x48xf32>
    "tpu.trace_stop"() : () -> ()
    %cst_177 = arith.constant 0.176776692 : f32
    %337 = vector.broadcast %cst_177 : f32 to vector<6x48xf32>
    %338 = arith.mulf %336, %337 : vector<6x48xf32>
    %cst_178 = arith.constant 0.000000e+00 : f32
    %339 = vector.broadcast %cst_178 : f32 to vector<6x48xf32>
    %340 = arith.cmpf ogt, %2, %339 : vector<6x48xf32>
    %cst_179 = arith.constant -1.000000e+30 : f32
    %341 = vector.broadcast %cst_179 : f32 to vector<6x48xf32>
    %342 = arith.select %340, %338, %341 : vector<6x48xi1>, vector<6x48xf32>
    %cst_180 = arith.constant dense<0xFF800000> : vector<6xf32>
    %343 = vector.multi_reduction <maximumf>, %342, %cst_180 [1] : vector<6x48xf32> to vector<6xf32>
    %344 = vector.shape_cast %343 : vector<6xf32> to vector<6x1xf32>
    %345 = vector.broadcast %344 : vector<6x1xf32> to vector<6x48xf32>
    %346 = arith.subf %342, %345 : vector<6x48xf32>
    %347 = math.exp %346 : vector<6x48xf32>
    %cst_181 = arith.constant dense<0.000000e+00> : vector<6xf32>
    %348 = vector.multi_reduction <add>, %347, %cst_181 [1] : vector<6x48xf32> to vector<6xf32>
    %349 = vector.shape_cast %348 : vector<6xf32> to vector<6x1xf32>
    %350 = tpu.reciprocal %349 {approx = true} : vector<6x1xf32> -> vector<6x1xf32>
    %351 = vector.broadcast %350 : vector<6x1xf32> to vector<6x48xf32>
    %352 = arith.mulf %347, %351 : vector<6x48xf32>
    %cst_182 = arith.constant dense<0.000000e+00> : vector<6x128xf32>
    %353 = tpu.matmul %352, %333, %cst_182 {dimension_numbers = #tpu.dot_dimension_numbers<[1], [0], [0], [1], [0, 0, 1, 1], [], []>} : vector<6x48xf32>, vector<48x128xf32>, vector<6x128xf32> -> vector<6x128xf32>
    %c0_183 = arith.constant 0 : index
    %c0_184 = arith.constant 0 : index
    %354 = vector.load %arg7[%c0_183, %c0_184] : memref<6x128xf32, #tpu.memory_space<vmem>>, vector<6x128xf32>
    tpu.vector_store %arg7[%c0_183, %c0_184], %353 {strides = array<i32>} : memref<6x128xf32, #tpu.memory_space<vmem>>, vector<6x128xf32>,
    return
  }
  func.func @transform_0(%arg0: i32) -> (i32, i32) {
    %c0_i32 = arith.constant 0 : i32
    %c0_i32_0 = arith.constant 0 : i32
    %c0_i32_1 = arith.constant 0 : i32
    return %c0_i32, %c0_i32_0 : i32, i32
  }
  func.func @transform_1(%arg0: i32) -> (i32, i32) {
    %c0_i32 = arith.constant 0 : i32
    %c0_i32_0 = arith.constant 0 : i32
    %c0_i32_1 = arith.constant 0 : i32
    return %c0_i32, %c0_i32_0 : i32, i32
  }
  func.func @transform_2(%arg0: i32) -> (i32, i32) {
    %c0_i32 = arith.constant 0 : i32
    %c0_i32_0 = arith.constant 0 : i32
    %c0_i32_1 = arith.constant 0 : i32
    return %c0_i32, %c0_i32_0 : i32, i32
  }
  func.func @transform_3(%arg0: i32) -> (i32, i32) {
    %c0_i32 = arith.constant 0 : i32
    %c0_i32_0 = arith.constant 0 : i32
    %c0_i32_1 = arith.constant 0 : i32
    return %c0_i32, %c0_i32_0 : i32, i32
  }
  func.func @transform_4(%arg0: i32) -> (i32, i32, i32) {
    %c0_i32 = arith.constant 0 : i32
    %c0_i32_0 = arith.constant 0 : i32
    %c0_i32_1 = arith.constant 0 : i32
    %c0_i32_2 = arith.constant 0 : i32
    return %c0_i32, %c0_i32_0, %c0_i32_1 : i32, i32, i32
  }
  func.func @transform_5(%arg0: i32) -> (i32, i32, i32) {
    %c0_i32 = arith.constant 0 : i32
    %c0_i32_0 = arith.constant 0 : i32
    %c0_i32_1 = arith.constant 0 : i32
    %c0_i32_2 = arith.constant 0 : i32
    return %c0_i32, %c0_i32_0, %c0_i32_1 : i32, i32, i32
  }
  func.func @transform_6(%arg0: i32) -> (i32, i32) {
    %c0_i32 = arith.constant 0 : i32
    %c0_i32_0 = arith.constant 0 : i32
    %c0_i32_1 = arith.constant 0 : i32
    return %c0_i32, %c0_i32_0 : i32, i32
  }
}

</mosaic_0001>

<llo_original>
// kernel: tpu_custom_call.1
$region0: #{tpu_custom_call.1}
  #allocation0 [shape = 'u32[]', space=smem, size = 0x4, offset = 0x4, fixed_abs, tag = 'smem constant byte address 0x4 - core index']
  #allocation1 [shape = 'u32[144,128]{1,0:T(1,128)}', space=vmem, size = 0x12000, scoped, tag = 'internal scratch']
  %s0 = inlined_call_operand.hbm [shape: f32[48,128], index: 0, kind: input, shape index: {}]
  %s1 = inlined_call_operand.hbm [shape: f32[48,48], index: 1, kind: input, shape index: {}]
  %s2 = inlined_call_operand.hbm [shape: f32[6,48], index: 2, kind: input, shape index: {}]
  %s3 = inlined_call_operand.vmem [shape: f32[8,128], index: 3, kind: input, shape index: {}]
  %s4 = inlined_call_operand.hbm [shape: bf16[2,1024,128], index: 4, kind: input, shape index: {}]
  %s5 = inlined_call_operand.hbm [shape: f32[2,16,128], index: 5, kind: input, shape index: {}]
  %s6 = inlined_call_operand.hbm [shape: f32[6,128], index: 6, kind: output, shape index: {}]
  %s7 = sld [smem:[#allocation0]]
  $region54: #{tpu_custom_call.1} parent=0
    _
  %s9 = ssub.s32 1, %s7
  %s10 = scalar_select 0, %s9, %s7
  $region1: #{tpu_custom_call.1} parent=0
    #allocation2 [shape = 'u8[24576]{0}', space=vmem, size = 0x6000, scoped, tag = 'input window, operand 0, single buffered']
    #allocation3 [shape = 's32[1]{0}', space=sflag, size = 0x4, scoped, tag = 'scoped memory for tpu_custom_call.1']
    #allocation4 [shape = 's32[1]{0}', space=sflag, size = 0x4, scoped, tag = 'scoped memory for tpu_custom_call.1']
    #allocation5 [shape = 'u8[24576]{0}', space=vmem, size = 0x6000, scoped, tag = 'input window, operand 1, single buffered']
    #allocation6 [shape = 's32[1]{0}', space=sflag, size = 0x4, scoped, tag = 'scoped memory for tpu_custom_call.1']
    #allocation7 [shape = 'u8[4096]{0}', space=vmem, size = 0x1000, scoped, tag = 'input window, operand 2, single buffered']
    #allocation8 [shape = 'u8[524288]{0}', space=vmem, size = 0x80000, scoped, tag = 'input window, operand 4, single buffered']
    #allocation9 [shape = 's32[1]{0}', space=sflag, size = 0x4, scoped, tag = 'scoped memory for tpu_custom_call.1']
    #allocation10 [shape = 'u8[16384]{0}', space=vmem, size = 0x4000, scoped, tag = 'input window, operand 5, single buffered']
    #allocation11 [shape = 'u8[4096]{0}', space=vmem, size = 0x1000, scoped, tag = 'output window, operand 0, single buffered']
    %11 = vsyncpa [#allocation3], 0
    %12 = vsyncpa [#allocation6], 0
    %13 = vsyncpa [#allocation9], 0
    %14 = vsyncpa [#allocation4], 0
    // Predicated region
    $region2: #{tpu_custom_call.1} parent=1 // pred_check
      _
    $region3: #{tpu_custom_call.1} parent=1 // pred_check_branch
      %16 = sbr.rel (0) target = $region5
    $region4: #{tpu_custom_call.1} parent=1 // pred_region
      %s18 = ssub.s32 768, 768
      %19 = vsyncadd [#allocation3], %s18
      %s20 = sshll.u32 [#allocation2], 4
      %s21 = int_to_ptr.vmem [resolvable:$true] %s20
      %26 = dma.hbm_to_vmem [thread:$0]  %s0, 768, %s21, [#allocation3], 128, 128, 8
    $region5: #{tpu_custom_call.1} parent=1 // pred_fallthru
      _
    // Predicated region
    $region6: #{tpu_custom_call.1} parent=1 // pred_check
      _
    $region7: #{tpu_custom_call.1} parent=1 // pred_check_branch
      %28 = sbr.rel (0) target = $region9
    $region8: #{tpu_custom_call.1} parent=1 // pred_region
      %s30 = ssub.s32 768, 768
      %31 = vsyncadd [#allocation6], %s30
      %s32 = sshll.u32 [#allocation5], 4
      %s33 = int_to_ptr.vmem [resolvable:$true] %s32
      %38 = dma.hbm_to_vmem [thread:$0]  %s1, 768, %s33, [#allocation6], 128, 128, 8
    $region9: #{tpu_custom_call.1} parent=1 // pred_fallthru
      _
    // Predicated region
    $region10: #{tpu_custom_call.1} parent=1 // pred_check
      _
    $region11: #{tpu_custom_call.1} parent=1 // pred_check_branch
      %40 = sbr.rel (0) target = $region13
    $region12: #{tpu_custom_call.1} parent=1 // pred_region
      %s42 = ssub.s32 128, 128
      %43 = vsyncadd [#allocation6], %s42
      %s45 = sshll.u32 [#allocation7], 4
      %s46 = int_to_ptr.vmem [resolvable:$true] %s45
      %48 = dma.hbm_to_vmem [thread:$0]  %s2, 128, %s46, [#allocation6]
    $region13: #{tpu_custom_call.1} parent=1 // pred_fallthru
      _
    // Predicated region
    $region14: #{tpu_custom_call.1} parent=1 // pred_check
      _
    $region15: #{tpu_custom_call.1} parent=1 // pred_check_branch
      %50 = sbr.rel (0) target = $region17
    $region16: #{tpu_custom_call.1} parent=1 // pred_region
      _
    $region17: #{tpu_custom_call.1} parent=1 // pred_fallthru
      _
    // Predicated region
    $region18: #{tpu_custom_call.1} parent=1 // pred_check
      _
    $region19: #{tpu_custom_call.1} parent=1 // pred_check_branch
      %52 = sbr.rel (0) target = $region21
    $region20: #{tpu_custom_call.1} parent=1 // pred_region
      %s54 = ssub.s32 16384, 16384
      %55 = vsyncadd [#allocation9], %s54
      %s56 = sshll.u32 [#allocation8], 4
      %s57 = int_to_ptr.vmem [resolvable:$true] %s56
      %62 = dma.hbm_to_vmem [thread:$0]  %s4, 16384, %s57, [#allocation9], 64, 64, 4
    $region21: #{tpu_custom_call.1} parent=1 // pred_fallthru
      _
    // Predicated region
    $region22: #{tpu_custom_call.1} parent=1 // pred_check
      _
    $region23: #{tpu_custom_call.1} parent=1 // pred_check_branch
      %64 = sbr.rel (0) target = $region25
    $region24: #{tpu_custom_call.1} parent=1 // pred_region
      %s66 = ssub.s32 512, 512
      %67 = vsyncadd [#allocation9], %s66
      %s68 = sshll.u32 [#allocation10], 4
      %s69 = int_to_ptr.vmem [resolvable:$true] %s68
      %74 = dma.hbm_to_vmem [thread:$0]  %s5, 512, %s69, [#allocation9], 128, 128, 8
    $region25: #{tpu_custom_call.1} parent=1 // pred_fallthru
      _
    // Predicated region
    $region26: #{tpu_custom_call.1} parent=1 // pred_check
      _
    $region27: #{tpu_custom_call.1} parent=1 // pred_check_branch
      %76 = sbr.rel (0) target = $region29
    $region28: #{tpu_custom_call.1} parent=1 // pred_region
      %77 = dma.done [#allocation3], 768
    $region29: #{tpu_custom_call.1} parent=1 // pred_fallthru
      _
    // Predicated region
    $region30: #{tpu_custom_call.1} parent=1 // pred_check
      _
    $region31: #{tpu_custom_call.1} parent=1 // pred_check_branch
      %79 = sbr.rel (0) target = $region33
    $region32: #{tpu_custom_call.1} parent=1 // pred_region
      %80 = dma.done [#allocation6], 768
    $region33: #{tpu_custom_call.1} parent=1 // pred_fallthru
      _
    // Predicated region
    $region34: #{tpu_custom_call.1} parent=1 // pred_check
      _
    $region35: #{tpu_custom_call.1} parent=1 // pred_check_branch
      %82 = sbr.rel (0) target = $region37
    $region36: #{tpu_custom_call.1} parent=1 // pred_region
      %83 = dma.done [#allocation6], 128
    $region37: #{tpu_custom_call.1} parent=1 // pred_fallthru
      _
    // Predicated region
    $region38: #{tpu_custom_call.1} parent=1 // pred_check
      _
    $region39: #{tpu_custom_call.1} parent=1 // pred_check_branch
      %85 = sbr.rel (0) target = $region41
    $region40: #{tpu_custom_call.1} parent=1 // pred_region
      %86 = dma.done [#allocation9], 16384
    $region41: #{tpu_custom_call.1} parent=1 // pred_fallthru
      _
    // Predicated region
    $region42: #{tpu_custom_call.1} parent=1 // pred_check
      _
    $region43: #{tpu_custom_call.1} parent=1 // pred_check_branch
      %88 = sbr.rel (0) target = $region45
    $region44: #{tpu_custom_call.1} parent=1 // pred_region
      %89 = dma.done [#allocation9], 512
    $region45: #{tpu_custom_call.1} parent=1 // pred_fallthru
      _
    %v91 = vld [vmem:[#allocation2] sm:$0xff]
    %v92 = vld [vmem:[#allocation2 + $0x8] sm:$0xff]
    %v93 = vld [vmem:[#allocation2 + $0x10] sm:$0xff]
    %v94 = vld [vmem:[#allocation2 + $0x18] sm:$0xff]
    %v95 = vld [vmem:[#allocation2 + $0x20] sm:$0xff]
    %v96 = vld [vmem:[#allocation2 + $0x28] sm:$0xff]
    %v97 = vld [vmem:[#allocation5] sm:$0xff]
    %v98 = vld [vmem:[#allocation5 + $0x8] sm:$0xff]
    %v99 = vld [vmem:[#allocation5 + $0x10] sm:$0xff]
    %v100 = vld [vmem:[#allocation5 + $0x18] sm:$0xff]
    %v101 = vld [vmem:[#allocation5 + $0x20] sm:$0xff]
    %v102 = vld [vmem:[#allocation5 + $0x28] sm:$0xff]
    %v103 = vld [vmem:[#allocation7] sm:$0x3f]
    %v104 = vld [vmem:[%s3] sm:$0x1]
    %v105 = vld [vmem:[%s3 + $0x1] sm:$0x1]
    %v106 = vld [vmem:[%s3 + $0x2] sm:$0x1]
    %107 = vadd.xlane.f32.xlu0 %v91
    %v108 = vpop.xlane.xlu0 %107
    %109 = vadd.xlane.f32.xlu0 %v92
    %v110 = vpop.xlane.xlu0 %109
    %111 = vadd.xlane.f32.xlu0 %v93
    %v112 = vpop.xlane.xlu0 %111
    %113 = vadd.xlane.f32.xlu0 %v94
    %v114 = vpop.xlane.xlu0 %113
    %115 = vadd.xlane.f32.xlu0 %v95
    %v116 = vpop.xlane.xlu0 %115
    %117 = vadd.xlane.f32.xlu0 %v96
    %v118 = vpop.xlane.xlu0 %117
    %v119 = vmul.f32 %v91, %v91
    %v120 = vmul.f32 %v92, %v92
    %v121 = vmul.f32 %v93, %v93
    %v122 = vmul.f32 %v94, %v94
    %v123 = vmul.f32 %v95, %v95
    %v124 = vmul.f32 %v96, %v96
    %125 = vadd.xlane.f32.xlu0 %v119
    %v126 = vpop.xlane.xlu0 %125
    %127 = vadd.xlane.f32.xlu0 %v120
    %v128 = vpop.xlane.xlu0 %127
    %129 = vadd.xlane.f32.xlu0 %v121
    %v130 = vpop.xlane.xlu0 %129
    %131 = vadd.xlane.f32.xlu0 %v122
    %v132 = vpop.xlane.xlu0 %131
    %133 = vadd.xlane.f32.xlu0 %v123
    %v134 = vpop.xlane.xlu0 %133
    %135 = vadd.xlane.f32.xlu0 %v124
    %v136 = vpop.xlane.xlu0 %135
    %v137 = vmul.f32 %v108, 0.03125
    %v138 = vmul.f32 %v110, 0.03125
    %v139 = vmul.f32 %v112, 0.03125
    %v140 = vmul.f32 %v114, 0.03125
    %v141 = vmul.f32 %v116, 0.03125
    %v142 = vmul.f32 %v118, 0.03125
    %v143 = vmul.f32 %v126, 0.03125
    %v144 = vmul.f32 %v128, 0.03125
    %v145 = vmul.f32 %v130, 0.03125
    %v146 = vmul.f32 %v132, 0.03125
    %v147 = vmul.f32 %v134, 0.03125
    %v148 = vmul.f32 %v136, 0.03125
    %v149 = vmul.f32 %v137, %v137
    %v150 = vmul.f32 %v138, %v138
    %v151 = vmul.f32 %v139, %v139
    %v152 = vmul.f32 %v140, %v140
    %v153 = vmul.f32 %v141, %v141
    %v154 = vmul.f32 %v142, %v142
    %v155 = vsub.f32 %v143, %v149
    %v156 = vsub.f32 %v144, %v150
    %v157 = vsub.f32 %v145, %v151
    %v158 = vsub.f32 %v146, %v152
    %v159 = vsub.f32 %v147, %v153
    %v160 = vsub.f32 %v148, %v154
    %v161 = vsub.f32 %v91, %v137
    %v162 = vsub.f32 %v92, %v138
    %v163 = vsub.f32 %v93, %v139
    %v164 = vsub.f32 %v94, %v140
    %v165 = vsub.f32 %v95, %v141
    %v166 = vsub.f32 %v96, %v142
    %v167 = vadd.f32 %v155, 1e-12
    %v168 = vadd.f32 %v156, 1e-12
    %v169 = vadd.f32 %v157, 1e-12
    %v170 = vadd.f32 %v158, 1e-12
    %v171 = vadd.f32 %v159, 1e-12
    %v172 = vadd.f32 %v160, 1e-12
    %v173 = vrsqrt.pop %v167
    %v174 = vrsqrt.pop %v168
    %v175 = vrsqrt.pop %v169
    %v176 = vrsqrt.pop %v170
    %v177 = vrsqrt.pop %v171
    %v178 = vrsqrt.pop %v172
    %v179 = vmul.f32 %v161, %v173
    %v180 = vmul.f32 %v162, %v174
    %v181 = vmul.f32 %v163, %v175
    %v182 = vmul.f32 %v164, %v176
    %v183 = vmul.f32 %v165, %v177
    %v184 = vmul.f32 %v166, %v178
    %v185 = vlaneseq
    %v186 = vshrl.u32 %v185, 7
    %v187 = vsub.s32 0, %v186
    %v188 = vrot.slane %v104, %v187
    %v189 = vmul.f32 %v179, %v188
    %v190 = vmul.f32 %v180, %v188
    %v191 = vmul.f32 %v181, %v188
    %v192 = vmul.f32 %v182, %v188
    %v193 = vmul.f32 %v183, %v188
    %v194 = vmul.f32 %v184, %v188
    %v195 = vlaneseq
    %v196 = vshrl.u32 %v195, 7
    %v197 = vsub.s32 0, %v196
    %v198 = vrot.slane %v105, %v197
    %v199 = vadd.f32 %v189, %v198
    %v200 = vadd.f32 %v190, %v198
    %v201 = vadd.f32 %v191, %v198
    %v202 = vadd.f32 %v192, %v198
    %v203 = vadd.f32 %v193, %v198
    %v204 = vadd.f32 %v194, %v198
    %v205 = vld [vmem:[#allocation8] sm:$0xf]
    %v206 = vld [vmem:[#allocation8 + $0x4] sm:$0xf]
    %v207 = vld [vmem:[#allocation8 + $0x8] sm:$0xf]
    %v208 = vld [vmem:[#allocation8 + $0xc] sm:$0xf]
    %v209 = vld [vmem:[#allocation8 + $0x10] sm:$0xf]
    %v210 = vld [vmem:[#allocation8 + $0x14] sm:$0xf]
    %v211 = vld [vmem:[#allocation8 + $0x18] sm:$0xf]
    %v212 = vld [vmem:[#allocation8 + $0x1c] sm:$0xf]
    %v213 = vld [vmem:[#allocation8 + $0x20] sm:$0xf]
    %v214 = vld [vmem:[#allocation8 + $0x24] sm:$0xf]
    %v215 = vld [vmem:[#allocation8 + $0x28] sm:$0xf]
    %v216 = vld [vmem:[#allocation8 + $0x2c] sm:$0xf]
    %v217 = vld [vmem:[#allocation8 + $0x30] sm:$0xf]
    %v218 = vld [vmem:[#allocation8 + $0x34] sm:$0xf]
    %v219 = vld [vmem:[#allocation8 + $0x38] sm:$0xf]
    %v220 = vld [vmem:[#allocation8 + $0x3c] sm:$0xf]
    %v221 = vld [vmem:[#allocation8 + $0x40] sm:$0xf]
    %v222 = vld [vmem:[#allocation8 + $0x44] sm:$0xf]
    %v223 = vld [vmem:[#allocation8 + $0x48] sm:$0xf]
    %v224 = vld [vmem:[#allocation8 + $0x4c] sm:$0xf]
    %v225 = vld [vmem:[#allocation8 + $0x50] sm:$0xf]
    %v226 = vld [vmem:[#allocation8 + $0x54] sm:$0xf]
    %v227 = vld [vmem:[#allocation8 + $0x58] sm:$0xf]
    %v228 = vld [vmem:[#allocation8 + $0x5c] sm:$0xf]
    %v229 = vld [vmem:[#allocation8 + $0x60] sm:$0xf]
    %v230 = vld [vmem:[#allocation8 + $0x64] sm:$0xf]
    %v231 = vld [vmem:[#allocation8 + $0x68] sm:$0xf]
    %v232 = vld [vmem:[#allocation8 + $0x6c] sm:$0xf]
    %v233 = vld [vmem:[#allocation8 + $0x70] sm:$0xf]
    %v234 = vld [vmem:[#allocation8 + $0x74] sm:$0xf]
    %v235 = vld [vmem:[#allocation8 + $0x78] sm:$0xf]
    %v236 = vld [vmem:[#allocation8 + $0x7c] sm:$0xf]
    %v237 = vld [vmem:[#allocation8 + $0x80] sm:$0xf]
    %v238 = vld [vmem:[#allocation8 + $0x84] sm:$0xf]
    %v239 = vld [vmem:[#allocation8 + $0x88] sm:$0xf]
    %v240 = vld [vmem:[#allocation8 + $0x8c] sm:$0xf]
    %v241 = vld [vmem:[#allocation8 + $0x90] sm:$0xf]
    %v242 = vld [vmem:[#allocation8 + $0x94] sm:$0xf]
    %v243 = vld [vmem:[#allocation8 + $0x98] sm:$0xf]
    %v244 = vld [vmem:[#allocation8 + $0x9c] sm:$0xf]
    %v245 = vld [vmem:[#allocation8 + $0xa0] sm:$0xf]
    %v246 = vld [vmem:[#allocation8 + $0xa4] sm:$0xf]
    %v247 = vld [vmem:[#allocation8 + $0xa8] sm:$0xf]
    %v248 = vld [vmem:[#allocation8 + $0xac] sm:$0xf]
    %v249 = vld [vmem:[#allocation8 + $0xb0] sm:$0xf]
    %v250 = vld [vmem:[#allocation8 + $0xb4] sm:$0xf]
    %v251 = vld [vmem:[#allocation8 + $0xb8] sm:$0xf]
    %v252 = vld [vmem:[#allocation8 + $0xbc] sm:$0xf]
    %v253 = vld [vmem:[#allocation8 + $0xc0] sm:$0xf]
    %v254 = vld [vmem:[#allocation8 + $0xc4] sm:$0xf]
    %v255 = vld [vmem:[#allocation8 + $0xc8] sm:$0xf]
    %v256 = vld [vmem:[#allocation8 + $0xcc] sm:$0xf]
    %v257 = vld [vmem:[#allocation8 + $0xd0] sm:$0xf]
    %v258 = vld [vmem:[#allocation8 + $0xd4] sm:$0xf]
    %v259 = vld [vmem:[#allocation8 + $0xd8] sm:$0xf]
    %v260 = vld [vmem:[#allocation8 + $0xdc] sm:$0xf]
    %v261 = vld [vmem:[#allocation8 + $0xe0] sm:$0xf]
    %v262 = vld [vmem:[#allocation8 + $0xe4] sm:$0xf]
    %v263 = vld [vmem:[#allocation8 + $0xe8] sm:$0xf]
    %v264 = vld [vmem:[#allocation8 + $0xec] sm:$0xf]
    %v265 = vld [vmem:[#allocation8 + $0xf0] sm:$0xf]
    %v266 = vld [vmem:[#allocation8 + $0xf4] sm:$0xf]
    %v267 = vld [vmem:[#allocation8 + $0xf8] sm:$0xf]
    %v268 = vld [vmem:[#allocation8 + $0xfc] sm:$0xf]
    %v269 = vld [vmem:[#allocation8 + $0x100] sm:$0xf]
    %v270 = vld [vmem:[#allocation8 + $0x104] sm:$0xf]
    %v271 = vld [vmem:[#allocation8 + $0x108] sm:$0xf]
    %v272 = vld [vmem:[#allocation8 + $0x10c] sm:$0xf]
    %v273 = vld [vmem:[#allocation8 + $0x110] sm:$0xf]
    %v274 = vld [vmem:[#allocation8 + $0x114] sm:$0xf]
    %v275 = vld [vmem:[#allocation8 + $0x118] sm:$0xf]
    %v276 = vld [vmem:[#allocation8 + $0x11c] sm:$0xf]
    %v277 = vld [vmem:[#allocation8 + $0x120] sm:$0xf]
    %v278 = vld [vmem:[#allocation8 + $0x124] sm:$0xf]
    %v279 = vld [vmem:[#allocation8 + $0x128] sm:$0xf]
    %v280 = vld [vmem:[#allocation8 + $0x12c] sm:$0xf]
    %v281 = vld [vmem:[#allocation8 + $0x130] sm:$0xf]
    %v282 = vld [vmem:[#allocation8 + $0x134] sm:$0xf]
    %v283 = vld [vmem:[#allocation8 + $0x138] sm:$0xf]
    %v284 = vld [vmem:[#allocation8 + $0x13c] sm:$0xf]
    %v285 = vld [vmem:[#allocation8 + $0x140] sm:$0xf]
    %v286 = vld [vmem:[#allocation8 + $0x144] sm:$0xf]
    %v287 = vld [vmem:[#allocation8 + $0x148] sm:$0xf]
    %v288 = vld [vmem:[#allocation8 + $0x14c] sm:$0xf]
    %v289 = vld [vmem:[#allocation8 + $0x150] sm:$0xf]
    %v290 = vld [vmem:[#allocation8 + $0x154] sm:$0xf]
    %v291 = vld [vmem:[#allocation8 + $0x158] sm:$0xf]
    %v292 = vld [vmem:[#allocation8 + $0x15c] sm:$0xf]
    %v293 = vld [vmem:[#allocation8 + $0x160] sm:$0xf]
    %v294 = vld [vmem:[#allocation8 + $0x164] sm:$0xf]
    %v295 = vld [vmem:[#allocation8 + $0x168] sm:$0xf]
    %v296 = vld [vmem:[#allocation8 + $0x16c] sm:$0xf]
    %v297 = vld [vmem:[#allocation8 + $0x170] sm:$0xf]
    %v298 = vld [vmem:[#allocation8 + $0x174] sm:$0xf]
    %v299 = vld [vmem:[#allocation8 + $0x178] sm:$0xf]
    %v300 = vld [vmem:[#allocation8 + $0x17c] sm:$0xf]
    %v301 = vld [vmem:[#allocation8 + $0x180] sm:$0xf]
    %v302 = vld [vmem:[#allocation8 + $0x184] sm:$0xf]
    %v303 = vld [vmem:[#allocation8 + $0x188] sm:$0xf]
    %v304 = vld [vmem:[#allocation8 + $0x18c] sm:$0xf]
    %v305 = vld [vmem:[#allocation8 + $0x190] sm:$0xf]
    %v306 = vld [vmem:[#allocation8 + $0x194] sm:$0xf]
    %v307 = vld [vmem:[#allocation8 + $0x198] sm:$0xf]
    %v308 = vld [vmem:[#allocation8 + $0x19c] sm:$0xf]
    %v309 = vld [vmem:[#allocation8 + $0x1a0] sm:$0xf]
    %v310 = vld [vmem:[#allocation8 + $0x1a4] sm:$0xf]
    %v311 = vld [vmem:[#allocation8 + $0x1a8] sm:$0xf]
    %v312 = vld [vmem:[#allocation8 + $0x1ac] sm:$0xf]
    %v313 = vld [vmem:[#allocation8 + $0x1b0] sm:$0xf]
    %v314 = vld [vmem:[#allocation8 + $0x1b4] sm:$0xf]
    %v315 = vld [vmem:[#allocation8 + $0x1b8] sm:$0xf]
    %v316 = vld [vmem:[#allocation8 + $0x1bc] sm:$0xf]
    %v317 = vld [vmem:[#allocation8 + $0x1c0] sm:$0xf]
    %v318 = vld [vmem:[#allocation8 + $0x1c4] sm:$0xf]
    %v319 = vld [vmem:[#allocation8 + $0x1c8] sm:$0xf]
    %v320 = vld [vmem:[#allocation8 + $0x1cc] sm:$0xf]
    %v321 = vld [vmem:[#allocation8 + $0x1d0] sm:$0xf]
    %v322 = vld [vmem:[#allocation8 + $0x1d4] sm:$0xf]
    %v323 = vld [vmem:[#allocation8 + $0x1d8] sm:$0xf]
    %v324 = vld [vmem:[#allocation8 + $0x1dc] sm:$0xf]
    %v325 = vld [vmem:[#allocation8 + $0x1e0] sm:$0xf]
    %v326 = vld [vmem:[#allocation8 + $0x1e4] sm:$0xf]
    %v327 = vld [vmem:[#allocation8 + $0x1e8] sm:$0xf]
    %v328 = vld [vmem:[#allocation8 + $0x1ec] sm:$0xf]
    %v329 = vld [vmem:[#allocation8 + $0x1f0] sm:$0xf]
    %v330 = vld [vmem:[#allocation8 + $0x1f4] sm:$0xf]
    %v331 = vld [vmem:[#allocation8 + $0x1f8] sm:$0xf]
    %v332 = vld [vmem:[#allocation8 + $0x1fc] sm:$0xf]
    %v333 = vld [vmem:[#allocation10] sm:$0x1]
    %v334 = vld [vmem:[#allocation10 + $0x1] sm:$0x1]
    %v335 = vld [vmem:[#allocation10 + $0x2] sm:$0x1]
    %v336 = vld [vmem:[#allocation10 + $0x3] sm:$0x1]
    %v337 = vld [vmem:[#allocation10 + $0x4] sm:$0x1]
    %v338 = vld [vmem:[#allocation10 + $0x5] sm:$0x1]
    %v339 = vld [vmem:[#allocation10 + $0x6] sm:$0x1]
    %v340 = vld [vmem:[#allocation10 + $0x7] sm:$0x1]
    %v341 = vld [vmem:[#allocation10 + $0x8] sm:$0x1]
    %v342 = vld [vmem:[#allocation10 + $0x9] sm:$0x1]
    %v343 = vld [vmem:[#allocation10 + $0xa] sm:$0x1]
    %v344 = vpack.c.bf16 %v200, %v199
    %v345 = vpack.c.bf16 %v202, %v201
    %v346 = vpack.c.bf16 %v204, %v203
    %v347 = vlaneseq
    %v348 = vshrl.u32 %v347, 7
    %v349 = vsub.s32 0, %v348
    %v350 = vrot.slane %v333, %v349
    %v367 = vunpack.c.l.b16 %v205
    %v368 = vunpack.c.l.b16 %v206
    %v369 = vunpack.c.l.b16 %v207
    %v370 = vunpack.c.l.b16 %v208
    %v371 = vunpack.c.l.b16 %v209
    %v372 = vunpack.c.l.b16 %v210
    %v373 = vunpack.c.l.b16 %v211
    %v374 = vunpack.c.l.b16 %v212
    %v375 = vunpack.c.l.b16 %v213
    %v376 = vunpack.c.l.b16 %v214
    %v377 = vunpack.c.l.b16 %v215
    %v378 = vunpack.c.l.b16 %v216
    %v379 = vunpack.c.l.b16 %v217
    %v380 = vunpack.c.l.b16 %v218
    %v381 = vunpack.c.l.b16 %v219
    %v382 = vunpack.c.l.b16 %v220
    %v383 = vpack.c.b16 %v368, %v367
    %v384 = vpack.c.b16 %v370, %v369
    %v385 = vpack.c.b16 %v372, %v371
    %v386 = vpack.c.b16 %v374, %v373
    %v387 = vpack.c.b16 %v376, %v375
    %v388 = vpack.c.b16 %v378, %v377
    %v389 = vpack.c.b16 %v380, %v379
    %v390 = vpack.c.b16 %v382, %v381
    %399 = vmatprep.subr.bf16.mxu0 0
    %400 = vmatpush1.bf16.msra.mxu0 %v383
    %401 = vmatprep.subr.bf16.mxu0 0
    %402 = vmatpush1.bf16.msra.mxu0 %v384
    %403 = vmatprep.subr.bf16.mxu0 0
    %404 = vmatpush1.bf16.msra.mxu0 %v385
    %405 = vmatprep.subr.bf16.mxu0 0
    %406 = vmatpush1.bf16.msra.mxu0 %v386
    %407 = vmatprep.subr.bf16.mxu0 0
    %408 = vmatpush1.bf16.msra.mxu0 %v387
    %409 = vmatprep.subr.bf16.mxu0 0
    %410 = vmatpush1.bf16.msra.mxu0 %v388
    %411 = vmatprep.subr.bf16.mxu0 0
    %412 = vmatpush1.bf16.msra.mxu0 %v389
    %413 = vmatprep.subr.bf16.mxu0 0
    %414 = vmatpush1.bf16.msra.mxu0 %v390
    %415 = vmatprep.subr.bf16.mxu0 0
    %416 = vmatpush1.bf16.msra.mxu0 0
    %417 = vmatprep.subr.bf16.mxu0 0
    %418 = vmatpush1.bf16.msra.mxu0 0
    %419 = vmatprep.subr.bf16.mxu0 0
    %420 = vmatpush1.bf16.msra.mxu0 0
    %421 = vmatprep.subr.bf16.mxu0 0
    %422 = vmatpush1.bf16.msra.mxu0 0
    %423 = vmatprep.subr.bf16.mxu0 0
    %424 = vmatpush1.bf16.msra.mxu0 0
    %425 = vmatprep.subr.bf16.mxu0 0
    %426 = vmatpush1.bf16.msra.mxu0 0
    %427 = vmatprep.subr.bf16.mxu0 0
    %428 = vmatpush1.bf16.msra.mxu0 0
    %429 = vmatprep.subr.bf16.mxu0 0
    %430 = vmatpush1.bf16.msra.mxu0 0
    %431 = vmatprep.mubr.bf16.mxu0 0
    %432 = vmatmul.mubr.bf16.gmra.mrb[0].mxu0 %v344
    %v433 = vpop.f32.mrb[0].mxu0
    %v434 = vadd.f32 %v350, %v433
    %v435 = vpop.f32.mrb[0].mxu0
    %v436 = vpop.f32.mrb[0].mxu0
    %v437 = vadd.f32 %v350, %v436
    %v438 = vpop.f32.mrb[0].mxu0
    %439 = vmatprep.mubr.bf16.mxu0 0
    %440 = vmatmul.mubr.bf16.gmra.mrb[0].mxu0 %v345
    %v441 = vpop.f32.mrb[0].mxu0
    %v442 = vadd.f32 %v350, %v441
    %v443 = vpop.f32.mrb[0].mxu0
    %v444 = vpop.f32.mrb[0].mxu0
    %v445 = vadd.f32 %v350, %v444
    %v446 = vpop.f32.mrb[0].mxu0
    %447 = vmatprep.mubr.bf16.mxu0 0
    %448 = vmatmul.mubr.bf16.gmra.mrb[0].mxu0 %v346
    %v449 = vpop.f32.mrb[0].mxu0
    %v450 = vadd.f32 %v350, %v449
    %v451 = vpop.f32.mrb[0].mxu0
    %v452 = vpop.f32.mrb[0].mxu0
    %v453 = vadd.f32 %v350, %v452
    %v454 = vpop.f32.mrb[0].mxu0
    %455 = vdwg.mxu0
    %v456 = vlaneseq
    %v457 = vshrl.u32 %v456, 7
    %v458 = vsub.s32 0, %v457
    %v459 = vrot.slane %v334, %v458
    %v476 = vunpack.c.l.b16 %v221
    %v477 = vunpack.c.l.b16 %v222
    %v478 = vunpack.c.l.b16 %v223
    %v479 = vunpack.c.l.b16 %v224
    %v480 = vunpack.c.l.b16 %v225
    %v481 = vunpack.c.l.b16 %v226
    %v482 = vunpack.c.l.b16 %v227
    %v483 = vunpack.c.l.b16 %v228
    %v484 = vunpack.c.l.b16 %v229
    %v485 = vunpack.c.l.b16 %v230
    %v486 = vunpack.c.l.b16 %v231
    %v487 = vunpack.c.l.b16 %v232
    %v488 = vunpack.c.l.b16 %v233
    %v489 = vunpack.c.l.b16 %v234
    %v490 = vunpack.c.l.b16 %v235
    %v491 = vunpack.c.l.b16 %v236
    %v492 = vpack.c.b16 %v477, %v476
    %v493 = vpack.c.b16 %v479, %v478
    %v494 = vpack.c.b16 %v481, %v480
    %v495 = vpack.c.b16 %v483, %v482
    %v496 = vpack.c.b16 %v485, %v484
    %v497 = vpack.c.b16 %v487, %v486
    %v498 = vpack.c.b16 %v489, %v488
    %v499 = vpack.c.b16 %v491, %v490
    %508 = vmatprep.subr.bf16.mxu0 0
    %509 = vmatpush1.bf16.msra.mxu0 %v492
    %510 = vmatprep.subr.bf16.mxu0 0
    %511 = vmatpush1.bf16.msra.mxu0 %v493
    %512 = vmatprep.subr.bf16.mxu0 0
    %513 = vmatpush1.bf16.msra.mxu0 %v494
    %514 = vmatprep.subr.bf16.mxu0 0
    %515 = vmatpush1.bf16.msra.mxu0 %v495
    %516 = vmatprep.subr.bf16.mxu0 0
    %517 = vmatpush1.bf16.msra.mxu0 %v496
    %518 = vmatprep.subr.bf16.mxu0 0
    %519 = vmatpush1.bf16.msra.mxu0 %v497
    %520 = vmatprep.subr.bf16.mxu0 0
    %521 = vmatpush1.bf16.msra.mxu0 %v498
    %522 = vmatprep.subr.bf16.mxu0 0
    %523 = vmatpush1.bf16.msra.mxu0 %v499
    %524 = vmatprep.subr.bf16.mxu0 0
    %525 = vmatpush1.bf16.msra.mxu0 0
    %526 = vmatprep.subr.bf16.mxu0 0
    %527 = vmatpush1.bf16.msra.mxu0 0
    %528 = vmatprep.subr.bf16.mxu0 0
    %529 = vmatpush1.bf16.msra.mxu0 0
    %530 = vmatprep.subr.bf16.mxu0 0
    %531 = vmatpush1.bf16.msra.mxu0 0
    %532 = vmatprep.subr.bf16.mxu0 0
    %533 = vmatpush1.bf16.msra.mxu0 0
    %534 = vmatprep.subr.bf16.mxu0 0
    %535 = vmatpush1.bf16.msra.mxu0 0
    %536 = vmatprep.subr.bf16.mxu0 0
    %537 = vmatpush1.bf16.msra.mxu0 0
    %538 = vmatprep.subr.bf16.mxu0 0
    %539 = vmatpush1.bf16.msra.mxu0 0
    %540 = vmatprep.mubr.bf16.mxu0 0
    %541 = vmatmul.mubr.bf16.gmra.mrb[0].mxu0 %v344
    %v542 = vpop.f32.mrb[0].mxu0
    %v543 = vadd.f32 %v459, %v542
    %v544 = vpop.f32.mrb[0].mxu0
    %v545 = vpop.f32.mrb[0].mxu0
    %v546 = vadd.f32 %v459, %v545
    %v547 = vpop.f32.mrb[0].mxu0
    %548 = vmatprep.mubr.bf16.mxu0 0
    %549 = vmatmul.mubr.bf16.gmra.mrb[0].mxu0 %v345
    %v550 = vpop.f32.mrb[0].mxu0
    %v551 = vadd.f32 %v459, %v550
    %v552 = vpop.f32.mrb[0].mxu0
    %v553 = vpop.f32.mrb[0].mxu0
    %v554 = vadd.f32 %v459, %v553
    %v555 = vpop.f32.mrb[0].mxu0
    %556 = vmatprep.mubr.bf16.mxu0 0
    %557 = vmatmul.mubr.bf16.gmra.mrb[0].mxu0 %v346
    %v558 = vpop.f32.mrb[0].mxu0
    %v559 = vadd.f32 %v459, %v558
    %v560 = vpop.f32.mrb[0].mxu0
    %v561 = vpop.f32.mrb[0].mxu0
    %v562 = vadd.f32 %v459, %v561
    %v563 = vpop.f32.mrb[0].mxu0
    %564 = vdwg.mxu0
    %v565 = vlaneseq
    %v566 = vshrl.u32 %v565, 7
    %v567 = vsub.s32 0, %v566
    %v568 = vrot.slane %v335, %v567
    %v585 = vunpack.c.l.b16 %v237
    %v586 = vunpack.c.l.b16 %v238
    %v587 = vunpack.c.l.b16 %v239
    %v588 = vunpack.c.l.b16 %v240
    %v589 = vunpack.c.l.b16 %v241
    %v590 = vunpack.c.l.b16 %v242
    %v591 = vunpack.c.l.b16 %v243
    %v592 = vunpack.c.l.b16 %v244
    %v593 = vunpack.c.l.b16 %v245
    %v594 = vunpack.c.l.b16 %v246
    %v595 = vunpack.c.l.b16 %v247
    %v596 = vunpack.c.l.b16 %v248
    %v597 = vunpack.c.l.b16 %v249
    %v598 = vunpack.c.l.b16 %v250
    %v599 = vunpack.c.l.b16 %v251
    %v600 = vunpack.c.l.b16 %v252
    %v601 = vpack.c.b16 %v586, %v585
    %v602 = vpack.c.b16 %v588, %v587
    %v603 = vpack.c.b16 %v590, %v589
    %v604 = vpack.c.b16 %v592, %v591
    %v605 = vpack.c.b16 %v594, %v593
    %v606 = vpack.c.b16 %v596, %v595
    %v607 = vpack.c.b16 %v598, %v597
    %v608 = vpack.c.b16 %v600, %v599
    %617 = vmatprep.subr.bf16.mxu0 0
    %618 = vmatpush1.bf16.msra.mxu0 %v601
    %619 = vmatprep.subr.bf16.mxu0 0
    %620 = vmatpush1.bf16.msra.mxu0 %v602
    %621 = vmatprep.subr.bf16.mxu0 0
    %622 = vmatpush1.bf16.msra.mxu0 %v603
    %623 = vmatprep.subr.bf16.mxu0 0
    %624 = vmatpush1.bf16.msra.mxu0 %v604
    %625 = vmatprep.subr.bf16.mxu0 0
    %626 = vmatpush1.bf16.msra.mxu0 %v605
    %627 = vmatprep.subr.bf16.mxu0 0
    %628 = vmatpush1.bf16.msra.mxu0 %v606
    %629 = vmatprep.subr.bf16.mxu0 0
    %630 = vmatpush1.bf16.msra.mxu0 %v607
    %631 = vmatprep.subr.bf16.mxu0 0
    %632 = vmatpush1.bf16.msra.mxu0 %v608
    %633 = vmatprep.subr.bf16.mxu0 0
    %634 = vmatpush1.bf16.msra.mxu0 0
    %635 = vmatprep.subr.bf16.mxu0 0
    %636 = vmatpush1.bf16.msra.mxu0 0
    %637 = vmatprep.subr.bf16.mxu0 0
    %638 = vmatpush1.bf16.msra.mxu0 0
    %639 = vmatprep.subr.bf16.mxu0 0
    %640 = vmatpush1.bf16.msra.mxu0 0
    %641 = vmatprep.subr.bf16.mxu0 0
    %642 = vmatpush1.bf16.msra.mxu0 0
    %643 = vmatprep.subr.bf16.mxu0 0
    %644 = vmatpush1.bf16.msra.mxu0 0
    %645 = vmatprep.subr.bf16.mxu0 0
    %646 = vmatpush1.bf16.msra.mxu0 0
    %647 = vmatprep.subr.bf16.mxu0 0
    %648 = vmatpush1.bf16.msra.mxu0 0
    %649 = vmatprep.mubr.bf16.mxu0 0
    %650 = vmatmul.mubr.bf16.gmra.mrb[0].mxu0 %v344
    %v651 = vpop.f32.mrb[0].mxu0
    %v652 = vadd.f32 %v568, %v651
    %v653 = vpop.f32.mrb[0].mxu0
    %v654 = vpop.f32.mrb[0].mxu0
    %v655 = vadd.f32 %v568, %v654
    %v656 = vpop.f32.mrb[0].mxu0
    %657 = vmatprep.mubr.bf16.mxu0 0
    %658 = vmatmul.mubr.bf16.gmra.mrb[0].mxu0 %v345
    %v659 = vpop.f32.mrb[0].mxu0
    %v660 = vadd.f32 %v568, %v659
    %v661 = vpop.f32.mrb[0].mxu0
    %v662 = vpop.f32.mrb[0].mxu0
    %v663 = vadd.f32 %v568, %v662
    %v664 = vpop.f32.mrb[0].mxu0
    %665 = vmatprep.mubr.bf16.mxu0 0
    %666 = vmatmul.mubr.bf16.gmra.mrb[0].mxu0 %v346
    %v667 = vpop.f32.mrb[0].mxu0
    %v668 = vadd.f32 %v568, %v667
    %v669 = vpop.f32.mrb[0].mxu0
    %v670 = vpop.f32.mrb[0].mxu0
    %v671 = vadd.f32 %v568, %v670
    %v672 = vpop.f32.mrb[0].mxu0
    %673 = vdwg.mxu0
    %v674 = vlaneseq
    %v675 = vshrl.u32 %v674, 7
    %v676 = vsub.s32 0, %v675
    %v677 = vrot.slane %v336, %v676
    %v694 = vunpack.c.l.b16 %v253
    %v695 = vunpack.c.l.b16 %v254
    %v696 = vunpack.c.l.b16 %v255
    %v697 = vunpack.c.l.b16 %v256
    %v698 = vunpack.c.l.b16 %v257
    %v699 = vunpack.c.l.b16 %v258
    %v700 = vunpack.c.l.b16 %v259
    %v701 = vunpack.c.l.b16 %v260
    %v702 = vunpack.c.l.b16 %v261
    %v703 = vunpack.c.l.b16 %v262
    %v704 = vunpack.c.l.b16 %v263
    %v705 = vunpack.c.l.b16 %v264
    %v706 = vunpack.c.l.b16 %v265
    %v707 = vunpack.c.l.b16 %v266
    %v708 = vunpack.c.l.b16 %v267
    %v709 = vunpack.c.l.b16 %v268
    %v710 = vpack.c.b16 %v695, %v694
    %v711 = vpack.c.b16 %v697, %v696
    %v712 = vpack.c.b16 %v699, %v698
    %v713 = vpack.c.b16 %v701, %v700
    %v714 = vpack.c.b16 %v703, %v702
    %v715 = vpack.c.b16 %v705, %v704
    %v716 = vpack.c.b16 %v707, %v706
    %v717 = vpack.c.b16 %v709, %v708
    %726 = vmatprep.subr.bf16.mxu0 0
    %727 = vmatpush1.bf16.msra.mxu0 %v710
    %728 = vmatprep.subr.bf16.mxu0 0
    %729 = vmatpush1.bf16.msra.mxu0 %v711
    %730 = vmatprep.subr.bf16.mxu0 0
    %731 = vmatpush1.bf16.msra.mxu0 %v712
    %732 = vmatprep.subr.bf16.mxu0 0
    %733 = vmatpush1.bf16.msra.mxu0 %v713
    %734 = vmatprep.subr.bf16.mxu0 0
    %735 = vmatpush1.bf16.msra.mxu0 %v714
    %736 = vmatprep.subr.bf16.mxu0 0
    %737 = vmatpush1.bf16.msra.mxu0 %v715
    %738 = vmatprep.subr.bf16.mxu0 0
    %739 = vmatpush1.bf16.msra.mxu0 %v716
    %740 = vmatprep.subr.bf16.mxu0 0
    %741 = vmatpush1.bf16.msra.mxu0 %v717
    %742 = vmatprep.subr.bf16.mxu0 0
    %743 = vmatpush1.bf16.msra.mxu0 0
    %744 = vmatprep.subr.bf16.mxu0 0
    %745 = vmatpush1.bf16.msra.mxu0 0
    %746 = vmatprep.subr.bf16.mxu0 0
    %747 = vmatpush1.bf16.msra.mxu0 0
    %748 = vmatprep.subr.bf16.mxu0 0
    %749 = vmatpush1.bf16.msra.mxu0 0
    %750 = vmatprep.subr.bf16.mxu0 0
    %751 = vmatpush1.bf16.msra.mxu0 0
    %752 = vmatprep.subr.bf16.mxu0 0
    %753 = vmatpush1.bf16.msra.mxu0 0
    %754 = vmatprep.subr.bf16.mxu0 0
    %755 = vmatpush1.bf16.msra.mxu0 0
    %756 = vmatprep.subr.bf16.mxu0 0
    %757 = vmatpush1.bf16.msra.mxu0 0
    %758 = vmatprep.mubr.bf16.mxu0 0
    %759 = vmatmul.mubr.bf16.gmra.mrb[0].mxu0 %v344
    %v760 = vpop.f32.mrb[0].mxu0
    %v761 = vadd.f32 %v677, %v760
    %v762 = vpop.f32.mrb[0].mxu0
    %v763 = vpop.f32.mrb[0].mxu0
    %v764 = vadd.f32 %v677, %v763
    %v765 = vpop.f32.mrb[0].mxu0
    %766 = vmatprep.mubr.bf16.mxu0 0
    %767 = vmatmul.mubr.bf16.gmra.mrb[0].mxu0 %v345
    %v768 = vpop.f32.mrb[0].mxu0
    %v769 = vadd.f32 %v677, %v768
    %v770 = vpop.f32.mrb[0].mxu0
    %v771 = vpop.f32.mrb[0].mxu0
    %v772 = vadd.f32 %v677, %v771
    %v773 = vpop.f32.mrb[0].mxu0
    %774 = vmatprep.mubr.bf16.mxu0 0
    %775 = vmatmul.mubr.bf16.gmra.mrb[0].mxu0 %v346
    %v776 = vpop.f32.mrb[0].mxu0
    %v777 = vadd.f32 %v677, %v776
    %v778 = vpop.f32.mrb[0].mxu0
    %v779 = vpop.f32.mrb[0].mxu0
    %v780 = vadd.f32 %v677, %v779
    %v781 = vpop.f32.mrb[0].mxu0
    %782 = vdwg.mxu0
    %v799 = vunpack.c.l.b16 %v269
    %v800 = vunpack.c.l.b16 %v270
    %v801 = vunpack.c.l.b16 %v271
    %v802 = vunpack.c.l.b16 %v272
    %v803 = vunpack.c.l.b16 %v273
    %v804 = vunpack.c.l.b16 %v274
    %v805 = vunpack.c.l.b16 %v275
    %v806 = vunpack.c.l.b16 %v276
    %v807 = vunpack.c.l.b16 %v277
    %v808 = vunpack.c.l.b16 %v278
    %v809 = vunpack.c.l.b16 %v279
    %v810 = vunpack.c.l.b16 %v280
    %v811 = vunpack.c.l.b16 %v281
    %v812 = vunpack.c.l.b16 %v282
    %v813 = vunpack.c.l.b16 %v283
    %v814 = vunpack.c.l.b16 %v284
    %v815 = vpack.c.b16 %v800, %v799
    %v816 = vpack.c.b16 %v802, %v801
    %v817 = vpack.c.b16 %v804, %v803
    %v818 = vpack.c.b16 %v806, %v805
    %v819 = vpack.c.b16 %v808, %v807
    %v820 = vpack.c.b16 %v810, %v809
    %v821 = vpack.c.b16 %v812, %v811
    %v822 = vpack.c.b16 %v814, %v813
    %831 = vmatprep.subr.bf16.mxu0 0
    %832 = vmatpush1.bf16.msra.mxu0 %v815
    %833 = vmatprep.subr.bf16.mxu0 0
    %834 = vmatpush1.bf16.msra.mxu0 %v816
    %835 = vmatprep.subr.bf16.mxu0 0
    %836 = vmatpush1.bf16.msra.mxu0 %v817
    %837 = vmatprep.subr.bf16.mxu0 0
    %838 = vmatpush1.bf16.msra.mxu0 %v818
    %839 = vmatprep.subr.bf16.mxu0 0
    %840 = vmatpush1.bf16.msra.mxu0 %v819
    %841 = vmatprep.subr.bf16.mxu0 0
    %842 = vmatpush1.bf16.msra.mxu0 %v820
    %843 = vmatprep.subr.bf16.mxu0 0
    %844 = vmatpush1.bf16.msra.mxu0 %v821
    %845 = vmatprep.subr.bf16.mxu0 0
    %846 = vmatpush1.bf16.msra.mxu0 %v822
    %847 = vmatprep.subr.bf16.mxu0 0
    %848 = vmatpush1.bf16.msra.mxu0 0
    %849 = vmatprep.subr.bf16.mxu0 0
    %850 = vmatpush1.bf16.msra.mxu0 0
    %851 = vmatprep.subr.bf16.mxu0 0
    %852 = vmatpush1.bf16.msra.mxu0 0
    %853 = vmatprep.subr.bf16.mxu0 0
    %854 = vmatpush1.bf16.msra.mxu0 0
    %855 = vmatprep.subr.bf16.mxu0 0
    %856 = vmatpush1.bf16.msra.mxu0 0
    %857 = vmatprep.subr.bf16.mxu0 0
    %858 = vmatpush1.bf16.msra.mxu0 0
    %859 = vmatprep.subr.bf16.mxu0 0
    %860 = vmatpush1.bf16.msra.mxu0 0
    %861 = vmatprep.subr.bf16.mxu0 0
    %862 = vmatpush1.bf16.msra.mxu0 0
    %863 = vmatprep.mubr.bf16.mxu0 0
    %864 = vmatmul.mubr.bf16.gmra.mrb[0].mxu0 %v344
    %v865 = vpop.f32.mrb[0].mxu0
    %v866 = vadd.f32 0.0, %v865
    %v867 = vpop.f32.mrb[0].mxu0
    %v868 = vpop.f32.mrb[0].mxu0
    %v869 = vadd.f32 0.0, %v868
    %v870 = vpop.f32.mrb[0].mxu0
    %871 = vmatprep.mubr.bf16.mxu0 0
    %872 = vmatmul.mubr.bf16.gmra.mrb[0].mxu0 %v345
    %v873 = vpop.f32.mrb[0].mxu0
    %v874 = vadd.f32 0.0, %v873
    %v875 = vpop.f32.mrb[0].mxu0
    %v876 = vpop.f32.mrb[0].mxu0
    %v877 = vadd.f32 0.0, %v876
    %v878 = vpop.f32.mrb[0].mxu0
    %879 = vmatprep.mubr.bf16.mxu0 0
    %880 = vmatmul.mubr.bf16.gmra.mrb[0].mxu0 %v346
    %v881 = vpop.f32.mrb[0].mxu0
    %v882 = vadd.f32 0.0, %v881
    %v883 = vpop.f32.mrb[0].mxu0
    %v884 = vpop.f32.mrb[0].mxu0
    %v885 = vadd.f32 0.0, %v884
    %v886 = vpop.f32.mrb[0].mxu0
    %887 = vdwg.mxu0
    %v904 = vunpack.c.l.b16 %v285
    %v905 = vunpack.c.l.b16 %v286
    %v906 = vunpack.c.l.b16 %v287
    %v907 = vunpack.c.l.b16 %v288
    %v908 = vunpack.c.l.b16 %v289
    %v909 = vunpack.c.l.b16 %v290
    %v910 = vunpack.c.l.b16 %v291
    %v911 = vunpack.c.l.b16 %v292
    %v912 = vunpack.c.l.b16 %v293
    %v913 = vunpack.c.l.b16 %v294
    %v914 = vunpack.c.l.b16 %v295
    %v915 = vunpack.c.l.b16 %v296
    %v916 = vunpack.c.l.b16 %v297
    %v917 = vunpack.c.l.b16 %v298
    %v918 = vunpack.c.l.b16 %v299
    %v919 = vunpack.c.l.b16 %v300
    %v920 = vpack.c.b16 %v905, %v904
    %v921 = vpack.c.b16 %v907, %v906
    %v922 = vpack.c.b16 %v909, %v908
    %v923 = vpack.c.b16 %v911, %v910
    %v924 = vpack.c.b16 %v913, %v912
    %v925 = vpack.c.b16 %v915, %v914
    %v926 = vpack.c.b16 %v917, %v916
    %v927 = vpack.c.b16 %v919, %v918
    %936 = vmatprep.subr.bf16.mxu0 0
    %937 = vmatpush1.bf16.msra.mxu0 %v920
    %938 = vmatprep.subr.bf16.mxu0 0
    %939 = vmatpush1.bf16.msra.mxu0 %v921
    %940 = vmatprep.subr.bf16.mxu0 0
    %941 = vmatpush1.bf16.msra.mxu0 %v922
    %942 = vmatprep.subr.bf16.mxu0 0
    %943 = vmatpush1.bf16.msra.mxu0 %v923
    %944 = vmatprep.subr.bf16.mxu0 0
    %945 = vmatpush1.bf16.msra.mxu0 %v924
    %946 = vmatprep.subr.bf16.mxu0 0
    %947 = vmatpush1.bf16.msra.mxu0 %v925
    %948 = vmatprep.subr.bf16.mxu0 0
    %949 = vmatpush1.bf16.msra.mxu0 %v926
    %950 = vmatprep.subr.bf16.mxu0 0
    %951 = vmatpush1.bf16.msra.mxu0 %v927
    %952 = vmatprep.subr.bf16.mxu0 0
    %953 = vmatpush1.bf16.msra.mxu0 0
    %954 = vmatprep.subr.bf16.mxu0 0
    %955 = vmatpush1.bf16.msra.mxu0 0
    %956 = vmatprep.subr.bf16.mxu0 0
    %957 = vmatpush1.bf16.msra.mxu0 0
    %958 = vmatprep.subr.bf16.mxu0 0
    %959 = vmatpush1.bf16.msra.mxu0 0
    %960 = vmatprep.subr.bf16.mxu0 0
    %961 = vmatpush1.bf16.msra.mxu0 0
    %962 = vmatprep.subr.bf16.mxu0 0
    %963 = vmatpush1.bf16.msra.mxu0 0
    %964 = vmatprep.subr.bf16.mxu0 0
    %965 = vmatpush1.bf16.msra.mxu0 0
    %966 = vmatprep.subr.bf16.mxu0 0
    %967 = vmatpush1.bf16.msra.mxu0 0
    %968 = vmatprep.mubr.bf16.mxu0 0
    %969 = vmatmul.mubr.bf16.gmra.mrb[0].mxu0 %v344
    %v970 = vpop.f32.mrb[0].mxu0
    %v971 = vadd.f32 0.0, %v970
    %v972 = vpop.f32.mrb[0].mxu0
    %v973 = vpop.f32.mrb[0].mxu0
    %v974 = vadd.f32 0.0, %v973
    %v975 = vpop.f32.mrb[0].mxu0
    %976 = vmatprep.mubr.bf16.mxu0 0
    %977 = vmatmul.mubr.bf16.gmra.mrb[0].mxu0 %v345
    %v978 = vpop.f32.mrb[0].mxu0
    %v979 = vadd.f32 0.0, %v978
    %v980 = vpop.f32.mrb[0].mxu0
    %v981 = vpop.f32.mrb[0].mxu0
    %v982 = vadd.f32 0.0, %v981
    %v983 = vpop.f32.mrb[0].mxu0
    %984 = vmatprep.mubr.bf16.mxu0 0
    %985 = vmatmul.mubr.bf16.gmra.mrb[0].mxu0 %v346
    %v986 = vpop.f32.mrb[0].mxu0
    %v987 = vadd.f32 0.0, %v986
    %v988 = vpop.f32.mrb[0].mxu0
    %v989 = vpop.f32.mrb[0].mxu0
    %v990 = vadd.f32 0.0, %v989
    %v991 = vpop.f32.mrb[0].mxu0
    %992 = vdwg.mxu0
    %993 = vmatprep.subr.mxu0 0.0
    %994 = vmatpush1.xpose.msra.mxu0 %v652
    %995 = vmatprep.subr.mxu0 0.0
    %996 = vmatpush1.xpose.msra.mxu0 %v655
    %997 = vmatprep.subr.mxu0 0.0
    %998 = vmatpush1.xpose.msra.mxu0 %v660
    %999 = vmatprep.subr.mxu0 0.0
    %1000 = vmatpush1.xpose.msra.mxu0 %v663
    %1001 = vmatprep.subr.mxu0 0.0
    %1002 = vmatpush1.xpose.msra.mxu0 %v668
    %1003 = vmatprep.subr.mxu0 0.0
    %1004 = vmatpush1.xpose.msra.mxu0 %v671
    %1005 = vmatprep.subr.mxu0 0.0
    %1006 = vmatpush1.xpose.msra.mxu0 0.0
    %1007 = vmatprep.subr.mxu0 0.0
    %1008 = vmatpush1.xpose.msra.mxu0 0.0
    %1009 = vmatprep.subr.mxu0 0.0
    %1010 = vmatpush1.xpose.msra.mxu0 0.0
    %1011 = vmatprep.subr.mxu0 0.0
    %1012 = vmatpush1.xpose.msra.mxu0 0.0
    %1013 = vmatprep.subr.mxu0 0.0
    %1014 = vmatpush1.xpose.msra.mxu0 0.0
    %1015 = vmatprep.subr.mxu0 0.0
    %1016 = vmatpush1.xpose.msra.mxu0 0.0
    %1017 = vmatprep.subr.mxu0 0.0
    %1018 = vmatpush1.xpose.msra.mxu0 0.0
    %1019 = vmatprep.subr.mxu0 0.0
    %1020 = vmatpush1.xpose.msra.mxu0 0.0
    %1021 = vmatprep.subr.mxu0 0.0
    %1022 = vmatpush1.xpose.msra.mxu0 0.0
    %1023 = vmatprep.subr.mxu0 0.0
    %1024 = vmatpush1.xpose.msra.mxu0 0.0
    %1025 = vmatprep.subr.mxu0 0.0
    %1026 = vmatpush1.xpose.msra.mxu0 0.0
    %1027 = vmatprep.subr.mxu0 0.0
    %1028 = vmatpush1.xpose.msra.mxu0 0.0
    %1029 = vmatprep.subr.mxu0 0.0
    %1030 = vmatpush1.xpose.msra.mxu0 0.0
    %1031 = vmatprep.subr.mxu0 0.0
    %1032 = vmatpush1.xpose.msra.mxu0 0.0
    %1033 = vmatprep.subr.mxu0 0.0
    %1034 = vmatpush1.xpose.msra.mxu0 0.0
    %1035 = vmatprep.subr.mxu0 0.0
    %1036 = vmatpush1.xpose.msra.mxu0 0.0
    %1037 = vmatprep.subr.mxu0 0.0
    %1038 = vmatpush1.xpose.msra.mxu0 0.0
    %1039 = vmatprep.subr.mxu0 0.0
    %1040 = vmatpush1.xpose.msra.mxu0 0.0
    %1041 = vmatprep.subr.mxu0 0.0
    %1042 = vmatpush1.xpose.msra.mxu0 0.0
    %1043 = vmatprep.subr.mxu0 0.0
    %1044 = vmatpush1.xpose.msra.mxu0 0.0
    %1045 = vmatprep.subr.mxu0 0.0
    %1046 = vmatpush1.xpose.msra.mxu0 0.0
    %1047 = vmatprep.subr.mxu0 0.0
    %1048 = vmatpush1.xpose.msra.mxu0 0.0
    %1049 = vmatprep.subr.mxu0 0.0
    %1050 = vmatpush1.xpose.msra.mxu0 0.0
    %1051 = vmatprep.subr.mxu0 0.0
    %1052 = vmatpush1.xpose.msra.mxu0 0.0
    %1053 = vmatprep.subr.mxu0 0.0
    %1054 = vmatpush1.xpose.msra.mxu0 0.0
    %1055 = vmatprep.subr.mxu0 0.0
    %1056 = vmatpush1.xpose.msra.mxu0 0.0
    %1057 = vmatprep.mubr.f32.mxu0 0.0
    %1058 = vmatmul.mubr.f32.gmra.mrb[0].mxu0 %v434
    %v1059 = vpop.f32.mrb[0].mxu0
    %v1060 = vadd.f32 0.0, %v1059
    %v1061 = vpop.f32.mrb[0].mxu0
    %1062 = vmatprep.mubr.f32.mxu0 0.0
    %1063 = vmatmul.mubr.f32.gmra.mrb[0].mxu0 %v437
    %v1064 = vpop.f32.mrb[0].mxu0
    %v1065 = vadd.f32 0.0, %v1064
    %v1066 = vpop.f32.mrb[0].mxu0
    %1067 = vmatprep.mubr.f32.mxu0 0.0
    %1068 = vmatmul.mubr.f32.gmra.mrb[0].mxu0 %v442
    %v1069 = vpop.f32.mrb[0].mxu0
    %v1070 = vadd.f32 0.0, %v1069
    %v1071 = vpop.f32.mrb[0].mxu0
    %1072 = vmatprep.mubr.f32.mxu0 0.0
    %1073 = vmatmul.mubr.f32.gmra.mrb[0].mxu0 %v445
    %v1074 = vpop.f32.mrb[0].mxu0
    %v1075 = vadd.f32 0.0, %v1074
    %v1076 = vpop.f32.mrb[0].mxu0
    %1077 = vmatprep.mubr.f32.mxu0 0.0
    %1078 = vmatmul.mubr.f32.gmra.mrb[0].mxu0 %v450
    %v1079 = vpop.f32.mrb[0].mxu0
    %v1080 = vadd.f32 0.0, %v1079
    %v1081 = vpop.f32.mrb[0].mxu0
    %1082 = vmatprep.mubr.f32.mxu0 0.0
    %1083 = vmatmul.mubr.f32.gmra.mrb[0].mxu0 %v453
    %v1084 = vpop.f32.mrb[0].mxu0
    %v1085 = vadd.f32 0.0, %v1084
    %v1086 = vpop.f32.mrb[0].mxu0
    %1087 = vdwg.mxu0
    %v1088 = vmul.f32 %v1060, 0.25
    %v1089 = vmul.f32 %v1065, 0.25
    %v1090 = vmul.f32 %v1070, 0.25
    %v1091 = vmul.f32 %v1075, 0.25
    %v1092 = vmul.f32 %v1080, 0.25
    %v1093 = vmul.f32 %v1085, 0.25
    %v1094 = vadd.f32 %v1088, %v97
    %v1095 = vadd.f32 %v1089, %v98
    %v1096 = vadd.f32 %v1090, %v99
    %v1097 = vadd.f32 %v1091, %v100
    %v1098 = vadd.f32 %v1092, %v101
    %v1099 = vadd.f32 %v1093, %v102
    %1100 = vmatprep.subr.mxu0 0.0
    %1101 = vmatpush1.xpose.msra.mxu0 %v761
    %1102 = vmatprep.subr.mxu0 0.0
    %1103 = vmatpush1.xpose.msra.mxu0 %v764
    %1104 = vmatprep.subr.mxu0 0.0
    %1105 = vmatpush1.xpose.msra.mxu0 %v769
    %1106 = vmatprep.subr.mxu0 0.0
    %1107 = vmatpush1.xpose.msra.mxu0 %v772
    %1108 = vmatprep.subr.mxu0 0.0
    %1109 = vmatpush1.xpose.msra.mxu0 %v777
    %1110 = vmatprep.subr.mxu0 0.0
    %1111 = vmatpush1.xpose.msra.mxu0 %v780
    %1112 = vmatprep.subr.mxu0 0.0
    %1113 = vmatpush1.xpose.msra.mxu0 0.0
    %1114 = vmatprep.subr.mxu0 0.0
    %1115 = vmatpush1.xpose.msra.mxu0 0.0
    %1116 = vmatprep.subr.mxu0 0.0
    %1117 = vmatpush1.xpose.msra.mxu0 0.0
    %1118 = vmatprep.subr.mxu0 0.0
    %1119 = vmatpush1.xpose.msra.mxu0 0.0
    %1120 = vmatprep.subr.mxu0 0.0
    %1121 = vmatpush1.xpose.msra.mxu0 0.0
    %1122 = vmatprep.subr.mxu0 0.0
    %1123 = vmatpush1.xpose.msra.mxu0 0.0
    %1124 = vmatprep.subr.mxu0 0.0
    %1125 = vmatpush1.xpose.msra.mxu0 0.0
    %1126 = vmatprep.subr.mxu0 0.0
    %1127 = vmatpush1.xpose.msra.mxu0 0.0
    %1128 = vmatprep.subr.mxu0 0.0
    %1129 = vmatpush1.xpose.msra.mxu0 0.0
    %1130 = vmatprep.subr.mxu0 0.0
    %1131 = vmatpush1.xpose.msra.mxu0 0.0
    %1132 = vmatprep.subr.mxu0 0.0
    %1133 = vmatpush1.xpose.msra.mxu0 0.0
    %1134 = vmatprep.subr.mxu0 0.0
    %1135 = vmatpush1.xpose.msra.mxu0 0.0
    %1136 = vmatprep.subr.mxu0 0.0
    %1137 = vmatpush1.xpose.msra.mxu0 0.0
    %1138 = vmatprep.subr.mxu0 0.0
    %1139 = vmatpush1.xpose.msra.mxu0 0.0
    %1140 = vmatprep.subr.mxu0 0.0
    %1141 = vmatpush1.xpose.msra.mxu0 0.0
    %1142 = vmatprep.subr.mxu0 0.0
    %1143 = vmatpush1.xpose.msra.mxu0 0.0
    %1144 = vmatprep.subr.mxu0 0.0
    %1145 = vmatpush1.xpose.msra.mxu0 0.0
    %1146 = vmatprep.subr.mxu0 0.0
    %1147 = vmatpush1.xpose.msra.mxu0 0.0
    %1148 = vmatprep.subr.mxu0 0.0
    %1149 = vmatpush1.xpose.msra.mxu0 0.0
    %1150 = vmatprep.subr.mxu0 0.0
    %1151 = vmatpush1.xpose.msra.mxu0 0.0
    %1152 = vmatprep.subr.mxu0 0.0
    %1153 = vmatpush1.xpose.msra.mxu0 0.0
    %1154 = vmatprep.subr.mxu0 0.0
    %1155 = vmatpush1.xpose.msra.mxu0 0.0
    %1156 = vmatprep.subr.mxu0 0.0
    %1157 = vmatpush1.xpose.msra.mxu0 0.0
    %1158 = vmatprep.subr.mxu0 0.0
    %1159 = vmatpush1.xpose.msra.mxu0 0.0
    %1160 = vmatprep.subr.mxu0 0.0
    %1161 = vmatpush1.xpose.msra.mxu0 0.0
    %1162 = vmatprep.subr.mxu0 0.0
    %1163 = vmatpush1.xpose.msra.mxu0 0.0
    %1164 = vmatprep.mubr.f32.mxu0 0.0
    %1165 = vmatmul.mubr.f32.gmra.mrb[0].mxu0 %v543
    %v1166 = vpop.f32.mrb[0].mxu0
    %v1167 = vadd.f32 0.0, %v1166
    %v1168 = vpop.f32.mrb[0].mxu0
    %1169 = vmatprep.mubr.f32.mxu0 0.0
    %1170 = vmatmul.mubr.f32.gmra.mrb[0].mxu0 %v546
    %v1171 = vpop.f32.mrb[0].mxu0
    %v1172 = vadd.f32 0.0, %v1171
    %v1173 = vpop.f32.mrb[0].mxu0
    %1174 = vmatprep.mubr.f32.mxu0 0.0
    %1175 = vmatmul.mubr.f32.gmra.mrb[0].mxu0 %v551
    %v1176 = vpop.f32.mrb[0].mxu0
    %v1177 = vadd.f32 0.0, %v1176
    %v1178 = vpop.f32.mrb[0].mxu0
    %1179 = vmatprep.mubr.f32.mxu0 0.0
    %1180 = vmatmul.mubr.f32.gmra.mrb[0].mxu0 %v554
    %v1181 = vpop.f32.mrb[0].mxu0
    %v1182 = vadd.f32 0.0, %v1181
    %v1183 = vpop.f32.mrb[0].mxu0
    %1184 = vmatprep.mubr.f32.mxu0 0.0
    %1185 = vmatmul.mubr.f32.gmra.mrb[0].mxu0 %v559
    %v1186 = vpop.f32.mrb[0].mxu0
    %v1187 = vadd.f32 0.0, %v1186
    %v1188 = vpop.f32.mrb[0].mxu0
    %1189 = vmatprep.mubr.f32.mxu0 0.0
    %1190 = vmatmul.mubr.f32.gmra.mrb[0].mxu0 %v562
    %v1191 = vpop.f32.mrb[0].mxu0
    %v1192 = vadd.f32 0.0, %v1191
    %v1193 = vpop.f32.mrb[0].mxu0
    %1194 = vdwg.mxu0
    %v1195 = vmul.f32 %v1167, 0.25
    %v1196 = vmul.f32 %v1172, 0.25
    %v1197 = vmul.f32 %v1177, 0.25
    %v1198 = vmul.f32 %v1182, 0.25
    %v1199 = vmul.f32 %v1187, 0.25
    %v1200 = vmul.f32 %v1192, 0.25
    %v1201 = vadd.f32 %v1195, %v97
    %v1202 = vadd.f32 %v1196, %v98
    %v1203 = vadd.f32 %v1197, %v99
    %v1204 = vadd.f32 %v1198, %v100
    %v1205 = vadd.f32 %v1199, %v101
    %v1206 = vadd.f32 %v1200, %v102
    %vm1207 = vcmask 392192
    %v1208 = vsel %vm1207, %v1094, -inf
    %1209 = vmax.xlane.f32.xlu0 %v1208
    %v1210 = vpop.xlane.xlu0 %1209
    %v1211 = vsel %vm1207, %v1095, -inf
    %1212 = vmax.xlane.f32.xlu0 %v1211
    %v1213 = vpop.xlane.xlu0 %1212
    %v1214 = vsel %vm1207, %v1096, -inf
    %1215 = vmax.xlane.f32.xlu0 %v1214
    %v1216 = vpop.xlane.xlu0 %1215
    %v1217 = vsel %vm1207, %v1097, -inf
    %1218 = vmax.xlane.f32.xlu0 %v1217
    %v1219 = vpop.xlane.xlu0 %1218
    %v1220 = vsel %vm1207, %v1098, -inf
    %1221 = vmax.xlane.f32.xlu0 %v1220
    %v1222 = vpop.xlane.xlu0 %1221
    %v1223 = vsel %vm1207, %v1099, -inf
    %1224 = vmax.xlane.f32.xlu0 %v1223
    %v1225 = vpop.xlane.xlu0 %1224
    %v1226 = vsub.f32 %v1094, %v1210
    %v1227 = vsub.f32 %v1095, %v1213
    %v1228 = vsub.f32 %v1096, %v1216
    %v1229 = vsub.f32 %v1097, %v1219
    %v1230 = vsub.f32 %v1098, %v1222
    %v1231 = vsub.f32 %v1099, %v1225
    %v1232 = vmul.f32 %v1226, 1.442695
    %v1233 = vpow.pop %v1232
    %v1234 = vmul.f32 %v1227, 1.442695
    %v1235 = vpow.pop %v1234
    %v1236 = vmul.f32 %v1228, 1.442695
    %v1237 = vpow.pop %v1236
    %v1238 = vmul.f32 %v1229, 1.442695
    %v1239 = vpow.pop %v1238
    %v1240 = vmul.f32 %v1230, 1.442695
    %v1241 = vpow.pop %v1240
    %v1242 = vmul.f32 %v1231, 1.442695
    %v1243 = vpow.pop %v1242
    %v1244 = vsel %vm1207, %v1233, 0.0
    %1245 = vadd.xlane.f32.xlu0 %v1244
    %v1246 = vpop.xlane.xlu0 %1245
    %v1247 = vsel %vm1207, %v1235, 0.0
    %1248 = vadd.xlane.f32.xlu0 %v1247
    %v1249 = vpop.xlane.xlu0 %1248
    %v1250 = vsel %vm1207, %v1237, 0.0
    %1251 = vadd.xlane.f32.xlu0 %v1250
    %v1252 = vpop.xlane.xlu0 %1251
    %v1253 = vsel %vm1207, %v1239, 0.0
    %1254 = vadd.xlane.f32.xlu0 %v1253
    %v1255 = vpop.xlane.xlu0 %1254
    %v1256 = vsel %vm1207, %v1241, 0.0
    %1257 = vadd.xlane.f32.xlu0 %v1256
    %v1258 = vpop.xlane.xlu0 %1257
    %v1259 = vsel %vm1207, %v1243, 0.0
    %1260 = vadd.xlane.f32.xlu0 %v1259
    %v1261 = vpop.xlane.xlu0 %1260
    %v1262 = vrcp.pop %v1246
    %v1263 = vrcp.pop %v1249
    %v1264 = vrcp.pop %v1252
    %v1265 = vrcp.pop %v1255
    %v1266 = vrcp.pop %v1258
    %v1267 = vrcp.pop %v1261
    %v1268 = vmul.f32 %v1233, %v1262
    %v1269 = vmul.f32 %v1235, %v1263
    %v1270 = vmul.f32 %v1237, %v1264
    %v1271 = vmul.f32 %v1239, %v1265
    %v1272 = vmul.f32 %v1241, %v1266
    %v1273 = vmul.f32 %v1243, %v1267
    %v1274 = vsel %vm1207, %v1201, -inf
    %1275 = vmax.xlane.f32.xlu0 %v1274
    %v1276 = vpop.xlane.xlu0 %1275
    %v1277 = vsel %vm1207, %v1202, -inf
    %1278 = vmax.xlane.f32.xlu0 %v1277
    %v1279 = vpop.xlane.xlu0 %1278
    %v1280 = vsel %vm1207, %v1203, -inf
    %1281 = vmax.xlane.f32.xlu0 %v1280
    %v1282 = vpop.xlane.xlu0 %1281
    %v1283 = vsel %vm1207, %v1204, -inf
    %1284 = vmax.xlane.f32.xlu0 %v1283
    %v1285 = vpop.xlane.xlu0 %1284
    %v1286 = vsel %vm1207, %v1205, -inf
    %1287 = vmax.xlane.f32.xlu0 %v1286
    %v1288 = vpop.xlane.xlu0 %1287
    %v1289 = vsel %vm1207, %v1206, -inf
    %1290 = vmax.xlane.f32.xlu0 %v1289
    %v1291 = vpop.xlane.xlu0 %1290
    %v1292 = vsub.f32 %v1201, %v1276
    %v1293 = vsub.f32 %v1202, %v1279
    %v1294 = vsub.f32 %v1203, %v1282
    %v1295 = vsub.f32 %v1204, %v1285
    %v1296 = vsub.f32 %v1205, %v1288
    %v1297 = vsub.f32 %v1206, %v1291
    %v1298 = vmul.f32 %v1292, 1.442695
    %v1299 = vpow.pop %v1298
    %v1300 = vmul.f32 %v1293, 1.442695
    %v1301 = vpow.pop %v1300
    %v1302 = vmul.f32 %v1294, 1.442695
    %v1303 = vpow.pop %v1302
    %v1304 = vmul.f32 %v1295, 1.442695
    %v1305 = vpow.pop %v1304
    %v1306 = vmul.f32 %v1296, 1.442695
    %v1307 = vpow.pop %v1306
    %v1308 = vmul.f32 %v1297, 1.442695
    %v1309 = vpow.pop %v1308
    %v1310 = vsel %vm1207, %v1299, 0.0
    %1311 = vadd.xlane.f32.xlu0 %v1310
    %v1312 = vpop.xlane.xlu0 %1311
    %v1313 = vsel %vm1207, %v1301, 0.0
    %1314 = vadd.xlane.f32.xlu0 %v1313
    %v1315 = vpop.xlane.xlu0 %1314
    %v1316 = vsel %vm1207, %v1303, 0.0
    %1317 = vadd.xlane.f32.xlu0 %v1316
    %v1318 = vpop.xlane.xlu0 %1317
    %v1319 = vsel %vm1207, %v1305, 0.0
    %1320 = vadd.xlane.f32.xlu0 %v1319
    %v1321 = vpop.xlane.xlu0 %1320
    %v1322 = vsel %vm1207, %v1307, 0.0
    %1323 = vadd.xlane.f32.xlu0 %v1322
    %v1324 = vpop.xlane.xlu0 %1323
    %v1325 = vsel %vm1207, %v1309, 0.0
    %1326 = vadd.xlane.f32.xlu0 %v1325
    %v1327 = vpop.xlane.xlu0 %1326
    %v1328 = vrcp.pop %v1312
    %v1329 = vrcp.pop %v1315
    %v1330 = vrcp.pop %v1318
    %v1331 = vrcp.pop %v1321
    %v1332 = vrcp.pop %v1324
    %v1333 = vrcp.pop %v1327
    %v1334 = vmul.f32 %v1299, %v1328
    %v1335 = vmul.f32 %v1301, %v1329
    %v1336 = vmul.f32 %v1303, %v1330
    %v1337 = vmul.f32 %v1305, %v1331
    %v1338 = vmul.f32 %v1307, %v1332
    %v1339 = vmul.f32 %v1309, %v1333
    %v1341 = vsel %vm1207, %v1334, 0
    %v1344 = vsel %vm1207, %v1335, 0
    %v1347 = vsel %vm1207, %v1336, 0
    %v1350 = vsel %vm1207, %v1337, 0
    %v1353 = vsel %vm1207, %v1338, 0
    %v1356 = vsel %vm1207, %v1339, 0
    %1358 = vmatprep.subr.mxu0 0.0
    %1359 = vmatpush1.msra.mxu0 %v971
    %1360 = vmatprep.subr.mxu0 0.0
    %1361 = vmatpush1.msra.mxu0 %v974
    %1362 = vmatprep.subr.mxu0 0.0
    %1363 = vmatpush1.msra.mxu0 %v979
    %1364 = vmatprep.subr.mxu0 0.0
    %1365 = vmatpush1.msra.mxu0 %v982
    %1366 = vmatprep.subr.mxu0 0.0
    %1367 = vmatpush1.msra.mxu0 %v987
    %1368 = vmatprep.subr.mxu0 0.0
    %1369 = vmatpush1.msra.mxu0 %v990
    %1370 = vmatprep.subr.mxu0 0.0
    %1371 = vmatpush1.msra.mxu0 0.0
    %1372 = vmatprep.subr.mxu0 0.0
    %1373 = vmatpush1.msra.mxu0 0.0
    %1374 = vmatprep.subr.mxu0 0.0
    %1375 = vmatpush1.msra.mxu0 0.0
    %1376 = vmatprep.subr.mxu0 0.0
    %1377 = vmatpush1.msra.mxu0 0.0
    %1378 = vmatprep.subr.mxu0 0.0
    %1379 = vmatpush1.msra.mxu0 0.0
    %1380 = vmatprep.subr.mxu0 0.0
    %1381 = vmatpush1.msra.mxu0 0.0
    %1382 = vmatprep.subr.mxu0 0.0
    %1383 = vmatpush1.msra.mxu0 0.0
    %1384 = vmatprep.subr.mxu0 0.0
    %1385 = vmatpush1.msra.mxu0 0.0
    %1386 = vmatprep.subr.mxu0 0.0
    %1387 = vmatpush1.msra.mxu0 0.0
    %1388 = vmatprep.subr.mxu0 0.0
    %1389 = vmatpush1.msra.mxu0 0.0
    %1390 = vmatprep.subr.mxu0 0.0
    %1391 = vmatpush1.msra.mxu0 0.0
    %1392 = vmatprep.subr.mxu0 0.0
    %1393 = vmatpush1.msra.mxu0 0.0
    %1394 = vmatprep.subr.mxu0 0.0
    %1395 = vmatpush1.msra.mxu0 0.0
    %1396 = vmatprep.subr.mxu0 0.0
    %1397 = vmatpush1.msra.mxu0 0.0
    %1398 = vmatprep.subr.mxu0 0.0
    %1399 = vmatpush1.msra.mxu0 0.0
    %1400 = vmatprep.subr.mxu0 0.0
    %1401 = vmatpush1.msra.mxu0 0.0
    %1402 = vmatprep.subr.mxu0 0.0
    %1403 = vmatpush1.msra.mxu0 0.0
    %1404 = vmatprep.subr.mxu0 0.0
    %1405 = vmatpush1.msra.mxu0 0.0
    %1406 = vmatprep.subr.mxu0 0.0
    %1407 = vmatpush1.msra.mxu0 0.0
    %1408 = vmatprep.subr.mxu0 0.0
    %1409 = vmatpush1.msra.mxu0 0.0
    %1410 = vmatprep.subr.mxu0 0.0
    %1411 = vmatpush1.msra.mxu0 0.0
    %1412 = vmatprep.subr.mxu0 0.0
    %1413 = vmatpush1.msra.mxu0 0.0
    %1414 = vmatprep.subr.mxu0 0.0
    %1415 = vmatpush1.msra.mxu0 0.0
    %1416 = vmatprep.subr.mxu0 0.0
    %1417 = vmatpush1.msra.mxu0 0.0
    %1418 = vmatprep.subr.mxu0 0.0
    %1419 = vmatpush1.msra.mxu0 0.0
    %1420 = vmatprep.subr.mxu0 0.0
    %1421 = vmatpush1.msra.mxu0 0.0
    %1422 = vmatprep.mubr.f32.mxu0 0.0
    %1423 = vmatmul.mubr.f32.gmra.mrb[0].mxu0 %v1341
    %v1424 = vpop.f32.mrb[0].mxu0
    %v1425 = vadd.f32 0.0, %v1424
    %v1426 = vpop.f32.mrb[0].mxu0
    %1427 = vmatprep.mubr.f32.mxu0 0.0
    %1428 = vmatmul.mubr.f32.gmra.mrb[0].mxu0 %v1344
    %v1429 = vpop.f32.mrb[0].mxu0
    %v1430 = vadd.f32 0.0, %v1429
    %v1431 = vpop.f32.mrb[0].mxu0
    %1432 = vmatprep.mubr.f32.mxu0 0.0
    %1433 = vmatmul.mubr.f32.gmra.mrb[0].mxu0 %v1347
    %v1434 = vpop.f32.mrb[0].mxu0
    %v1435 = vadd.f32 0.0, %v1434
    %v1436 = vpop.f32.mrb[0].mxu0
    %1437 = vmatprep.mubr.f32.mxu0 0.0
    %1438 = vmatmul.mubr.f32.gmra.mrb[0].mxu0 %v1350
    %v1439 = vpop.f32.mrb[0].mxu0
    %v1440 = vadd.f32 0.0, %v1439
    %v1441 = vpop.f32.mrb[0].mxu0
    %1442 = vmatprep.mubr.f32.mxu0 0.0
    %1443 = vmatmul.mubr.f32.gmra.mrb[0].mxu0 %v1353
    %v1444 = vpop.f32.mrb[0].mxu0
    %v1445 = vadd.f32 0.0, %v1444
    %v1446 = vpop.f32.mrb[0].mxu0
    %1447 = vmatprep.mubr.f32.mxu0 0.0
    %1448 = vmatmul.mubr.f32.gmra.mrb[0].mxu0 %v1356
    %v1449 = vpop.f32.mrb[0].mxu0
    %v1450 = vadd.f32 0.0, %v1449
    %v1451 = vpop.f32.mrb[0].mxu0
    %1452 = vdwg.mxu0
    %v1454 = vsel %vm1207, %v1268, 0
    %v1457 = vsel %vm1207, %v1269, 0
    %v1460 = vsel %vm1207, %v1270, 0
    %v1463 = vsel %vm1207, %v1271, 0
    %v1466 = vsel %vm1207, %v1272, 0
    %v1469 = vsel %vm1207, %v1273, 0
    %1471 = vmatprep.subr.mxu0 0.0
    %1472 = vmatpush1.msra.mxu0 %v866
    %1473 = vmatprep.subr.mxu0 0.0
    %1474 = vmatpush1.msra.mxu0 %v869
    %1475 = vmatprep.subr.mxu0 0.0
    %1476 = vmatpush1.msra.mxu0 %v874
    %1477 = vmatprep.subr.mxu0 0.0
    %1478 = vmatpush1.msra.mxu0 %v877
    %1479 = vmatprep.subr.mxu0 0.0
    %1480 = vmatpush1.msra.mxu0 %v882
    %1481 = vmatprep.subr.mxu0 0.0
    %1482 = vmatpush1.msra.mxu0 %v885
    %1483 = vmatprep.subr.mxu0 0.0
    %1484 = vmatpush1.msra.mxu0 0.0
    %1485 = vmatprep.subr.mxu0 0.0
    %1486 = vmatpush1.msra.mxu0 0.0
    %1487 = vmatprep.subr.mxu0 0.0
    %1488 = vmatpush1.msra.mxu0 0.0
    %1489 = vmatprep.subr.mxu0 0.0
    %1490 = vmatpush1.msra.mxu0 0.0
    %1491 = vmatprep.subr.mxu0 0.0
    %1492 = vmatpush1.msra.mxu0 0.0
    %1493 = vmatprep.subr.mxu0 0.0
    %1494 = vmatpush1.msra.mxu0 0.0
    %1495 = vmatprep.subr.mxu0 0.0
    %1496 = vmatpush1.msra.mxu0 0.0
    %1497 = vmatprep.subr.mxu0 0.0
    %1498 = vmatpush1.msra.mxu0 0.0
    %1499 = vmatprep.subr.mxu0 0.0
    %1500 = vmatpush1.msra.mxu0 0.0
    %1501 = vmatprep.subr.mxu0 0.0
    %1502 = vmatpush1.msra.mxu0 0.0
    %1503 = vmatprep.subr.mxu0 0.0
    %1504 = vmatpush1.msra.mxu0 0.0
    %1505 = vmatprep.subr.mxu0 0.0
    %1506 = vmatpush1.msra.mxu0 0.0
    %1507 = vmatprep.subr.mxu0 0.0
    %1508 = vmatpush1.msra.mxu0 0.0
    %1509 = vmatprep.subr.mxu0 0.0
    %1510 = vmatpush1.msra.mxu0 0.0
    %1511 = vmatprep.subr.mxu0 0.0
    %1512 = vmatpush1.msra.mxu0 0.0
    %1513 = vmatprep.subr.mxu0 0.0
    %1514 = vmatpush1.msra.mxu0 0.0
    %1515 = vmatprep.subr.mxu0 0.0
    %1516 = vmatpush1.msra.mxu0 0.0
    %1517 = vmatprep.subr.mxu0 0.0
    %1518 = vmatpush1.msra.mxu0 0.0
    %1519 = vmatprep.subr.mxu0 0.0
    %1520 = vmatpush1.msra.mxu0 0.0
    %1521 = vmatprep.subr.mxu0 0.0
    %1522 = vmatpush1.msra.mxu0 0.0
    %1523 = vmatprep.subr.mxu0 0.0
    %1524 = vmatpush1.msra.mxu0 0.0
    %1525 = vmatprep.subr.mxu0 0.0
    %1526 = vmatpush1.msra.mxu0 0.0
    %1527 = vmatprep.subr.mxu0 0.0
    %1528 = vmatpush1.msra.mxu0 0.0
    %1529 = vmatprep.subr.mxu0 0.0
    %1530 = vmatpush1.msra.mxu0 0.0
    %1531 = vmatprep.subr.mxu0 0.0
    %1532 = vmatpush1.msra.mxu0 0.0
    %1533 = vmatprep.subr.mxu0 0.0
    %1534 = vmatpush1.msra.mxu0 0.0
    %1535 = vmatprep.mubr.f32.mxu0 0.0
    %1536 = vmatmul.mubr.f32.gmra.mrb[0].mxu0 %v1454
    %v1537 = vpop.f32.mrb[0].mxu0
    %v1538 = vadd.f32 %v1425, %v1537
    %v1539 = vpop.f32.mrb[0].mxu0
    %1540 = vmatprep.mubr.f32.mxu0 0.0
    %1541 = vmatmul.mubr.f32.gmra.mrb[0].mxu0 %v1457
    %v1542 = vpop.f32.mrb[0].mxu0
    %v1543 = vadd.f32 %v1430, %v1542
    %v1544 = vpop.f32.mrb[0].mxu0
    %1545 = vmatprep.mubr.f32.mxu0 0.0
    %1546 = vmatmul.mubr.f32.gmra.mrb[0].mxu0 %v1460
    %v1547 = vpop.f32.mrb[0].mxu0
    %v1548 = vadd.f32 %v1435, %v1547
    %v1549 = vpop.f32.mrb[0].mxu0
    %1550 = vmatprep.mubr.f32.mxu0 0.0
    %1551 = vmatmul.mubr.f32.gmra.mrb[0].mxu0 %v1463
    %v1552 = vpop.f32.mrb[0].mxu0
    %v1553 = vadd.f32 %v1440, %v1552
    %v1554 = vpop.f32.mrb[0].mxu0
    %1555 = vmatprep.mubr.f32.mxu0 0.0
    %1556 = vmatmul.mubr.f32.gmra.mrb[0].mxu0 %v1466
    %v1557 = vpop.f32.mrb[0].mxu0
    %v1558 = vadd.f32 %v1445, %v1557
    %v1559 = vpop.f32.mrb[0].mxu0
    %1560 = vmatprep.mubr.f32.mxu0 0.0
    %1561 = vmatmul.mubr.f32.gmra.mrb[0].mxu0 %v1469
    %v1562 = vpop.f32.mrb[0].mxu0
    %v1563 = vadd.f32 %v1450, %v1562
    %v1564 = vpop.f32.mrb[0].mxu0
    %1565 = vdwg.mxu0
    %v1566 = vlaneseq
    %v1567 = vshrl.u32 %v1566, 7
    %v1568 = vsub.s32 0, %v1567
    %v1569 = vrot.slane %v337, %v1568
    %v1570 = vadd.f32 %v1538, %v1569
    %v1571 = vadd.f32 %v1543, %v1569
    %v1572 = vadd.f32 %v1548, %v1569
    %v1573 = vadd.f32 %v1553, %v1569
    %v1574 = vadd.f32 %v1558, %v1569
    %v1575 = vadd.f32 %v1563, %v1569
    %v1576 = vadd.f32 %v1570, %v199
    %v1577 = vadd.f32 %v1571, %v200
    %v1578 = vadd.f32 %v1572, %v201
    %v1579 = vadd.f32 %v1573, %v202
    %v1580 = vadd.f32 %v1574, %v203
    %v1581 = vadd.f32 %v1575, %v204
    %1582 = vadd.xlane.f32.xlu0 %v1576
    %v1583 = vpop.xlane.xlu0 %1582
    %1584 = vadd.xlane.f32.xlu0 %v1577
    %v1585 = vpop.xlane.xlu0 %1584
    %1586 = vadd.xlane.f32.xlu0 %v1578
    %v1587 = vpop.xlane.xlu0 %1586
    %1588 = vadd.xlane.f32.xlu0 %v1579
    %v1589 = vpop.xlane.xlu0 %1588
    %1590 = vadd.xlane.f32.xlu0 %v1580
    %v1591 = vpop.xlane.xlu0 %1590
    %1592 = vadd.xlane.f32.xlu0 %v1581
    %v1593 = vpop.xlane.xlu0 %1592
    %v1594 = vmul.f32 %v1576, %v1576
    %v1595 = vmul.f32 %v1577, %v1577
    %v1596 = vmul.f32 %v1578, %v1578
    %v1597 = vmul.f32 %v1579, %v1579
    %v1598 = vmul.f32 %v1580, %v1580
    %v1599 = vmul.f32 %v1581, %v1581
    %1600 = vadd.xlane.f32.xlu0 %v1594
    %v1601 = vpop.xlane.xlu0 %1600
    %1602 = vadd.xlane.f32.xlu0 %v1595
    %v1603 = vpop.xlane.xlu0 %1602
    %1604 = vadd.xlane.f32.xlu0 %v1596
    %v1605 = vpop.xlane.xlu0 %1604
    %1606 = vadd.xlane.f32.xlu0 %v1597
    %v1607 = vpop.xlane.xlu0 %1606
    %1608 = vadd.xlane.f32.xlu0 %v1598
    %v1609 = vpop.xlane.xlu0 %1608
    %1610 = vadd.xlane.f32.xlu0 %v1599
    %v1611 = vpop.xlane.xlu0 %1610
    %v1612 = vmul.f32 %v1583, 0.03125
    %v1613 = vmul.f32 %v1585, 0.03125
    %v1614 = vmul.f32 %v1587, 0.03125
    %v1615 = vmul.f32 %v1589, 0.03125
    %v1616 = vmul.f32 %v1591, 0.03125
    %v1617 = vmul.f32 %v1593, 0.03125
    %v1618 = vmul.f32 %v1601, 0.03125
    %v1619 = vmul.f32 %v1603, 0.03125
    %v1620 = vmul.f32 %v1605, 0.03125
    %v1621 = vmul.f32 %v1607, 0.03125
    %v1622 = vmul.f32 %v1609, 0.03125
    %v1623 = vmul.f32 %v1611, 0.03125
    %v1624 = vmul.f32 %v1612, %v1612
    %v1625 = vmul.f32 %v1613, %v1613
    %v1626 = vmul.f32 %v1614, %v1614
    %v1627 = vmul.f32 %v1615, %v1615
    %v1628 = vmul.f32 %v1616, %v1616
    %v1629 = vmul.f32 %v1617, %v1617
    %v1630 = vsub.f32 %v1618, %v1624
    %v1631 = vsub.f32 %v1619, %v1625
    %v1632 = vsub.f32 %v1620, %v1626
    %v1633 = vsub.f32 %v1621, %v1627
    %v1634 = vsub.f32 %v1622, %v1628
    %v1635 = vsub.f32 %v1623, %v1629
    %v1636 = vsub.f32 %v1576, %v1612
    %v1637 = vsub.f32 %v1577, %v1613
    %v1638 = vsub.f32 %v1578, %v1614
    %v1639 = vsub.f32 %v1579, %v1615
    %v1640 = vsub.f32 %v1580, %v1616
    %v1641 = vsub.f32 %v1581, %v1617
    %v1642 = vadd.f32 %v1630, 1e-12
    %v1643 = vadd.f32 %v1631, 1e-12
    %v1644 = vadd.f32 %v1632, 1e-12
    %v1645 = vadd.f32 %v1633, 1e-12
    %v1646 = vadd.f32 %v1634, 1e-12
    %v1647 = vadd.f32 %v1635, 1e-12
    %v1648 = vrsqrt.pop %v1642
    %v1649 = vrsqrt.pop %v1643
    %v1650 = vrsqrt.pop %v1644
    %v1651 = vrsqrt.pop %v1645
    %v1652 = vrsqrt.pop %v1646
    %v1653 = vrsqrt.pop %v1647
    %v1654 = vmul.f32 %v1636, %v1648
    %v1655 = vmul.f32 %v1637, %v1649
    %v1656 = vmul.f32 %v1638, %v1650
    %v1657 = vmul.f32 %v1639, %v1651
    %v1658 = vmul.f32 %v1640, %v1652
    %v1659 = vmul.f32 %v1641, %v1653
    %v1660 = vlaneseq
    %v1661 = vshrl.u32 %v1660, 7
    %v1662 = vsub.s32 0, %v1661
    %v1663 = vrot.slane %v340, %v1662
    %v1664 = vmul.f32 %v1654, %v1663
    %v1665 = vmul.f32 %v1655, %v1663
    %v1666 = vmul.f32 %v1656, %v1663
    %v1667 = vmul.f32 %v1657, %v1663
    %v1668 = vmul.f32 %v1658, %v1663
    %v1669 = vmul.f32 %v1659, %v1663
    %v1670 = vlaneseq
    %v1671 = vshrl.u32 %v1670, 7
    %v1672 = vsub.s32 0, %v1671
    %v1673 = vrot.slane %v341, %v1672
    %v1674 = vadd.f32 %v1664, %v1673
    %v1675 = vadd.f32 %v1665, %v1673
    %v1676 = vadd.f32 %v1666, %v1673
    %v1677 = vadd.f32 %v1667, %v1673
    %v1678 = vadd.f32 %v1668, %v1673
    %v1679 = vadd.f32 %v1669, %v1673
    %v1680 = vpack.c.bf16 %v1675, %v1674
    %v1681 = vpack.c.bf16 %v1677, %v1676
    %v1682 = vpack.c.bf16 %v1679, %v1678
    %v1683 = vlaneseq
    %v1684 = vshrl.u32 %v1683, 7
    %v1685 = vsub.s32 0, %v1684
    %v1686 = vrot.slane %v338, %v1685
    %v1703 = vunpack.c.l.b16 %v301
    %v1704 = vunpack.c.l.b16 %v302
    %v1705 = vunpack.c.l.b16 %v303
    %v1706 = vunpack.c.l.b16 %v304
    %v1707 = vunpack.c.l.b16 %v305
    %v1708 = vunpack.c.l.b16 %v306
    %v1709 = vunpack.c.l.b16 %v307
    %v1710 = vunpack.c.l.b16 %v308
    %v1711 = vunpack.c.l.b16 %v309
    %v1712 = vunpack.c.l.b16 %v310
    %v1713 = vunpack.c.l.b16 %v311
    %v1714 = vunpack.c.l.b16 %v312
    %v1715 = vunpack.c.l.b16 %v313
    %v1716 = vunpack.c.l.b16 %v314
    %v1717 = vunpack.c.l.b16 %v315
    %v1718 = vunpack.c.l.b16 %v316
    %v1719 = vpack.c.b16 %v1704, %v1703
    %v1720 = vpack.c.b16 %v1706, %v1705
    %v1721 = vpack.c.b16 %v1708, %v1707
    %v1722 = vpack.c.b16 %v1710, %v1709
    %v1723 = vpack.c.b16 %v1712, %v1711
    %v1724 = vpack.c.b16 %v1714, %v1713
    %v1725 = vpack.c.b16 %v1716, %v1715
    %v1726 = vpack.c.b16 %v1718, %v1717
    %1735 = vmatprep.subr.bf16.mxu0 0
    %1736 = vmatpush1.bf16.msra.mxu0 %v1719
    %1737 = vmatprep.subr.bf16.mxu0 0
    %1738 = vmatpush1.bf16.msra.mxu0 %v1720
    %1739 = vmatprep.subr.bf16.mxu0 0
    %1740 = vmatpush1.bf16.msra.mxu0 %v1721
    %1741 = vmatprep.subr.bf16.mxu0 0
    %1742 = vmatpush1.bf16.msra.mxu0 %v1722
    %1743 = vmatprep.subr.bf16.mxu0 0
    %1744 = vmatpush1.bf16.msra.mxu0 %v1723
    %1745 = vmatprep.subr.bf16.mxu0 0
    %1746 = vmatpush1.bf16.msra.mxu0 %v1724
    %1747 = vmatprep.subr.bf16.mxu0 0
    %1748 = vmatpush1.bf16.msra.mxu0 %v1725
    %1749 = vmatprep.subr.bf16.mxu0 0
    %1750 = vmatpush1.bf16.msra.mxu0 %v1726
    %1751 = vmatprep.subr.bf16.mxu0 0
    %1752 = vmatpush1.bf16.msra.mxu0 0
    %1753 = vmatprep.subr.bf16.mxu0 0
    %1754 = vmatpush1.bf16.msra.mxu0 0
    %1755 = vmatprep.subr.bf16.mxu0 0
    %1756 = vmatpush1.bf16.msra.mxu0 0
    %1757 = vmatprep.subr.bf16.mxu0 0
    %1758 = vmatpush1.bf16.msra.mxu0 0
    %1759 = vmatprep.subr.bf16.mxu0 0
    %1760 = vmatpush1.bf16.msra.mxu0 0
    %1761 = vmatprep.subr.bf16.mxu0 0
    %1762 = vmatpush1.bf16.msra.mxu0 0
    %1763 = vmatprep.subr.bf16.mxu0 0
    %1764 = vmatpush1.bf16.msra.mxu0 0
    %1765 = vmatprep.subr.bf16.mxu0 0
    %1766 = vmatpush1.bf16.msra.mxu0 0
    %1767 = vmatprep.mubr.bf16.mxu0 0
    %1768 = vmatmul.mubr.bf16.gmra.mrb[0].mxu0 %v1680
    %v1769 = vpop.f32.mrb[0].mxu0
    %v1770 = vadd.f32 %v1686, %v1769
    %v1771 = vpop.f32.mrb[0].mxu0
    %v1772 = vpop.f32.mrb[0].mxu0
    %v1773 = vadd.f32 %v1686, %v1772
    %v1774 = vpop.f32.mrb[0].mxu0
    %1775 = vmatprep.mubr.bf16.mxu0 0
    %1776 = vmatmul.mubr.bf16.gmra.mrb[0].mxu0 %v1681
    %v1777 = vpop.f32.mrb[0].mxu0
    %v1778 = vadd.f32 %v1686, %v1777
    %v1779 = vpop.f32.mrb[0].mxu0
    %v1780 = vpop.f32.mrb[0].mxu0
    %v1781 = vadd.f32 %v1686, %v1780
    %v1782 = vpop.f32.mrb[0].mxu0
    %1783 = vmatprep.mubr.bf16.mxu0 0
    %1784 = vmatmul.mubr.bf16.gmra.mrb[0].mxu0 %v1682
    %v1785 = vpop.f32.mrb[0].mxu0
    %v1786 = vadd.f32 %v1686, %v1785
    %v1787 = vpop.f32.mrb[0].mxu0
    %v1788 = vpop.f32.mrb[0].mxu0
    %v1789 = vadd.f32 %v1686, %v1788
    %v1790 = vpop.f32.mrb[0].mxu0
    %1791 = vdwg.mxu0
    %v1792 = vmul.f32 %v1770, %v1770
    %v1793 = vmul.f32 %v1773, %v1773
    %v1794 = vmul.f32 %v1778, %v1778
    %v1795 = vmul.f32 %v1781, %v1781
    %v1796 = vmul.f32 %v1786, %v1786
    %v1797 = vmul.f32 %v1789, %v1789
    %v1798 = vmul.f32 %v1770, %v1792
    %v1799 = vmul.f32 %v1773, %v1793
    %v1800 = vmul.f32 %v1778, %v1794
    %v1801 = vmul.f32 %v1781, %v1795
    %v1802 = vmul.f32 %v1786, %v1796
    %v1803 = vmul.f32 %v1789, %v1797
    %v1804 = vmul.f32 %v1798, 0.044715
    %v1805 = vmul.f32 %v1799, 0.044715
    %v1806 = vmul.f32 %v1800, 0.044715
    %v1807 = vmul.f32 %v1801, 0.044715
    %v1808 = vmul.f32 %v1802, 0.044715
    %v1809 = vmul.f32 %v1803, 0.044715
    %v1810 = vadd.f32 %v1770, %v1804
    %v1811 = vadd.f32 %v1773, %v1805
    %v1812 = vadd.f32 %v1778, %v1806
    %v1813 = vadd.f32 %v1781, %v1807
    %v1814 = vadd.f32 %v1786, %v1808
    %v1815 = vadd.f32 %v1789, %v1809
    %v1816 = vmul.f32 %v1810, 0.7978846
    %v1817 = vmul.f32 %v1811, 0.7978846
    %v1818 = vmul.f32 %v1812, 0.7978846
    %v1819 = vmul.f32 %v1813, 0.7978846
    %v1820 = vmul.f32 %v1814, 0.7978846
    %v1821 = vmul.f32 %v1815, 0.7978846
    %v1822 = vtanh.pop %v1816
    %v1823 = vtanh.pop %v1817
    %v1824 = vtanh.pop %v1818
    %v1825 = vtanh.pop %v1819
    %v1826 = vtanh.pop %v1820
    %v1827 = vtanh.pop %v1821
    %v1828 = vadd.f32 %v1822, 1.0
    %v1829 = vadd.f32 %v1823, 1.0
    %v1830 = vadd.f32 %v1824, 1.0
    %v1831 = vadd.f32 %v1825, 1.0
    %v1832 = vadd.f32 %v1826, 1.0
    %v1833 = vadd.f32 %v1827, 1.0
    %v1834 = vmul.f32 %v1828, 0.5
    %v1835 = vmul.f32 %v1829, 0.5
    %v1836 = vmul.f32 %v1830, 0.5
    %v1837 = vmul.f32 %v1831, 0.5
    %v1838 = vmul.f32 %v1832, 0.5
    %v1839 = vmul.f32 %v1833, 0.5
    %v1840 = vmul.f32 %v1770, %v1834
    %v1841 = vmul.f32 %v1773, %v1835
    %v1842 = vmul.f32 %v1778, %v1836
    %v1843 = vmul.f32 %v1781, %v1837
    %v1844 = vmul.f32 %v1786, %v1838
    %v1845 = vmul.f32 %v1789, %v1839
    %v1846 = vpack.c.bf16 %v1841, %v1840
    %v1847 = vpack.c.bf16 %v1843, %v1842
    %v1848 = vpack.c.bf16 %v1845, %v1844
    %v1849 = vlaneseq
    %v1850 = vshrl.u32 %v1849, 7
    %v1851 = vsub.s32 0, %v1850
    %v1852 = vrot.slane %v339, %v1851
    %v1869 = vunpack.c.l.b16 %v317
    %v1870 = vunpack.c.l.b16 %v318
    %v1871 = vunpack.c.l.b16 %v319
    %v1872 = vunpack.c.l.b16 %v320
    %v1873 = vunpack.c.l.b16 %v321
    %v1874 = vunpack.c.l.b16 %v322
    %v1875 = vunpack.c.l.b16 %v323
    %v1876 = vunpack.c.l.b16 %v324
    %v1877 = vunpack.c.l.b16 %v325
    %v1878 = vunpack.c.l.b16 %v326
    %v1879 = vunpack.c.l.b16 %v327
    %v1880 = vunpack.c.l.b16 %v328
    %v1881 = vunpack.c.l.b16 %v329
    %v1882 = vunpack.c.l.b16 %v330
    %v1883 = vunpack.c.l.b16 %v331
    %v1884 = vunpack.c.l.b16 %v332
    %v1885 = vpack.c.b16 %v1870, %v1869
    %v1886 = vpack.c.b16 %v1872, %v1871
    %v1887 = vpack.c.b16 %v1874, %v1873
    %v1888 = vpack.c.b16 %v1876, %v1875
    %v1889 = vpack.c.b16 %v1878, %v1877
    %v1890 = vpack.c.b16 %v1880, %v1879
    %v1891 = vpack.c.b16 %v1882, %v1881
    %v1892 = vpack.c.b16 %v1884, %v1883
    %1901 = vmatprep.subr.bf16.mxu0 0
    %1902 = vmatpush1.bf16.msra.mxu0 %v1885
    %1903 = vmatprep.subr.bf16.mxu0 0
    %1904 = vmatpush1.bf16.msra.mxu0 %v1886
    %1905 = vmatprep.subr.bf16.mxu0 0
    %1906 = vmatpush1.bf16.msra.mxu0 %v1887
    %1907 = vmatprep.subr.bf16.mxu0 0
    %1908 = vmatpush1.bf16.msra.mxu0 %v1888
    %1909 = vmatprep.subr.bf16.mxu0 0
    %1910 = vmatpush1.bf16.msra.mxu0 %v1889
    %1911 = vmatprep.subr.bf16.mxu0 0
    %1912 = vmatpush1.bf16.msra.mxu0 %v1890
    %1913 = vmatprep.subr.bf16.mxu0 0
    %1914 = vmatpush1.bf16.msra.mxu0 %v1891
    %1915 = vmatprep.subr.bf16.mxu0 0
    %1916 = vmatpush1.bf16.msra.mxu0 %v1892
    %1917 = vmatprep.subr.bf16.mxu0 0
    %1918 = vmatpush1.bf16.msra.mxu0 0
    %1919 = vmatprep.subr.bf16.mxu0 0
    %1920 = vmatpush1.bf16.msra.mxu0 0
    %1921 = vmatprep.subr.bf16.mxu0 0
    %1922 = vmatpush1.bf16.msra.mxu0 0
    %1923 = vmatprep.subr.bf16.mxu0 0
    %1924 = vmatpush1.bf16.msra.mxu0 0
    %1925 = vmatprep.subr.bf16.mxu0 0
    %1926 = vmatpush1.bf16.msra.mxu0 0
    %1927 = vmatprep.subr.bf16.mxu0 0
    %1928 = vmatpush1.bf16.msra.mxu0 0
    %1929 = vmatprep.subr.bf16.mxu0 0
    %1930 = vmatpush1.bf16.msra.mxu0 0
    %1931 = vmatprep.subr.bf16.mxu0 0
    %1932 = vmatpush1.bf16.msra.mxu0 0
    %1933 = vmatprep.mubr.bf16.mxu0 0
    %1934 = vmatmul.mubr.bf16.gmra.mrb[0].mxu0 %v1846
    %v1935 = vpop.f32.mrb[0].mxu0
    %v1936 = vadd.f32 %v1852, %v1935
    %v1937 = vpop.f32.mrb[0].mxu0
    %v1938 = vpop.f32.mrb[0].mxu0
    %v1939 = vadd.f32 %v1852, %v1938
    %v1940 = vpop.f32.mrb[0].mxu0
    %1941 = vmatprep.mubr.bf16.mxu0 0
    %1942 = vmatmul.mubr.bf16.gmra.mrb[0].mxu0 %v1847
    %v1943 = vpop.f32.mrb[0].mxu0
    %v1944 = vadd.f32 %v1852, %v1943
    %v1945 = vpop.f32.mrb[0].mxu0
    %v1946 = vpop.f32.mrb[0].mxu0
    %v1947 = vadd.f32 %v1852, %v1946
    %v1948 = vpop.f32.mrb[0].mxu0
    %1949 = vmatprep.mubr.bf16.mxu0 0
    %1950 = vmatmul.mubr.bf16.gmra.mrb[0].mxu0 %v1848
    %v1951 = vpop.f32.mrb[0].mxu0
    %v1952 = vadd.f32 %v1852, %v1951
    %v1953 = vpop.f32.mrb[0].mxu0
    %v1954 = vpop.f32.mrb[0].mxu0
    %v1955 = vadd.f32 %v1852, %v1954
    %v1956 = vpop.f32.mrb[0].mxu0
    %1957 = vdwg.mxu0
    %v1958 = vadd.f32 %v1936, %v1674
    %v1959 = vadd.f32 %v1939, %v1675
    %v1960 = vadd.f32 %v1944, %v1676
    %v1961 = vadd.f32 %v1947, %v1677
    %v1962 = vadd.f32 %v1952, %v1678
    %v1963 = vadd.f32 %v1955, %v1679
    %1964 = vadd.xlane.f32.xlu0 %v1958
    %v1965 = vpop.xlane.xlu0 %1964
    %1966 = vadd.xlane.f32.xlu0 %v1959
    %v1967 = vpop.xlane.xlu0 %1966
    %1968 = vadd.xlane.f32.xlu0 %v1960
    %v1969 = vpop.xlane.xlu0 %1968
    %1970 = vadd.xlane.f32.xlu0 %v1961
    %v1971 = vpop.xlane.xlu0 %1970
    %1972 = vadd.xlane.f32.xlu0 %v1962
    %v1973 = vpop.xlane.xlu0 %1972
    %1974 = vadd.xlane.f32.xlu0 %v1963
    %v1975 = vpop.xlane.xlu0 %1974
    %v1976 = vmul.f32 %v1958, %v1958
    %v1977 = vmul.f32 %v1959, %v1959
    %v1978 = vmul.f32 %v1960, %v1960
    %v1979 = vmul.f32 %v1961, %v1961
    %v1980 = vmul.f32 %v1962, %v1962
    %v1981 = vmul.f32 %v1963, %v1963
    %1982 = vadd.xlane.f32.xlu0 %v1976
    %v1983 = vpop.xlane.xlu0 %1982
    %1984 = vadd.xlane.f32.xlu0 %v1977
    %v1985 = vpop.xlane.xlu0 %1984
    %1986 = vadd.xlane.f32.xlu0 %v1978
    %v1987 = vpop.xlane.xlu0 %1986
    %1988 = vadd.xlane.f32.xlu0 %v1979
    %v1989 = vpop.xlane.xlu0 %1988
    %1990 = vadd.xlane.f32.xlu0 %v1980
    %v1991 = vpop.xlane.xlu0 %1990
    %1992 = vadd.xlane.f32.xlu0 %v1981
    %v1993 = vpop.xlane.xlu0 %1992
    %v1994 = vmul.f32 %v1965, 0.03125
    %v1995 = vmul.f32 %v1967, 0.03125
    %v1996 = vmul.f32 %v1969, 0.03125
    %v1997 = vmul.f32 %v1971, 0.03125
    %v1998 = vmul.f32 %v1973, 0.03125
    %v1999 = vmul.f32 %v1975, 0.03125
    %v2000 = vmul.f32 %v1983, 0.03125
    %v2001 = vmul.f32 %v1985, 0.03125
    %v2002 = vmul.f32 %v1987, 0.03125
    %v2003 = vmul.f32 %v1989, 0.03125
    %v2004 = vmul.f32 %v1991, 0.03125
    %v2005 = vmul.f32 %v1993, 0.03125
    %v2006 = vmul.f32 %v1994, %v1994
    %v2007 = vmul.f32 %v1995, %v1995
    %v2008 = vmul.f32 %v1996, %v1996
    %v2009 = vmul.f32 %v1997, %v1997
    %v2010 = vmul.f32 %v1998, %v1998
    %v2011 = vmul.f32 %v1999, %v1999
    %v2012 = vsub.f32 %v2000, %v2006
    %v2013 = vsub.f32 %v2001, %v2007
    %v2014 = vsub.f32 %v2002, %v2008
    %v2015 = vsub.f32 %v2003, %v2009
    %v2016 = vsub.f32 %v2004, %v2010
    %v2017 = vsub.f32 %v2005, %v2011
    %v2018 = vsub.f32 %v1958, %v1994
    %v2019 = vsub.f32 %v1959, %v1995
    %v2020 = vsub.f32 %v1960, %v1996
    %v2021 = vsub.f32 %v1961, %v1997
    %v2022 = vsub.f32 %v1962, %v1998
    %v2023 = vsub.f32 %v1963, %v1999
    %v2024 = vadd.f32 %v2012, 1e-12
    %v2025 = vadd.f32 %v2013, 1e-12
    %v2026 = vadd.f32 %v2014, 1e-12
    %v2027 = vadd.f32 %v2015, 1e-12
    %v2028 = vadd.f32 %v2016, 1e-12
    %v2029 = vadd.f32 %v2017, 1e-12
    %v2030 = vrsqrt.pop %v2024
    %v2031 = vrsqrt.pop %v2025
    %v2032 = vrsqrt.pop %v2026
    %v2033 = vrsqrt.pop %v2027
    %v2034 = vrsqrt.pop %v2028
    %v2035 = vrsqrt.pop %v2029
    %v2036 = vmul.f32 %v2018, %v2030
    %v2037 = vmul.f32 %v2019, %v2031
    %v2038 = vmul.f32 %v2020, %v2032
    %v2039 = vmul.f32 %v2021, %v2033
    %v2040 = vmul.f32 %v2022, %v2034
    %v2041 = vmul.f32 %v2023, %v2035
    %v2042 = vlaneseq
    %v2043 = vshrl.u32 %v2042, 7
    %v2044 = vsub.s32 0, %v2043
    %v2045 = vrot.slane %v342, %v2044
    %v2046 = vmul.f32 %v2036, %v2045
    %v2047 = vmul.f32 %v2037, %v2045
    %v2048 = vmul.f32 %v2038, %v2045
    %v2049 = vmul.f32 %v2039, %v2045
    %v2050 = vmul.f32 %v2040, %v2045
    %v2051 = vmul.f32 %v2041, %v2045
    %v2052 = vlaneseq
    %v2053 = vshrl.u32 %v2052, 7
    %v2054 = vsub.s32 0, %v2053
    %v2055 = vrot.slane %v343, %v2054
    %v2056 = vadd.f32 %v2046, %v2055
    %v2057 = vadd.f32 %v2047, %v2055
    %v2058 = vadd.f32 %v2048, %v2055
    %v2059 = vadd.f32 %v2049, %v2055
    %v2060 = vadd.f32 %v2050, %v2055
    %v2061 = vadd.f32 %v2051, %v2055
    %s2062 = scalar_lea.vmem [#allocation8], 512
    %v2063 = vld [vmem:[%s2062] sm:$0xf]
    %v2064 = vld [vmem:[%s2062 + $0x4] sm:$0xf]
    %v2065 = vld [vmem:[%s2062 + $0x8] sm:$0xf]
    %v2066 = vld [vmem:[%s2062 + $0xc] sm:$0xf]
    %v2067 = vld [vmem:[%s2062 + $0x10] sm:$0xf]
    %v2068 = vld [vmem:[%s2062 + $0x14] sm:$0xf]
    %v2069 = vld [vmem:[%s2062 + $0x18] sm:$0xf]
    %v2070 = vld [vmem:[%s2062 + $0x1c] sm:$0xf]
    %v2071 = vld [vmem:[%s2062 + $0x20] sm:$0xf]
    %v2072 = vld [vmem:[%s2062 + $0x24] sm:$0xf]
    %v2073 = vld [vmem:[%s2062 + $0x28] sm:$0xf]
    %v2074 = vld [vmem:[%s2062 + $0x2c] sm:$0xf]
    %v2075 = vld [vmem:[%s2062 + $0x30] sm:$0xf]
    %v2076 = vld [vmem:[%s2062 + $0x34] sm:$0xf]
    %v2077 = vld [vmem:[%s2062 + $0x38] sm:$0xf]
    %v2078 = vld [vmem:[%s2062 + $0x3c] sm:$0xf]
    %v2079 = vld [vmem:[%s2062 + $0x40] sm:$0xf]
    %v2080 = vld [vmem:[%s2062 + $0x44] sm:$0xf]
    %v2081 = vld [vmem:[%s2062 + $0x48] sm:$0xf]
    %v2082 = vld [vmem:[%s2062 + $0x4c] sm:$0xf]
    %v2083 = vld [vmem:[%s2062 + $0x50] sm:$0xf]
    %v2084 = vld [vmem:[%s2062 + $0x54] sm:$0xf]
    %v2085 = vld [vmem:[%s2062 + $0x58] sm:$0xf]
    %v2086 = vld [vmem:[%s2062 + $0x5c] sm:$0xf]
    %v2087 = vld [vmem:[%s2062 + $0x60] sm:$0xf]
    %v2088 = vld [vmem:[%s2062 + $0x64] sm:$0xf]
    %v2089 = vld [vmem:[%s2062 + $0x68] sm:$0xf]
    %v2090 = vld [vmem:[%s2062 + $0x6c] sm:$0xf]
    %v2091 = vld [vmem:[%s2062 + $0x70] sm:$0xf]
    %v2092 = vld [vmem:[%s2062 + $0x74] sm:$0xf]
    %v2093 = vld [vmem:[%s2062 + $0x78] sm:$0xf]
    %v2094 = vld [vmem:[%s2062 + $0x7c] sm:$0xf]
    %v2095 = vld [vmem:[%s2062 + $0x80] sm:$0xf]
    %v2096 = vld [vmem:[%s2062 + $0x84] sm:$0xf]
    %v2097 = vld [vmem:[%s2062 + $0x88] sm:$0xf]
    %v2098 = vld [vmem:[%s2062 + $0x8c] sm:$0xf]
    %v2099 = vld [vmem:[%s2062 + $0x90] sm:$0xf]
    %v2100 = vld [vmem:[%s2062 + $0x94] sm:$0xf]
    %v2101 = vld [vmem:[%s2062 + $0x98] sm:$0xf]
    %v2102 = vld [vmem:[%s2062 + $0x9c] sm:$0xf]
    %v2103 = vld [vmem:[%s2062 + $0xa0] sm:$0xf]
    %v2104 = vld [vmem:[%s2062 + $0xa4] sm:$0xf]
    %v2105 = vld [vmem:[%s2062 + $0xa8] sm:$0xf]
    %v2106 = vld [vmem:[%s2062 + $0xac] sm:$0xf]
    %v2107 = vld [vmem:[%s2062 + $0xb0] sm:$0xf]
    %v2108 = vld [vmem:[%s2062 + $0xb4] sm:$0xf]
    %v2109 = vld [vmem:[%s2062 + $0xb8] sm:$0xf]
    %v2110 = vld [vmem:[%s2062 + $0xbc] sm:$0xf]
    %v2111 = vld [vmem:[%s2062 + $0xc0] sm:$0xf]
    %v2112 = vld [vmem:[%s2062 + $0xc4] sm:$0xf]
    %v2113 = vld [vmem:[%s2062 + $0xc8] sm:$0xf]
    %v2114 = vld [vmem:[%s2062 + $0xcc] sm:$0xf]
    %v2115 = vld [vmem:[%s2062 + $0xd0] sm:$0xf]
    %v2116 = vld [vmem:[%s2062 + $0xd4] sm:$0xf]
    %v2117 = vld [vmem:[%s2062 + $0xd8] sm:$0xf]
    %v2118 = vld [vmem:[%s2062 + $0xdc] sm:$0xf]
    %v2119 = vld [vmem:[%s2062 + $0xe0] sm:$0xf]
    %v2120 = vld [vmem:[%s2062 + $0xe4] sm:$0xf]
    %v2121 = vld [vmem:[%s2062 + $0xe8] sm:$0xf]
    %v2122 = vld [vmem:[%s2062 + $0xec] sm:$0xf]
    %v2123 = vld [vmem:[%s2062 + $0xf0] sm:$0xf]
    %v2124 = vld [vmem:[%s2062 + $0xf4] sm:$0xf]
    %v2125 = vld [vmem:[%s2062 + $0xf8] sm:$0xf]
    %v2126 = vld [vmem:[%s2062 + $0xfc] sm:$0xf]
    %v2127 = vld [vmem:[%s2062 + $0x100] sm:$0xf]
    %v2128 = vld [vmem:[%s2062 + $0x104] sm:$0xf]
    %v2129 = vld [vmem:[%s2062 + $0x108] sm:$0xf]
    %v2130 = vld [vmem:[%s2062 + $0x10c] sm:$0xf]
    %v2131 = vld [vmem:[%s2062 + $0x110] sm:$0xf]
    %v2132 = vld [vmem:[%s2062 + $0x114] sm:$0xf]
    %v2133 = vld [vmem:[%s2062 + $0x118] sm:$0xf]
    %v2134 = vld [vmem:[%s2062 + $0x11c] sm:$0xf]
    %v2135 = vld [vmem:[%s2062 + $0x120] sm:$0xf]
    %v2136 = vld [vmem:[%s2062 + $0x124] sm:$0xf]
    %v2137 = vld [vmem:[%s2062 + $0x128] sm:$0xf]
    %v2138 = vld [vmem:[%s2062 + $0x12c] sm:$0xf]
    %v2139 = vld [vmem:[%s2062 + $0x130] sm:$0xf]
    %v2140 = vld [vmem:[%s2062 + $0x134] sm:$0xf]
    %v2141 = vld [vmem:[%s2062 + $0x138] sm:$0xf]
    %v2142 = vld [vmem:[%s2062 + $0x13c] sm:$0xf]
    %v2143 = vld [vmem:[%s2062 + $0x140] sm:$0xf]
    %v2144 = vld [vmem:[%s2062 + $0x144] sm:$0xf]
    %v2145 = vld [vmem:[%s2062 + $0x148] sm:$0xf]
    %v2146 = vld [vmem:[%s2062 + $0x14c] sm:$0xf]
    %v2147 = vld [vmem:[%s2062 + $0x150] sm:$0xf]
    %v2148 = vld [vmem:[%s2062 + $0x154] sm:$0xf]
    %v2149 = vld [vmem:[%s2062 + $0x158] sm:$0xf]
    %v2150 = vld [vmem:[%s2062 + $0x15c] sm:$0xf]
    %v2151 = vld [vmem:[%s2062 + $0x160] sm:$0xf]
    %v2152 = vld [vmem:[%s2062 + $0x164] sm:$0xf]
    %v2153 = vld [vmem:[%s2062 + $0x168] sm:$0xf]
    %v2154 = vld [vmem:[%s2062 + $0x16c] sm:$0xf]
    %v2155 = vld [vmem:[%s2062 + $0x170] sm:$0xf]
    %v2156 = vld [vmem:[%s2062 + $0x174] sm:$0xf]
    %v2157 = vld [vmem:[%s2062 + $0x178] sm:$0xf]
    %v2158 = vld [vmem:[%s2062 + $0x17c] sm:$0xf]
    %v2159 = vld [vmem:[%s2062 + $0x180] sm:$0xf]
    %v2160 = vld [vmem:[%s2062 + $0x184] sm:$0xf]
    %v2161 = vld [vmem:[%s2062 + $0x188] sm:$0xf]
    %v2162 = vld [vmem:[%s2062 + $0x18c] sm:$0xf]
    %v2163 = vld [vmem:[%s2062 + $0x190] sm:$0xf]
    %v2164 = vld [vmem:[%s2062 + $0x194] sm:$0xf]
    %v2165 = vld [vmem:[%s2062 + $0x198] sm:$0xf]
    %v2166 = vld [vmem:[%s2062 + $0x19c] sm:$0xf]
    %v2167 = vld [vmem:[%s2062 + $0x1a0] sm:$0xf]
    %v2168 = vld [vmem:[%s2062 + $0x1a4] sm:$0xf]
    %v2169 = vld [vmem:[%s2062 + $0x1a8] sm:$0xf]
    %v2170 = vld [vmem:[%s2062 + $0x1ac] sm:$0xf]
    %v2171 = vld [vmem:[%s2062 + $0x1b0] sm:$0xf]
    %v2172 = vld [vmem:[%s2062 + $0x1b4] sm:$0xf]
    %v2173 = vld [vmem:[%s2062 + $0x1b8] sm:$0xf]
    %v2174 = vld [vmem:[%s2062 + $0x1bc] sm:$0xf]
    %v2175 = vld [vmem:[%s2062 + $0x1c0] sm:$0xf]
    %v2176 = vld [vmem:[%s2062 + $0x1c4] sm:$0xf]
    %v2177 = vld [vmem:[%s2062 + $0x1c8] sm:$0xf]
    %v2178 = vld [vmem:[%s2062 + $0x1cc] sm:$0xf]
    %v2179 = vld [vmem:[%s2062 + $0x1d0] sm:$0xf]
    %v2180 = vld [vmem:[%s2062 + $0x1d4] sm:$0xf]
    %v2181 = vld [vmem:[%s2062 + $0x1d8] sm:$0xf]
    %v2182 = vld [vmem:[%s2062 + $0x1dc] sm:$0xf]
    %v2183 = vld [vmem:[%s2062 + $0x1e0] sm:$0xf]
    %v2184 = vld [vmem:[%s2062 + $0x1e4] sm:$0xf]
    %v2185 = vld [vmem:[%s2062 + $0x1e8] sm:$0xf]
    %v2186 = vld [vmem:[%s2062 + $0x1ec] sm:$0xf]
    %v2187 = vld [vmem:[%s2062 + $0x1f0] sm:$0xf]
    %v2188 = vld [vmem:[%s2062 + $0x1f4] sm:$0xf]
    %v2189 = vld [vmem:[%s2062 + $0x1f8] sm:$0xf]
    %v2190 = vld [vmem:[%s2062 + $0x1fc] sm:$0xf]
    %s2191 = scalar_lea.vmem [#allocation10], 16
    %v2192 = vld [vmem:[%s2191] sm:$0x1]
    %v2193 = vld [vmem:[%s2191 + $0x1] sm:$0x1]
    %v2194 = vld [vmem:[%s2191 + $0x2] sm:$0x1]
    %v2195 = vld [vmem:[%s2191 + $0x3] sm:$0x1]
    %v2196 = vld [vmem:[%s2191 + $0x4] sm:$0x1]
    %v2197 = vld [vmem:[%s2191 + $0x5] sm:$0x1]
    %v2198 = vld [vmem:[%s2191 + $0x6] sm:$0x1]
    %v2199 = vld [vmem:[%s2191 + $0x7] sm:$0x1]
    %v2200 = vld [vmem:[%s2191 + $0x8] sm:$0x1]
    %v2201 = vld [vmem:[%s2191 + $0x9] sm:$0x1]
    %v2202 = vld [vmem:[%s2191 + $0xa] sm:$0x1]
    %v2203 = vpack.c.bf16 %v2057, %v2056
    %v2204 = vpack.c.bf16 %v2059, %v2058
    %v2205 = vpack.c.bf16 %v2061, %v2060
    %v2206 = vlaneseq
    %v2207 = vshrl.u32 %v2206, 7
    %v2208 = vsub.s32 0, %v2207
    %v2209 = vrot.slane %v2192, %v2208
    %v2226 = vunpack.c.l.b16 %v2063
    %v2227 = vunpack.c.l.b16 %v2064
    %v2228 = vunpack.c.l.b16 %v2065
    %v2229 = vunpack.c.l.b16 %v2066
    %v2230 = vunpack.c.l.b16 %v2067
    %v2231 = vunpack.c.l.b16 %v2068
    %v2232 = vunpack.c.l.b16 %v2069
    %v2233 = vunpack.c.l.b16 %v2070
    %v2234 = vunpack.c.l.b16 %v2071
    %v2235 = vunpack.c.l.b16 %v2072
    %v2236 = vunpack.c.l.b16 %v2073
    %v2237 = vunpack.c.l.b16 %v2074
    %v2238 = vunpack.c.l.b16 %v2075
    %v2239 = vunpack.c.l.b16 %v2076
    %v2240 = vunpack.c.l.b16 %v2077
    %v2241 = vunpack.c.l.b16 %v2078
    %v2242 = vpack.c.b16 %v2227, %v2226
    %v2243 = vpack.c.b16 %v2229, %v2228
    %v2244 = vpack.c.b16 %v2231, %v2230
    %v2245 = vpack.c.b16 %v2233, %v2232
    %v2246 = vpack.c.b16 %v2235, %v2234
    %v2247 = vpack.c.b16 %v2237, %v2236
    %v2248 = vpack.c.b16 %v2239, %v2238
    %v2249 = vpack.c.b16 %v2241, %v2240
    %2258 = vmatprep.subr.bf16.mxu0 0
    %2259 = vmatpush1.bf16.msra.mxu0 %v2242
    %2260 = vmatprep.subr.bf16.mxu0 0
    %2261 = vmatpush1.bf16.msra.mxu0 %v2243
    %2262 = vmatprep.subr.bf16.mxu0 0
    %2263 = vmatpush1.bf16.msra.mxu0 %v2244
    %2264 = vmatprep.subr.bf16.mxu0 0
    %2265 = vmatpush1.bf16.msra.mxu0 %v2245
    %2266 = vmatprep.subr.bf16.mxu0 0
    %2267 = vmatpush1.bf16.msra.mxu0 %v2246
    %2268 = vmatprep.subr.bf16.mxu0 0
    %2269 = vmatpush1.bf16.msra.mxu0 %v2247
    %2270 = vmatprep.subr.bf16.mxu0 0
    %2271 = vmatpush1.bf16.msra.mxu0 %v2248
    %2272 = vmatprep.subr.bf16.mxu0 0
    %2273 = vmatpush1.bf16.msra.mxu0 %v2249
    %2274 = vmatprep.subr.bf16.mxu0 0
    %2275 = vmatpush1.bf16.msra.mxu0 0
    %2276 = vmatprep.subr.bf16.mxu0 0
    %2277 = vmatpush1.bf16.msra.mxu0 0
    %2278 = vmatprep.subr.bf16.mxu0 0
    %2279 = vmatpush1.bf16.msra.mxu0 0
    %2280 = vmatprep.subr.bf16.mxu0 0
    %2281 = vmatpush1.bf16.msra.mxu0 0
    %2282 = vmatprep.subr.bf16.mxu0 0
    %2283 = vmatpush1.bf16.msra.mxu0 0
    %2284 = vmatprep.subr.bf16.mxu0 0
    %2285 = vmatpush1.bf16.msra.mxu0 0
    %2286 = vmatprep.subr.bf16.mxu0 0
    %2287 = vmatpush1.bf16.msra.mxu0 0
    %2288 = vmatprep.subr.bf16.mxu0 0
    %2289 = vmatpush1.bf16.msra.mxu0 0
    %2290 = vmatprep.mubr.bf16.mxu0 0
    %2291 = vmatmul.mubr.bf16.gmra.mrb[0].mxu0 %v2203
    %v2292 = vpop.f32.mrb[0].mxu0
    %v2293 = vadd.f32 %v2209, %v2292
    %v2294 = vpop.f32.mrb[0].mxu0
    %v2295 = vpop.f32.mrb[0].mxu0
    %v2296 = vadd.f32 %v2209, %v2295
    %v2297 = vpop.f32.mrb[0].mxu0
    %2298 = vmatprep.mubr.bf16.mxu0 0
    %2299 = vmatmul.mubr.bf16.gmra.mrb[0].mxu0 %v2204
    %v2300 = vpop.f32.mrb[0].mxu0
    %v2301 = vadd.f32 %v2209, %v2300
    %v2302 = vpop.f32.mrb[0].mxu0
    %v2303 = vpop.f32.mrb[0].mxu0
    %v2304 = vadd.f32 %v2209, %v2303
    %v2305 = vpop.f32.mrb[0].mxu0
    %2306 = vmatprep.mubr.bf16.mxu0 0
    %2307 = vmatmul.mubr.bf16.gmra.mrb[0].mxu0 %v2205
    %v2308 = vpop.f32.mrb[0].mxu0
    %v2309 = vadd.f32 %v2209, %v2308
    %v2310 = vpop.f32.mrb[0].mxu0
    %v2311 = vpop.f32.mrb[0].mxu0
    %v2312 = vadd.f32 %v2209, %v2311
    %v2313 = vpop.f32.mrb[0].mxu0
    %2314 = vdwg.mxu0
    %v2315 = vlaneseq
    %v2316 = vshrl.u32 %v2315, 7
    %v2317 = vsub.s32 0, %v2316
    %v2318 = vrot.slane %v2193, %v2317
    %v2335 = vunpack.c.l.b16 %v2079
    %v2336 = vunpack.c.l.b16 %v2080
    %v2337 = vunpack.c.l.b16 %v2081
    %v2338 = vunpack.c.l.b16 %v2082
    %v2339 = vunpack.c.l.b16 %v2083
    %v2340 = vunpack.c.l.b16 %v2084
    %v2341 = vunpack.c.l.b16 %v2085
    %v2342 = vunpack.c.l.b16 %v2086
    %v2343 = vunpack.c.l.b16 %v2087
    %v2344 = vunpack.c.l.b16 %v2088
    %v2345 = vunpack.c.l.b16 %v2089
    %v2346 = vunpack.c.l.b16 %v2090
    %v2347 = vunpack.c.l.b16 %v2091
    %v2348 = vunpack.c.l.b16 %v2092
    %v2349 = vunpack.c.l.b16 %v2093
    %v2350 = vunpack.c.l.b16 %v2094
    %v2351 = vpack.c.b16 %v2336, %v2335
    %v2352 = vpack.c.b16 %v2338, %v2337
    %v2353 = vpack.c.b16 %v2340, %v2339
    %v2354 = vpack.c.b16 %v2342, %v2341
    %v2355 = vpack.c.b16 %v2344, %v2343
    %v2356 = vpack.c.b16 %v2346, %v2345
    %v2357 = vpack.c.b16 %v2348, %v2347
    %v2358 = vpack.c.b16 %v2350, %v2349
    %2367 = vmatprep.subr.bf16.mxu0 0
    %2368 = vmatpush1.bf16.msra.mxu0 %v2351
    %2369 = vmatprep.subr.bf16.mxu0 0
    %2370 = vmatpush1.bf16.msra.mxu0 %v2352
    %2371 = vmatprep.subr.bf16.mxu0 0
    %2372 = vmatpush1.bf16.msra.mxu0 %v2353
    %2373 = vmatprep.subr.bf16.mxu0 0
    %2374 = vmatpush1.bf16.msra.mxu0 %v2354
    %2375 = vmatprep.subr.bf16.mxu0 0
    %2376 = vmatpush1.bf16.msra.mxu0 %v2355
    %2377 = vmatprep.subr.bf16.mxu0 0
    %2378 = vmatpush1.bf16.msra.mxu0 %v2356
    %2379 = vmatprep.subr.bf16.mxu0 0
    %2380 = vmatpush1.bf16.msra.mxu0 %v2357
    %2381 = vmatprep.subr.bf16.mxu0 0
    %2382 = vmatpush1.bf16.msra.mxu0 %v2358
    %2383 = vmatprep.subr.bf16.mxu0 0
    %2384 = vmatpush1.bf16.msra.mxu0 0
    %2385 = vmatprep.subr.bf16.mxu0 0
    %2386 = vmatpush1.bf16.msra.mxu0 0
    %2387 = vmatprep.subr.bf16.mxu0 0
    %2388 = vmatpush1.bf16.msra.mxu0 0
    %2389 = vmatprep.subr.bf16.mxu0 0
    %2390 = vmatpush1.bf16.msra.mxu0 0
    %2391 = vmatprep.subr.bf16.mxu0 0
    %2392 = vmatpush1.bf16.msra.mxu0 0
    %2393 = vmatprep.subr.bf16.mxu0 0
    %2394 = vmatpush1.bf16.msra.mxu0 0
    %2395 = vmatprep.subr.bf16.mxu0 0
    %2396 = vmatpush1.bf16.msra.mxu0 0
    %2397 = vmatprep.subr.bf16.mxu0 0
    %2398 = vmatpush1.bf16.msra.mxu0 0
    %2399 = vmatprep.mubr.bf16.mxu0 0
    %2400 = vmatmul.mubr.bf16.gmra.mrb[0].mxu0 %v2203
    %v2401 = vpop.f32.mrb[0].mxu0
    %v2402 = vadd.f32 %v2318, %v2401
    %v2403 = vpop.f32.mrb[0].mxu0
    %v2404 = vpop.f32.mrb[0].mxu0
    %v2405 = vadd.f32 %v2318, %v2404
    %v2406 = vpop.f32.mrb[0].mxu0
    %2407 = vmatprep.mubr.bf16.mxu0 0
    %2408 = vmatmul.mubr.bf16.gmra.mrb[0].mxu0 %v2204
    %v2409 = vpop.f32.mrb[0].mxu0
    %v2410 = vadd.f32 %v2318, %v2409
    %v2411 = vpop.f32.mrb[0].mxu0
    %v2412 = vpop.f32.mrb[0].mxu0
    %v2413 = vadd.f32 %v2318, %v2412
    %v2414 = vpop.f32.mrb[0].mxu0
    %2415 = vmatprep.mubr.bf16.mxu0 0
    %2416 = vmatmul.mubr.bf16.gmra.mrb[0].mxu0 %v2205
    %v2417 = vpop.f32.mrb[0].mxu0
    %v2418 = vadd.f32 %v2318, %v2417
    %v2419 = vpop.f32.mrb[0].mxu0
    %v2420 = vpop.f32.mrb[0].mxu0
    %v2421 = vadd.f32 %v2318, %v2420
    %v2422 = vpop.f32.mrb[0].mxu0
    %2423 = vdwg.mxu0
    %v2424 = vlaneseq
    %v2425 = vshrl.u32 %v2424, 7
    %v2426 = vsub.s32 0, %v2425
    %v2427 = vrot.slane %v2194, %v2426
    %v2444 = vunpack.c.l.b16 %v2095
    %v2445 = vunpack.c.l.b16 %v2096
    %v2446 = vunpack.c.l.b16 %v2097
    %v2447 = vunpack.c.l.b16 %v2098
    %v2448 = vunpack.c.l.b16 %v2099
    %v2449 = vunpack.c.l.b16 %v2100
    %v2450 = vunpack.c.l.b16 %v2101
    %v2451 = vunpack.c.l.b16 %v2102
    %v2452 = vunpack.c.l.b16 %v2103
    %v2453 = vunpack.c.l.b16 %v2104
    %v2454 = vunpack.c.l.b16 %v2105
    %v2455 = vunpack.c.l.b16 %v2106
    %v2456 = vunpack.c.l.b16 %v2107
    %v2457 = vunpack.c.l.b16 %v2108
    %v2458 = vunpack.c.l.b16 %v2109
    %v2459 = vunpack.c.l.b16 %v2110
    %v2460 = vpack.c.b16 %v2445, %v2444
    %v2461 = vpack.c.b16 %v2447, %v2446
    %v2462 = vpack.c.b16 %v2449, %v2448
    %v2463 = vpack.c.b16 %v2451, %v2450
    %v2464 = vpack.c.b16 %v2453, %v2452
    %v2465 = vpack.c.b16 %v2455, %v2454
    %v2466 = vpack.c.b16 %v2457, %v2456
    %v2467 = vpack.c.b16 %v2459, %v2458
    %2476 = vmatprep.subr.bf16.mxu0 0
    %2477 = vmatpush1.bf16.msra.mxu0 %v2460
    %2478 = vmatprep.subr.bf16.mxu0 0
    %2479 = vmatpush1.bf16.msra.mxu0 %v2461
    %2480 = vmatprep.subr.bf16.mxu0 0
    %2481 = vmatpush1.bf16.msra.mxu0 %v2462
    %2482 = vmatprep.subr.bf16.mxu0 0
    %2483 = vmatpush1.bf16.msra.mxu0 %v2463
    %2484 = vmatprep.subr.bf16.mxu0 0
    %2485 = vmatpush1.bf16.msra.mxu0 %v2464
    %2486 = vmatprep.subr.bf16.mxu0 0
    %2487 = vmatpush1.bf16.msra.mxu0 %v2465
    %2488 = vmatprep.subr.bf16.mxu0 0
    %2489 = vmatpush1.bf16.msra.mxu0 %v2466
    %2490 = vmatprep.subr.bf16.mxu0 0
    %2491 = vmatpush1.bf16.msra.mxu0 %v2467
    %2492 = vmatprep.subr.bf16.mxu0 0
    %2493 = vmatpush1.bf16.msra.mxu0 0
    %2494 = vmatprep.subr.bf16.mxu0 0
    %2495 = vmatpush1.bf16.msra.mxu0 0
    %2496 = vmatprep.subr.bf16.mxu0 0
    %2497 = vmatpush1.bf16.msra.mxu0 0
    %2498 = vmatprep.subr.bf16.mxu0 0
    %2499 = vmatpush1.bf16.msra.mxu0 0
    %2500 = vmatprep.subr.bf16.mxu0 0
    %2501 = vmatpush1.bf16.msra.mxu0 0
    %2502 = vmatprep.subr.bf16.mxu0 0
    %2503 = vmatpush1.bf16.msra.mxu0 0
    %2504 = vmatprep.subr.bf16.mxu0 0
    %2505 = vmatpush1.bf16.msra.mxu0 0
    %2506 = vmatprep.subr.bf16.mxu0 0
    %2507 = vmatpush1.bf16.msra.mxu0 0
    %2508 = vmatprep.mubr.bf16.mxu0 0
    %2509 = vmatmul.mubr.bf16.gmra.mrb[0].mxu0 %v2203
    %v2510 = vpop.f32.mrb[0].mxu0
    %v2511 = vadd.f32 %v2427, %v2510
    %v2512 = vpop.f32.mrb[0].mxu0
    %v2513 = vpop.f32.mrb[0].mxu0
    %v2514 = vadd.f32 %v2427, %v2513
    %v2515 = vpop.f32.mrb[0].mxu0
    %2516 = vmatprep.mubr.bf16.mxu0 0
    %2517 = vmatmul.mubr.bf16.gmra.mrb[0].mxu0 %v2204
    %v2518 = vpop.f32.mrb[0].mxu0
    %v2519 = vadd.f32 %v2427, %v2518
    %v2520 = vpop.f32.mrb[0].mxu0
    %v2521 = vpop.f32.mrb[0].mxu0
    %v2522 = vadd.f32 %v2427, %v2521
    %v2523 = vpop.f32.mrb[0].mxu0
    %2524 = vmatprep.mubr.bf16.mxu0 0
    %2525 = vmatmul.mubr.bf16.gmra.mrb[0].mxu0 %v2205
    %v2526 = vpop.f32.mrb[0].mxu0
    %v2527 = vadd.f32 %v2427, %v2526
    %v2528 = vpop.f32.mrb[0].mxu0
    %v2529 = vpop.f32.mrb[0].mxu0
    %v2530 = vadd.f32 %v2427, %v2529
    %v2531 = vpop.f32.mrb[0].mxu0
    %2532 = vdwg.mxu0
    %v2533 = vlaneseq
    %v2534 = vshrl.u32 %v2533, 7
    %v2535 = vsub.s32 0, %v2534
    %v2536 = vrot.slane %v2195, %v2535
    %v2553 = vunpack.c.l.b16 %v2111
    %v2554 = vunpack.c.l.b16 %v2112
    %v2555 = vunpack.c.l.b16 %v2113
    %v2556 = vunpack.c.l.b16 %v2114
    %v2557 = vunpack.c.l.b16 %v2115
    %v2558 = vunpack.c.l.b16 %v2116
    %v2559 = vunpack.c.l.b16 %v2117
    %v2560 = vunpack.c.l.b16 %v2118
    %v2561 = vunpack.c.l.b16 %v2119
    %v2562 = vunpack.c.l.b16 %v2120
    %v2563 = vunpack.c.l.b16 %v2121
    %v2564 = vunpack.c.l.b16 %v2122
    %v2565 = vunpack.c.l.b16 %v2123
    %v2566 = vunpack.c.l.b16 %v2124
    %v2567 = vunpack.c.l.b16 %v2125
    %v2568 = vunpack.c.l.b16 %v2126
    %v2569 = vpack.c.b16 %v2554, %v2553
    %v2570 = vpack.c.b16 %v2556, %v2555
    %v2571 = vpack.c.b16 %v2558, %v2557
    %v2572 = vpack.c.b16 %v2560, %v2559
    %v2573 = vpack.c.b16 %v2562, %v2561
    %v2574 = vpack.c.b16 %v2564, %v2563
    %v2575 = vpack.c.b16 %v2566, %v2565
    %v2576 = vpack.c.b16 %v2568, %v2567
    %2585 = vmatprep.subr.bf16.mxu0 0
    %2586 = vmatpush1.bf16.msra.mxu0 %v2569
    %2587 = vmatprep.subr.bf16.mxu0 0
    %2588 = vmatpush1.bf16.msra.mxu0 %v2570
    %2589 = vmatprep.subr.bf16.mxu0 0
    %2590 = vmatpush1.bf16.msra.mxu0 %v2571
    %2591 = vmatprep.subr.bf16.mxu0 0
    %2592 = vmatpush1.bf16.msra.mxu0 %v2572
    %2593 = vmatprep.subr.bf16.mxu0 0
    %2594 = vmatpush1.bf16.msra.mxu0 %v2573
    %2595 = vmatprep.subr.bf16.mxu0 0
    %2596 = vmatpush1.bf16.msra.mxu0 %v2574
    %2597 = vmatprep.subr.bf16.mxu0 0
    %2598 = vmatpush1.bf16.msra.mxu0 %v2575
    %2599 = vmatprep.subr.bf16.mxu0 0
    %2600 = vmatpush1.bf16.msra.mxu0 %v2576
    %2601 = vmatprep.subr.bf16.mxu0 0
    %2602 = vmatpush1.bf16.msra.mxu0 0
    %2603 = vmatprep.subr.bf16.mxu0 0
    %2604 = vmatpush1.bf16.msra.mxu0 0
    %2605 = vmatprep.subr.bf16.mxu0 0
    %2606 = vmatpush1.bf16.msra.mxu0 0
    %2607 = vmatprep.subr.bf16.mxu0 0
    %2608 = vmatpush1.bf16.msra.mxu0 0
    %2609 = vmatprep.subr.bf16.mxu0 0
    %2610 = vmatpush1.bf16.msra.mxu0 0
    %2611 = vmatprep.subr.bf16.mxu0 0
    %2612 = vmatpush1.bf16.msra.mxu0 0
    %2613 = vmatprep.subr.bf16.mxu0 0
    %2614 = vmatpush1.bf16.msra.mxu0 0
    %2615 = vmatprep.subr.bf16.mxu0 0
    %2616 = vmatpush1.bf16.msra.mxu0 0
    %2617 = vmatprep.mubr.bf16.mxu0 0
    %2618 = vmatmul.mubr.bf16.gmra.mrb[0].mxu0 %v2203
    %v2619 = vpop.f32.mrb[0].mxu0
    %v2620 = vadd.f32 %v2536, %v2619
    %v2621 = vpop.f32.mrb[0].mxu0
    %v2622 = vpop.f32.mrb[0].mxu0
    %v2623 = vadd.f32 %v2536, %v2622
    %v2624 = vpop.f32.mrb[0].mxu0
    %2625 = vmatprep.mubr.bf16.mxu0 0
    %2626 = vmatmul.mubr.bf16.gmra.mrb[0].mxu0 %v2204
    %v2627 = vpop.f32.mrb[0].mxu0
    %v2628 = vadd.f32 %v2536, %v2627
    %v2629 = vpop.f32.mrb[0].mxu0
    %v2630 = vpop.f32.mrb[0].mxu0
    %v2631 = vadd.f32 %v2536, %v2630
    %v2632 = vpop.f32.mrb[0].mxu0
    %2633 = vmatprep.mubr.bf16.mxu0 0
    %2634 = vmatmul.mubr.bf16.gmra.mrb[0].mxu0 %v2205
    %v2635 = vpop.f32.mrb[0].mxu0
    %v2636 = vadd.f32 %v2536, %v2635
    %v2637 = vpop.f32.mrb[0].mxu0
    %v2638 = vpop.f32.mrb[0].mxu0
    %v2639 = vadd.f32 %v2536, %v2638
    %v2640 = vpop.f32.mrb[0].mxu0
    %2641 = vdwg.mxu0
    %v2658 = vunpack.c.l.b16 %v2127
    %v2659 = vunpack.c.l.b16 %v2128
    %v2660 = vunpack.c.l.b16 %v2129
    %v2661 = vunpack.c.l.b16 %v2130
    %v2662 = vunpack.c.l.b16 %v2131
    %v2663 = vunpack.c.l.b16 %v2132
    %v2664 = vunpack.c.l.b16 %v2133
    %v2665 = vunpack.c.l.b16 %v2134
    %v2666 = vunpack.c.l.b16 %v2135
    %v2667 = vunpack.c.l.b16 %v2136
    %v2668 = vunpack.c.l.b16 %v2137
    %v2669 = vunpack.c.l.b16 %v2138
    %v2670 = vunpack.c.l.b16 %v2139
    %v2671 = vunpack.c.l.b16 %v2140
    %v2672 = vunpack.c.l.b16 %v2141
    %v2673 = vunpack.c.l.b16 %v2142
    %v2674 = vpack.c.b16 %v2659, %v2658
    %v2675 = vpack.c.b16 %v2661, %v2660
    %v2676 = vpack.c.b16 %v2663, %v2662
    %v2677 = vpack.c.b16 %v2665, %v2664
    %v2678 = vpack.c.b16 %v2667, %v2666
    %v2679 = vpack.c.b16 %v2669, %v2668
    %v2680 = vpack.c.b16 %v2671, %v2670
    %v2681 = vpack.c.b16 %v2673, %v2672
    %2690 = vmatprep.subr.bf16.mxu0 0
    %2691 = vmatpush1.bf16.msra.mxu0 %v2674
    %2692 = vmatprep.subr.bf16.mxu0 0
    %2693 = vmatpush1.bf16.msra.mxu0 %v2675
    %2694 = vmatprep.subr.bf16.mxu0 0
    %2695 = vmatpush1.bf16.msra.mxu0 %v2676
    %2696 = vmatprep.subr.bf16.mxu0 0
    %2697 = vmatpush1.bf16.msra.mxu0 %v2677
    %2698 = vmatprep.subr.bf16.mxu0 0
    %2699 = vmatpush1.bf16.msra.mxu0 %v2678
    %2700 = vmatprep.subr.bf16.mxu0 0
    %2701 = vmatpush1.bf16.msra.mxu0 %v2679
    %2702 = vmatprep.subr.bf16.mxu0 0
    %2703 = vmatpush1.bf16.msra.mxu0 %v2680
    %2704 = vmatprep.subr.bf16.mxu0 0
    %2705 = vmatpush1.bf16.msra.mxu0 %v2681
    %2706 = vmatprep.subr.bf16.mxu0 0
    %2707 = vmatpush1.bf16.msra.mxu0 0
    %2708 = vmatprep.subr.bf16.mxu0 0
    %2709 = vmatpush1.bf16.msra.mxu0 0
    %2710 = vmatprep.subr.bf16.mxu0 0
    %2711 = vmatpush1.bf16.msra.mxu0 0
    %2712 = vmatprep.subr.bf16.mxu0 0
    %2713 = vmatpush1.bf16.msra.mxu0 0
    %2714 = vmatprep.subr.bf16.mxu0 0
    %2715 = vmatpush1.bf16.msra.mxu0 0
    %2716 = vmatprep.subr.bf16.mxu0 0
    %2717 = vmatpush1.bf16.msra.mxu0 0
    %2718 = vmatprep.subr.bf16.mxu0 0
    %2719 = vmatpush1.bf16.msra.mxu0 0
    %2720 = vmatprep.subr.bf16.mxu0 0
    %2721 = vmatpush1.bf16.msra.mxu0 0
    %2722 = vmatprep.mubr.bf16.mxu0 0
    %2723 = vmatmul.mubr.bf16.gmra.mrb[0].mxu0 %v2203
    %v2724 = vpop.f32.mrb[0].mxu0
    %v2725 = vadd.f32 0.0, %v2724
    %v2726 = vpop.f32.mrb[0].mxu0
    %v2727 = vpop.f32.mrb[0].mxu0
    %v2728 = vadd.f32 0.0, %v2727
    %v2729 = vpop.f32.mrb[0].mxu0
    %2730 = vmatprep.mubr.bf16.mxu0 0
    %2731 = vmatmul.mubr.bf16.gmra.mrb[0].mxu0 %v2204
    %v2732 = vpop.f32.mrb[0].mxu0
    %v2733 = vadd.f32 0.0, %v2732
    %v2734 = vpop.f32.mrb[0].mxu0
    %v2735 = vpop.f32.mrb[0].mxu0
    %v2736 = vadd.f32 0.0, %v2735
    %v2737 = vpop.f32.mrb[0].mxu0
    %2738 = vmatprep.mubr.bf16.mxu0 0
    %2739 = vmatmul.mubr.bf16.gmra.mrb[0].mxu0 %v2205
    %v2740 = vpop.f32.mrb[0].mxu0
    %v2741 = vadd.f32 0.0, %v2740
    %v2742 = vpop.f32.mrb[0].mxu0
    %v2743 = vpop.f32.mrb[0].mxu0
    %v2744 = vadd.f32 0.0, %v2743
    %v2745 = vpop.f32.mrb[0].mxu0
    %2746 = vdwg.mxu0
    %v2763 = vunpack.c.l.b16 %v2143
    %v2764 = vunpack.c.l.b16 %v2144
    %v2765 = vunpack.c.l.b16 %v2145
    %v2766 = vunpack.c.l.b16 %v2146
    %v2767 = vunpack.c.l.b16 %v2147
    %v2768 = vunpack.c.l.b16 %v2148
    %v2769 = vunpack.c.l.b16 %v2149
    %v2770 = vunpack.c.l.b16 %v2150
    %v2771 = vunpack.c.l.b16 %v2151
    %v2772 = vunpack.c.l.b16 %v2152
    %v2773 = vunpack.c.l.b16 %v2153
    %v2774 = vunpack.c.l.b16 %v2154
    %v2775 = vunpack.c.l.b16 %v2155
    %v2776 = vunpack.c.l.b16 %v2156
    %v2777 = vunpack.c.l.b16 %v2157
    %v2778 = vunpack.c.l.b16 %v2158
    %v2779 = vpack.c.b16 %v2764, %v2763
    %v2780 = vpack.c.b16 %v2766, %v2765
    %v2781 = vpack.c.b16 %v2768, %v2767
    %v2782 = vpack.c.b16 %v2770, %v2769
    %v2783 = vpack.c.b16 %v2772, %v2771
    %v2784 = vpack.c.b16 %v2774, %v2773
    %v2785 = vpack.c.b16 %v2776, %v2775
    %v2786 = vpack.c.b16 %v2778, %v2777
    %2795 = vmatprep.subr.bf16.mxu0 0
    %2796 = vmatpush1.bf16.msra.mxu0 %v2779
    %2797 = vmatprep.subr.bf16.mxu0 0
    %2798 = vmatpush1.bf16.msra.mxu0 %v2780
    %2799 = vmatprep.subr.bf16.mxu0 0
    %2800 = vmatpush1.bf16.msra.mxu0 %v2781
    %2801 = vmatprep.subr.bf16.mxu0 0
    %2802 = vmatpush1.bf16.msra.mxu0 %v2782
    %2803 = vmatprep.subr.bf16.mxu0 0
    %2804 = vmatpush1.bf16.msra.mxu0 %v2783
    %2805 = vmatprep.subr.bf16.mxu0 0
    %2806 = vmatpush1.bf16.msra.mxu0 %v2784
    %2807 = vmatprep.subr.bf16.mxu0 0
    %2808 = vmatpush1.bf16.msra.mxu0 %v2785
    %2809 = vmatprep.subr.bf16.mxu0 0
    %2810 = vmatpush1.bf16.msra.mxu0 %v2786
    %2811 = vmatprep.subr.bf16.mxu0 0
    %2812 = vmatpush1.bf16.msra.mxu0 0
    %2813 = vmatprep.subr.bf16.mxu0 0
    %2814 = vmatpush1.bf16.msra.mxu0 0
    %2815 = vmatprep.subr.bf16.mxu0 0
    %2816 = vmatpush1.bf16.msra.mxu0 0
    %2817 = vmatprep.subr.bf16.mxu0 0
    %2818 = vmatpush1.bf16.msra.mxu0 0
    %2819 = vmatprep.subr.bf16.mxu0 0
    %2820 = vmatpush1.bf16.msra.mxu0 0
    %2821 = vmatprep.subr.bf16.mxu0 0
    %2822 = vmatpush1.bf16.msra.mxu0 0
    %2823 = vmatprep.subr.bf16.mxu0 0
    %2824 = vmatpush1.bf16.msra.mxu0 0
    %2825 = vmatprep.subr.bf16.mxu0 0
    %2826 = vmatpush1.bf16.msra.mxu0 0
    %2827 = vmatprep.mubr.bf16.mxu0 0
    %2828 = vmatmul.mubr.bf16.gmra.mrb[0].mxu0 %v2203
    %v2829 = vpop.f32.mrb[0].mxu0
    %v2830 = vadd.f32 0.0, %v2829
    %v2831 = vpop.f32.mrb[0].mxu0
    %v2832 = vpop.f32.mrb[0].mxu0
    %v2833 = vadd.f32 0.0, %v2832
    %v2834 = vpop.f32.mrb[0].mxu0
    %2835 = vmatprep.mubr.bf16.mxu0 0
    %2836 = vmatmul.mubr.bf16.gmra.mrb[0].mxu0 %v2204
    %v2837 = vpop.f32.mrb[0].mxu0
    %v2838 = vadd.f32 0.0, %v2837
    %v2839 = vpop.f32.mrb[0].mxu0
    %v2840 = vpop.f32.mrb[0].mxu0
    %v2841 = vadd.f32 0.0, %v2840
    %v2842 = vpop.f32.mrb[0].mxu0
    %2843 = vmatprep.mubr.bf16.mxu0 0
    %2844 = vmatmul.mubr.bf16.gmra.mrb[0].mxu0 %v2205
    %v2845 = vpop.f32.mrb[0].mxu0
    %v2846 = vadd.f32 0.0, %v2845
    %v2847 = vpop.f32.mrb[0].mxu0
    %v2848 = vpop.f32.mrb[0].mxu0
    %v2849 = vadd.f32 0.0, %v2848
    %v2850 = vpop.f32.mrb[0].mxu0
    %2851 = vdwg.mxu0
    %2852 = vmatprep.subr.mxu0 0.0
    %2853 = vmatpush1.xpose.msra.mxu0 %v2511
    %2854 = vmatprep.subr.mxu0 0.0
    %2855 = vmatpush1.xpose.msra.mxu0 %v2514
    %2856 = vmatprep.subr.mxu0 0.0
    %2857 = vmatpush1.xpose.msra.mxu0 %v2519
    %2858 = vmatprep.subr.mxu0 0.0
    %2859 = vmatpush1.xpose.msra.mxu0 %v2522
    %2860 = vmatprep.subr.mxu0 0.0
    %2861 = vmatpush1.xpose.msra.mxu0 %v2527
    %2862 = vmatprep.subr.mxu0 0.0
    %2863 = vmatpush1.xpose.msra.mxu0 %v2530
    %2864 = vmatprep.subr.mxu0 0.0
    %2865 = vmatpush1.xpose.msra.mxu0 0.0
    %2866 = vmatprep.subr.mxu0 0.0
    %2867 = vmatpush1.xpose.msra.mxu0 0.0
    %2868 = vmatprep.subr.mxu0 0.0
    %2869 = vmatpush1.xpose.msra.mxu0 0.0
    %2870 = vmatprep.subr.mxu0 0.0
    %2871 = vmatpush1.xpose.msra.mxu0 0.0
    %2872 = vmatprep.subr.mxu0 0.0
    %2873 = vmatpush1.xpose.msra.mxu0 0.0
    %2874 = vmatprep.subr.mxu0 0.0
    %2875 = vmatpush1.xpose.msra.mxu0 0.0
    %2876 = vmatprep.subr.mxu0 0.0
    %2877 = vmatpush1.xpose.msra.mxu0 0.0
    %2878 = vmatprep.subr.mxu0 0.0
    %2879 = vmatpush1.xpose.msra.mxu0 0.0
    %2880 = vmatprep.subr.mxu0 0.0
    %2881 = vmatpush1.xpose.msra.mxu0 0.0
    %2882 = vmatprep.subr.mxu0 0.0
    %2883 = vmatpush1.xpose.msra.mxu0 0.0
    %2884 = vmatprep.subr.mxu0 0.0
    %2885 = vmatpush1.xpose.msra.mxu0 0.0
    %2886 = vmatprep.subr.mxu0 0.0
    %2887 = vmatpush1.xpose.msra.mxu0 0.0
    %2888 = vmatprep.subr.mxu0 0.0
    %2889 = vmatpush1.xpose.msra.mxu0 0.0
    %2890 = vmatprep.subr.mxu0 0.0
    %2891 = vmatpush1.xpose.msra.mxu0 0.0
    %2892 = vmatprep.subr.mxu0 0.0
    %2893 = vmatpush1.xpose.msra.mxu0 0.0
    %2894 = vmatprep.subr.mxu0 0.0
    %2895 = vmatpush1.xpose.msra.mxu0 0.0
    %2896 = vmatprep.subr.mxu0 0.0
    %2897 = vmatpush1.xpose.msra.mxu0 0.0
    %2898 = vmatprep.subr.mxu0 0.0
    %2899 = vmatpush1.xpose.msra.mxu0 0.0
    %2900 = vmatprep.subr.mxu0 0.0
    %2901 = vmatpush1.xpose.msra.mxu0 0.0
    %2902 = vmatprep.subr.mxu0 0.0
    %2903 = vmatpush1.xpose.msra.mxu0 0.0
    %2904 = vmatprep.subr.mxu0 0.0
    %2905 = vmatpush1.xpose.msra.mxu0 0.0
    %2906 = vmatprep.subr.mxu0 0.0
    %2907 = vmatpush1.xpose.msra.mxu0 0.0
    %2908 = vmatprep.subr.mxu0 0.0
    %2909 = vmatpush1.xpose.msra.mxu0 0.0
    %2910 = vmatprep.subr.mxu0 0.0
    %2911 = vmatpush1.xpose.msra.mxu0 0.0
    %2912 = vmatprep.subr.mxu0 0.0
    %2913 = vmatpush1.xpose.msra.mxu0 0.0
    %2914 = vmatprep.subr.mxu0 0.0
    %2915 = vmatpush1.xpose.msra.mxu0 0.0
    %2916 = vmatprep.mubr.f32.mxu0 0.0
    %2917 = vmatmul.mubr.f32.gmra.mrb[0].mxu0 %v2293
    %v2918 = vpop.f32.mrb[0].mxu0
    %v2919 = vadd.f32 0.0, %v2918
    %v2920 = vpop.f32.mrb[0].mxu0
    %2921 = vmatprep.mubr.f32.mxu0 0.0
    %2922 = vmatmul.mubr.f32.gmra.mrb[0].mxu0 %v2296
    %v2923 = vpop.f32.mrb[0].mxu0
    %v2924 = vadd.f32 0.0, %v2923
    %v2925 = vpop.f32.mrb[0].mxu0
    %2926 = vmatprep.mubr.f32.mxu0 0.0
    %2927 = vmatmul.mubr.f32.gmra.mrb[0].mxu0 %v2301
    %v2928 = vpop.f32.mrb[0].mxu0
    %v2929 = vadd.f32 0.0, %v2928
    %v2930 = vpop.f32.mrb[0].mxu0
    %2931 = vmatprep.mubr.f32.mxu0 0.0
    %2932 = vmatmul.mubr.f32.gmra.mrb[0].mxu0 %v2304
    %v2933 = vpop.f32.mrb[0].mxu0
    %v2934 = vadd.f32 0.0, %v2933
    %v2935 = vpop.f32.mrb[0].mxu0
    %2936 = vmatprep.mubr.f32.mxu0 0.0
    %2937 = vmatmul.mubr.f32.gmra.mrb[0].mxu0 %v2309
    %v2938 = vpop.f32.mrb[0].mxu0
    %v2939 = vadd.f32 0.0, %v2938
    %v2940 = vpop.f32.mrb[0].mxu0
    %2941 = vmatprep.mubr.f32.mxu0 0.0
    %2942 = vmatmul.mubr.f32.gmra.mrb[0].mxu0 %v2312
    %v2943 = vpop.f32.mrb[0].mxu0
    %v2944 = vadd.f32 0.0, %v2943
    %v2945 = vpop.f32.mrb[0].mxu0
    %2946 = vdwg.mxu0
    %v2947 = vmul.f32 %v2919, 0.25
    %v2948 = vmul.f32 %v2924, 0.25
    %v2949 = vmul.f32 %v2929, 0.25
    %v2950 = vmul.f32 %v2934, 0.25
    %v2951 = vmul.f32 %v2939, 0.25
    %v2952 = vmul.f32 %v2944, 0.25
    %v2953 = vadd.f32 %v2947, %v97
    %v2954 = vadd.f32 %v2948, %v98
    %v2955 = vadd.f32 %v2949, %v99
    %v2956 = vadd.f32 %v2950, %v100
    %v2957 = vadd.f32 %v2951, %v101
    %v2958 = vadd.f32 %v2952, %v102
    %2959 = vmatprep.subr.mxu0 0.0
    %2960 = vmatpush1.xpose.msra.mxu0 %v2620
    %2961 = vmatprep.subr.mxu0 0.0
    %2962 = vmatpush1.xpose.msra.mxu0 %v2623
    %2963 = vmatprep.subr.mxu0 0.0
    %2964 = vmatpush1.xpose.msra.mxu0 %v2628
    %2965 = vmatprep.subr.mxu0 0.0
    %2966 = vmatpush1.xpose.msra.mxu0 %v2631
    %2967 = vmatprep.subr.mxu0 0.0
    %2968 = vmatpush1.xpose.msra.mxu0 %v2636
    %2969 = vmatprep.subr.mxu0 0.0
    %2970 = vmatpush1.xpose.msra.mxu0 %v2639
    %2971 = vmatprep.subr.mxu0 0.0
    %2972 = vmatpush1.xpose.msra.mxu0 0.0
    %2973 = vmatprep.subr.mxu0 0.0
    %2974 = vmatpush1.xpose.msra.mxu0 0.0
    %2975 = vmatprep.subr.mxu0 0.0
    %2976 = vmatpush1.xpose.msra.mxu0 0.0
    %2977 = vmatprep.subr.mxu0 0.0
    %2978 = vmatpush1.xpose.msra.mxu0 0.0
    %2979 = vmatprep.subr.mxu0 0.0
    %2980 = vmatpush1.xpose.msra.mxu0 0.0
    %2981 = vmatprep.subr.mxu0 0.0
    %2982 = vmatpush1.xpose.msra.mxu0 0.0
    %2983 = vmatprep.subr.mxu0 0.0
    %2984 = vmatpush1.xpose.msra.mxu0 0.0
    %2985 = vmatprep.subr.mxu0 0.0
    %2986 = vmatpush1.xpose.msra.mxu0 0.0
    %2987 = vmatprep.subr.mxu0 0.0
    %2988 = vmatpush1.xpose.msra.mxu0 0.0
    %2989 = vmatprep.subr.mxu0 0.0
    %2990 = vmatpush1.xpose.msra.mxu0 0.0
    %2991 = vmatprep.subr.mxu0 0.0
    %2992 = vmatpush1.xpose.msra.mxu0 0.0
    %2993 = vmatprep.subr.mxu0 0.0
    %2994 = vmatpush1.xpose.msra.mxu0 0.0
    %2995 = vmatprep.subr.mxu0 0.0
    %2996 = vmatpush1.xpose.msra.mxu0 0.0
    %2997 = vmatprep.subr.mxu0 0.0
    %2998 = vmatpush1.xpose.msra.mxu0 0.0
    %2999 = vmatprep.subr.mxu0 0.0
    %3000 = vmatpush1.xpose.msra.mxu0 0.0
    %3001 = vmatprep.subr.mxu0 0.0
    %3002 = vmatpush1.xpose.msra.mxu0 0.0
    %3003 = vmatprep.subr.mxu0 0.0
    %3004 = vmatpush1.xpose.msra.mxu0 0.0
    %3005 = vmatprep.subr.mxu0 0.0
    %3006 = vmatpush1.xpose.msra.mxu0 0.0
    %3007 = vmatprep.subr.mxu0 0.0
    %3008 = vmatpush1.xpose.msra.mxu0 0.0
    %3009 = vmatprep.subr.mxu0 0.0
    %3010 = vmatpush1.xpose.msra.mxu0 0.0
    %3011 = vmatprep.subr.mxu0 0.0
    %3012 = vmatpush1.xpose.msra.mxu0 0.0
    %3013 = vmatprep.subr.mxu0 0.0
    %3014 = vmatpush1.xpose.msra.mxu0 0.0
    %3015 = vmatprep.subr.mxu0 0.0
    %3016 = vmatpush1.xpose.msra.mxu0 0.0
    %3017 = vmatprep.subr.mxu0 0.0
    %3018 = vmatpush1.xpose.msra.mxu0 0.0
    %3019 = vmatprep.subr.mxu0 0.0
    %3020 = vmatpush1.xpose.msra.mxu0 0.0
    %3021 = vmatprep.subr.mxu0 0.0
    %3022 = vmatpush1.xpose.msra.mxu0 0.0
    %3023 = vmatprep.mubr.f32.mxu0 0.0
    %3024 = vmatmul.mubr.f32.gmra.mrb[0].mxu0 %v2402
    %v3025 = vpop.f32.mrb[0].mxu0
    %v3026 = vadd.f32 0.0, %v3025
    %v3027 = vpop.f32.mrb[0].mxu0
    %3028 = vmatprep.mubr.f32.mxu0 0.0
    %3029 = vmatmul.mubr.f32.gmra.mrb[0].mxu0 %v2405
    %v3030 = vpop.f32.mrb[0].mxu0
    %v3031 = vadd.f32 0.0, %v3030
    %v3032 = vpop.f32.mrb[0].mxu0
    %3033 = vmatprep.mubr.f32.mxu0 0.0
    %3034 = vmatmul.mubr.f32.gmra.mrb[0].mxu0 %v2410
    %v3035 = vpop.f32.mrb[0].mxu0
    %v3036 = vadd.f32 0.0, %v3035
    %v3037 = vpop.f32.mrb[0].mxu0
    %3038 = vmatprep.mubr.f32.mxu0 0.0
    %3039 = vmatmul.mubr.f32.gmra.mrb[0].mxu0 %v2413
    %v3040 = vpop.f32.mrb[0].mxu0
    %v3041 = vadd.f32 0.0, %v3040
    %v3042 = vpop.f32.mrb[0].mxu0
    %3043 = vmatprep.mubr.f32.mxu0 0.0
    %3044 = vmatmul.mubr.f32.gmra.mrb[0].mxu0 %v2418
    %v3045 = vpop.f32.mrb[0].mxu0
    %v3046 = vadd.f32 0.0, %v3045
    %v3047 = vpop.f32.mrb[0].mxu0
    %3048 = vmatprep.mubr.f32.mxu0 0.0
    %3049 = vmatmul.mubr.f32.gmra.mrb[0].mxu0 %v2421
    %v3050 = vpop.f32.mrb[0].mxu0
    %v3051 = vadd.f32 0.0, %v3050
    %v3052 = vpop.f32.mrb[0].mxu0
    %3053 = vdwg.mxu0
    %v3054 = vmul.f32 %v3026, 0.25
    %v3055 = vmul.f32 %v3031, 0.25
    %v3056 = vmul.f32 %v3036, 0.25
    %v3057 = vmul.f32 %v3041, 0.25
    %v3058 = vmul.f32 %v3046, 0.25
    %v3059 = vmul.f32 %v3051, 0.25
    %v3060 = vadd.f32 %v3054, %v97
    %v3061 = vadd.f32 %v3055, %v98
    %v3062 = vadd.f32 %v3056, %v99
    %v3063 = vadd.f32 %v3057, %v100
    %v3064 = vadd.f32 %v3058, %v101
    %v3065 = vadd.f32 %v3059, %v102
    %v3066 = vsel %vm1207, %v2953, -inf
    %3067 = vmax.xlane.f32.xlu0 %v3066
    %v3068 = vpop.xlane.xlu0 %3067
    %v3069 = vsel %vm1207, %v2954, -inf
    %3070 = vmax.xlane.f32.xlu0 %v3069
    %v3071 = vpop.xlane.xlu0 %3070
    %v3072 = vsel %vm1207, %v2955, -inf
    %3073 = vmax.xlane.f32.xlu0 %v3072
    %v3074 = vpop.xlane.xlu0 %3073
    %v3075 = vsel %vm1207, %v2956, -inf
    %3076 = vmax.xlane.f32.xlu0 %v3075
    %v3077 = vpop.xlane.xlu0 %3076
    %v3078 = vsel %vm1207, %v2957, -inf
    %3079 = vmax.xlane.f32.xlu0 %v3078
    %v3080 = vpop.xlane.xlu0 %3079
    %v3081 = vsel %vm1207, %v2958, -inf
    %3082 = vmax.xlane.f32.xlu0 %v3081
    %v3083 = vpop.xlane.xlu0 %3082
    %v3084 = vsub.f32 %v2953, %v3068
    %v3085 = vsub.f32 %v2954, %v3071
    %v3086 = vsub.f32 %v2955, %v3074
    %v3087 = vsub.f32 %v2956, %v3077
    %v3088 = vsub.f32 %v2957, %v3080
    %v3089 = vsub.f32 %v2958, %v3083
    %v3090 = vmul.f32 %v3084, 1.442695
    %v3091 = vpow.pop %v3090
    %v3092 = vmul.f32 %v3085, 1.442695
    %v3093 = vpow.pop %v3092
    %v3094 = vmul.f32 %v3086, 1.442695
    %v3095 = vpow.pop %v3094
    %v3096 = vmul.f32 %v3087, 1.442695
    %v3097 = vpow.pop %v3096
    %v3098 = vmul.f32 %v3088, 1.442695
    %v3099 = vpow.pop %v3098
    %v3100 = vmul.f32 %v3089, 1.442695
    %v3101 = vpow.pop %v3100
    %v3102 = vsel %vm1207, %v3091, 0.0
    %3103 = vadd.xlane.f32.xlu0 %v3102
    %v3104 = vpop.xlane.xlu0 %3103
    %v3105 = vsel %vm1207, %v3093, 0.0
    %3106 = vadd.xlane.f32.xlu0 %v3105
    %v3107 = vpop.xlane.xlu0 %3106
    %v3108 = vsel %vm1207, %v3095, 0.0
    %3109 = vadd.xlane.f32.xlu0 %v3108
    %v3110 = vpop.xlane.xlu0 %3109
    %v3111 = vsel %vm1207, %v3097, 0.0
    %3112 = vadd.xlane.f32.xlu0 %v3111
    %v3113 = vpop.xlane.xlu0 %3112
    %v3114 = vsel %vm1207, %v3099, 0.0
    %3115 = vadd.xlane.f32.xlu0 %v3114
    %v3116 = vpop.xlane.xlu0 %3115
    %v3117 = vsel %vm1207, %v3101, 0.0
    %3118 = vadd.xlane.f32.xlu0 %v3117
    %v3119 = vpop.xlane.xlu0 %3118
    %v3120 = vrcp.pop %v3104
    %v3121 = vrcp.pop %v3107
    %v3122 = vrcp.pop %v3110
    %v3123 = vrcp.pop %v3113
    %v3124 = vrcp.pop %v3116
    %v3125 = vrcp.pop %v3119
    %v3126 = vmul.f32 %v3091, %v3120
    %v3127 = vmul.f32 %v3093, %v3121
    %v3128 = vmul.f32 %v3095, %v3122
    %v3129 = vmul.f32 %v3097, %v3123
    %v3130 = vmul.f32 %v3099, %v3124
    %v3131 = vmul.f32 %v3101, %v3125
    %v3132 = vsel %vm1207, %v3060, -inf
    %3133 = vmax.xlane.f32.xlu0 %v3132
    %v3134 = vpop.xlane.xlu0 %3133
    %v3135 = vsel %vm1207, %v3061, -inf
    %3136 = vmax.xlane.f32.xlu0 %v3135
    %v3137 = vpop.xlane.xlu0 %3136
    %v3138 = vsel %vm1207, %v3062, -inf
    %3139 = vmax.xlane.f32.xlu0 %v3138
    %v3140 = vpop.xlane.xlu0 %3139
    %v3141 = vsel %vm1207, %v3063, -inf
    %3142 = vmax.xlane.f32.xlu0 %v3141
    %v3143 = vpop.xlane.xlu0 %3142
    %v3144 = vsel %vm1207, %v3064, -inf
    %3145 = vmax.xlane.f32.xlu0 %v3144
    %v3146 = vpop.xlane.xlu0 %3145
    %v3147 = vsel %vm1207, %v3065, -inf
    %3148 = vmax.xlane.f32.xlu0 %v3147
    %v3149 = vpop.xlane.xlu0 %3148
    %v3150 = vsub.f32 %v3060, %v3134
    %v3151 = vsub.f32 %v3061, %v3137
    %v3152 = vsub.f32 %v3062, %v3140
    %v3153 = vsub.f32 %v3063, %v3143
    %v3154 = vsub.f32 %v3064, %v3146
    %v3155 = vsub.f32 %v3065, %v3149
    %v3156 = vmul.f32 %v3150, 1.442695
    %v3157 = vpow.pop %v3156
    %v3158 = vmul.f32 %v3151, 1.442695
    %v3159 = vpow.pop %v3158
    %v3160 = vmul.f32 %v3152, 1.442695
    %v3161 = vpow.pop %v3160
    %v3162 = vmul.f32 %v3153, 1.442695
    %v3163 = vpow.pop %v3162
    %v3164 = vmul.f32 %v3154, 1.442695
    %v3165 = vpow.pop %v3164
    %v3166 = vmul.f32 %v3155, 1.442695
    %v3167 = vpow.pop %v3166
    %v3168 = vsel %vm1207, %v3157, 0.0
    %3169 = vadd.xlane.f32.xlu0 %v3168
    %v3170 = vpop.xlane.xlu0 %3169
    %v3171 = vsel %vm1207, %v3159, 0.0
    %3172 = vadd.xlane.f32.xlu0 %v3171
    %v3173 = vpop.xlane.xlu0 %3172
    %v3174 = vsel %vm1207, %v3161, 0.0
    %3175 = vadd.xlane.f32.xlu0 %v3174
    %v3176 = vpop.xlane.xlu0 %3175
    %v3177 = vsel %vm1207, %v3163, 0.0
    %3178 = vadd.xlane.f32.xlu0 %v3177
    %v3179 = vpop.xlane.xlu0 %3178
    %v3180 = vsel %vm1207, %v3165, 0.0
    %3181 = vadd.xlane.f32.xlu0 %v3180
    %v3182 = vpop.xlane.xlu0 %3181
    %v3183 = vsel %vm1207, %v3167, 0.0
    %3184 = vadd.xlane.f32.xlu0 %v3183
    %v3185 = vpop.xlane.xlu0 %3184
    %v3186 = vrcp.pop %v3170
    %v3187 = vrcp.pop %v3173
    %v3188 = vrcp.pop %v3176
    %v3189 = vrcp.pop %v3179
    %v3190 = vrcp.pop %v3182
    %v3191 = vrcp.pop %v3185
    %v3192 = vmul.f32 %v3157, %v3186
    %v3193 = vmul.f32 %v3159, %v3187
    %v3194 = vmul.f32 %v3161, %v3188
    %v3195 = vmul.f32 %v3163, %v3189
    %v3196 = vmul.f32 %v3165, %v3190
    %v3197 = vmul.f32 %v3167, %v3191
    %v3199 = vsel %vm1207, %v3192, 0
    %v3202 = vsel %vm1207, %v3193, 0
    %v3205 = vsel %vm1207, %v3194, 0
    %v3208 = vsel %vm1207, %v3195, 0
    %v3211 = vsel %vm1207, %v3196, 0
    %v3214 = vsel %vm1207, %v3197, 0
    %3216 = vmatprep.subr.mxu0 0.0
    %3217 = vmatpush1.msra.mxu0 %v2830
    %3218 = vmatprep.subr.mxu0 0.0
    %3219 = vmatpush1.msra.mxu0 %v2833
    %3220 = vmatprep.subr.mxu0 0.0
    %3221 = vmatpush1.msra.mxu0 %v2838
    %3222 = vmatprep.subr.mxu0 0.0
    %3223 = vmatpush1.msra.mxu0 %v2841
    %3224 = vmatprep.subr.mxu0 0.0
    %3225 = vmatpush1.msra.mxu0 %v2846
    %3226 = vmatprep.subr.mxu0 0.0
    %3227 = vmatpush1.msra.mxu0 %v2849
    %3228 = vmatprep.subr.mxu0 0.0
    %3229 = vmatpush1.msra.mxu0 0.0
    %3230 = vmatprep.subr.mxu0 0.0
    %3231 = vmatpush1.msra.mxu0 0.0
    %3232 = vmatprep.subr.mxu0 0.0
    %3233 = vmatpush1.msra.mxu0 0.0
    %3234 = vmatprep.subr.mxu0 0.0
    %3235 = vmatpush1.msra.mxu0 0.0
    %3236 = vmatprep.subr.mxu0 0.0
    %3237 = vmatpush1.msra.mxu0 0.0
    %3238 = vmatprep.subr.mxu0 0.0
    %3239 = vmatpush1.msra.mxu0 0.0
    %3240 = vmatprep.subr.mxu0 0.0
    %3241 = vmatpush1.msra.mxu0 0.0
    %3242 = vmatprep.subr.mxu0 0.0
    %3243 = vmatpush1.msra.mxu0 0.0
    %3244 = vmatprep.subr.mxu0 0.0
    %3245 = vmatpush1.msra.mxu0 0.0
    %3246 = vmatprep.subr.mxu0 0.0
    %3247 = vmatpush1.msra.mxu0 0.0
    %3248 = vmatprep.subr.mxu0 0.0
    %3249 = vmatpush1.msra.mxu0 0.0
    %3250 = vmatprep.subr.mxu0 0.0
    %3251 = vmatpush1.msra.mxu0 0.0
    %3252 = vmatprep.subr.mxu0 0.0
    %3253 = vmatpush1.msra.mxu0 0.0
    %3254 = vmatprep.subr.mxu0 0.0
    %3255 = vmatpush1.msra.mxu0 0.0
    %3256 = vmatprep.subr.mxu0 0.0
    %3257 = vmatpush1.msra.mxu0 0.0
    %3258 = vmatprep.subr.mxu0 0.0
    %3259 = vmatpush1.msra.mxu0 0.0
    %3260 = vmatprep.subr.mxu0 0.0
    %3261 = vmatpush1.msra.mxu0 0.0
    %3262 = vmatprep.subr.mxu0 0.0
    %3263 = vmatpush1.msra.mxu0 0.0
    %3264 = vmatprep.subr.mxu0 0.0
    %3265 = vmatpush1.msra.mxu0 0.0
    %3266 = vmatprep.subr.mxu0 0.0
    %3267 = vmatpush1.msra.mxu0 0.0
    %3268 = vmatprep.subr.mxu0 0.0
    %3269 = vmatpush1.msra.mxu0 0.0
    %3270 = vmatprep.subr.mxu0 0.0
    %3271 = vmatpush1.msra.mxu0 0.0
    %3272 = vmatprep.subr.mxu0 0.0
    %3273 = vmatpush1.msra.mxu0 0.0
    %3274 = vmatprep.subr.mxu0 0.0
    %3275 = vmatpush1.msra.mxu0 0.0
    %3276 = vmatprep.subr.mxu0 0.0
    %3277 = vmatpush1.msra.mxu0 0.0
    %3278 = vmatprep.subr.mxu0 0.0
    %3279 = vmatpush1.msra.mxu0 0.0
    %3280 = vmatprep.mubr.f32.mxu0 0.0
    %3281 = vmatmul.mubr.f32.gmra.mrb[0].mxu0 %v3199
    %v3282 = vpop.f32.mrb[0].mxu0
    %v3283 = vadd.f32 0.0, %v3282
    %v3284 = vpop.f32.mrb[0].mxu0
    %3285 = vmatprep.mubr.f32.mxu0 0.0
    %3286 = vmatmul.mubr.f32.gmra.mrb[0].mxu0 %v3202
    %v3287 = vpop.f32.mrb[0].mxu0
    %v3288 = vadd.f32 0.0, %v3287
    %v3289 = vpop.f32.mrb[0].mxu0
    %3290 = vmatprep.mubr.f32.mxu0 0.0
    %3291 = vmatmul.mubr.f32.gmra.mrb[0].mxu0 %v3205
    %v3292 = vpop.f32.mrb[0].mxu0
    %v3293 = vadd.f32 0.0, %v3292
    %v3294 = vpop.f32.mrb[0].mxu0
    %3295 = vmatprep.mubr.f32.mxu0 0.0
    %3296 = vmatmul.mubr.f32.gmra.mrb[0].mxu0 %v3208
    %v3297 = vpop.f32.mrb[0].mxu0
    %v3298 = vadd.f32 0.0, %v3297
    %v3299 = vpop.f32.mrb[0].mxu0
    %3300 = vmatprep.mubr.f32.mxu0 0.0
    %3301 = vmatmul.mubr.f32.gmra.mrb[0].mxu0 %v3211
    %v3302 = vpop.f32.mrb[0].mxu0
    %v3303 = vadd.f32 0.0, %v3302
    %v3304 = vpop.f32.mrb[0].mxu0
    %3305 = vmatprep.mubr.f32.mxu0 0.0
    %3306 = vmatmul.mubr.f32.gmra.mrb[0].mxu0 %v3214
    %v3307 = vpop.f32.mrb[0].mxu0
    %v3308 = vadd.f32 0.0, %v3307
    %v3309 = vpop.f32.mrb[0].mxu0
    %3310 = vdwg.mxu0
    %v3312 = vsel %vm1207, %v3126, 0
    %v3315 = vsel %vm1207, %v3127, 0
    %v3318 = vsel %vm1207, %v3128, 0
    %v3321 = vsel %vm1207, %v3129, 0
    %v3324 = vsel %vm1207, %v3130, 0
    %v3327 = vsel %vm1207, %v3131, 0
    %3329 = vmatprep.subr.mxu0 0.0
    %3330 = vmatpush1.msra.mxu0 %v2725
    %3331 = vmatprep.subr.mxu0 0.0
    %3332 = vmatpush1.msra.mxu0 %v2728
    %3333 = vmatprep.subr.mxu0 0.0
    %3334 = vmatpush1.msra.mxu0 %v2733
    %3335 = vmatprep.subr.mxu0 0.0
    %3336 = vmatpush1.msra.mxu0 %v2736
    %3337 = vmatprep.subr.mxu0 0.0
    %3338 = vmatpush1.msra.mxu0 %v2741
    %3339 = vmatprep.subr.mxu0 0.0
    %3340 = vmatpush1.msra.mxu0 %v2744
    %3341 = vmatprep.subr.mxu0 0.0
    %3342 = vmatpush1.msra.mxu0 0.0
    %3343 = vmatprep.subr.mxu0 0.0
    %3344 = vmatpush1.msra.mxu0 0.0
    %3345 = vmatprep.subr.mxu0 0.0
    %3346 = vmatpush1.msra.mxu0 0.0
    %3347 = vmatprep.subr.mxu0 0.0
    %3348 = vmatpush1.msra.mxu0 0.0
    %3349 = vmatprep.subr.mxu0 0.0
    %3350 = vmatpush1.msra.mxu0 0.0
    %3351 = vmatprep.subr.mxu0 0.0
    %3352 = vmatpush1.msra.mxu0 0.0
    %3353 = vmatprep.subr.mxu0 0.0
    %3354 = vmatpush1.msra.mxu0 0.0
    %3355 = vmatprep.subr.mxu0 0.0
    %3356 = vmatpush1.msra.mxu0 0.0
    %3357 = vmatprep.subr.mxu0 0.0
    %3358 = vmatpush1.msra.mxu0 0.0
    %3359 = vmatprep.subr.mxu0 0.0
    %3360 = vmatpush1.msra.mxu0 0.0
    %3361 = vmatprep.subr.mxu0 0.0
    %3362 = vmatpush1.msra.mxu0 0.0
    %3363 = vmatprep.subr.mxu0 0.0
    %3364 = vmatpush1.msra.mxu0 0.0
    %3365 = vmatprep.subr.mxu0 0.0
    %3366 = vmatpush1.msra.mxu0 0.0
    %3367 = vmatprep.subr.mxu0 0.0
    %3368 = vmatpush1.msra.mxu0 0.0
    %3369 = vmatprep.subr.mxu0 0.0
    %3370 = vmatpush1.msra.mxu0 0.0
    %3371 = vmatprep.subr.mxu0 0.0
    %3372 = vmatpush1.msra.mxu0 0.0
    %3373 = vmatprep.subr.mxu0 0.0
    %3374 = vmatpush1.msra.mxu0 0.0
    %3375 = vmatprep.subr.mxu0 0.0
    %3376 = vmatpush1.msra.mxu0 0.0
    %3377 = vmatprep.subr.mxu0 0.0
    %3378 = vmatpush1.msra.mxu0 0.0
    %3379 = vmatprep.subr.mxu0 0.0
    %3380 = vmatpush1.msra.mxu0 0.0
    %3381 = vmatprep.subr.mxu0 0.0
    %3382 = vmatpush1.msra.mxu0 0.0
    %3383 = vmatprep.subr.mxu0 0.0
    %3384 = vmatpush1.msra.mxu0 0.0
    %3385 = vmatprep.subr.mxu0 0.0
    %3386 = vmatpush1.msra.mxu0 0.0
    %3387 = vmatprep.subr.mxu0 0.0
    %3388 = vmatpush1.msra.mxu0 0.0
    %3389 = vmatprep.subr.mxu0 0.0
    %3390 = vmatpush1.msra.mxu0 0.0
    %3391 = vmatprep.subr.mxu0 0.0
    %3392 = vmatpush1.msra.mxu0 0.0
    %3393 = vmatprep.mubr.f32.mxu0 0.0
    %3394 = vmatmul.mubr.f32.gmra.mrb[0].mxu0 %v3312
    %v3395 = vpop.f32.mrb[0].mxu0
    %v3396 = vadd.f32 %v3283, %v3395
    %v3397 = vpop.f32.mrb[0].mxu0
    %3398 = vmatprep.mubr.f32.mxu0 0.0
    %3399 = vmatmul.mubr.f32.gmra.mrb[0].mxu0 %v3315
    %v3400 = vpop.f32.mrb[0].mxu0
    %v3401 = vadd.f32 %v3288, %v3400
    %v3402 = vpop.f32.mrb[0].mxu0
    %3403 = vmatprep.mubr.f32.mxu0 0.0
    %3404 = vmatmul.mubr.f32.gmra.mrb[0].mxu0 %v3318
    %v3405 = vpop.f32.mrb[0].mxu0
    %v3406 = vadd.f32 %v3293, %v3405
    %v3407 = vpop.f32.mrb[0].mxu0
    %3408 = vmatprep.mubr.f32.mxu0 0.0
    %3409 = vmatmul.mubr.f32.gmra.mrb[0].mxu0 %v3321
    %v3410 = vpop.f32.mrb[0].mxu0
    %v3411 = vadd.f32 %v3298, %v3410
    %v3412 = vpop.f32.mrb[0].mxu0
    %3413 = vmatprep.mubr.f32.mxu0 0.0
    %3414 = vmatmul.mubr.f32.gmra.mrb[0].mxu0 %v3324
    %v3415 = vpop.f32.mrb[0].mxu0
    %v3416 = vadd.f32 %v3303, %v3415
    %v3417 = vpop.f32.mrb[0].mxu0
    %3418 = vmatprep.mubr.f32.mxu0 0.0
    %3419 = vmatmul.mubr.f32.gmra.mrb[0].mxu0 %v3327
    %v3420 = vpop.f32.mrb[0].mxu0
    %v3421 = vadd.f32 %v3308, %v3420
    %v3422 = vpop.f32.mrb[0].mxu0
    %3423 = vdwg.mxu0
    %v3424 = vlaneseq
    %v3425 = vshrl.u32 %v3424, 7
    %v3426 = vsub.s32 0, %v3425
    %v3427 = vrot.slane %v2196, %v3426
    %v3428 = vadd.f32 %v3396, %v3427
    %v3429 = vadd.f32 %v3401, %v3427
    %v3430 = vadd.f32 %v3406, %v3427
    %v3431 = vadd.f32 %v3411, %v3427
    %v3432 = vadd.f32 %v3416, %v3427
    %v3433 = vadd.f32 %v3421, %v3427
    %v3434 = vadd.f32 %v3428, %v2056
    %v3435 = vadd.f32 %v3429, %v2057
    %v3436 = vadd.f32 %v3430, %v2058
    %v3437 = vadd.f32 %v3431, %v2059
    %v3438 = vadd.f32 %v3432, %v2060
    %v3439 = vadd.f32 %v3433, %v2061
    %3440 = vadd.xlane.f32.xlu0 %v3434
    %v3441 = vpop.xlane.xlu0 %3440
    %3442 = vadd.xlane.f32.xlu0 %v3435
    %v3443 = vpop.xlane.xlu0 %3442
    %3444 = vadd.xlane.f32.xlu0 %v3436
    %v3445 = vpop.xlane.xlu0 %3444
    %3446 = vadd.xlane.f32.xlu0 %v3437
    %v3447 = vpop.xlane.xlu0 %3446
    %3448 = vadd.xlane.f32.xlu0 %v3438
    %v3449 = vpop.xlane.xlu0 %3448
    %3450 = vadd.xlane.f32.xlu0 %v3439
    %v3451 = vpop.xlane.xlu0 %3450
    %v3452 = vmul.f32 %v3434, %v3434
    %v3453 = vmul.f32 %v3435, %v3435
    %v3454 = vmul.f32 %v3436, %v3436
    %v3455 = vmul.f32 %v3437, %v3437
    %v3456 = vmul.f32 %v3438, %v3438
    %v3457 = vmul.f32 %v3439, %v3439
    %3458 = vadd.xlane.f32.xlu0 %v3452
    %v3459 = vpop.xlane.xlu0 %3458
    %3460 = vadd.xlane.f32.xlu0 %v3453
    %v3461 = vpop.xlane.xlu0 %3460
    %3462 = vadd.xlane.f32.xlu0 %v3454
    %v3463 = vpop.xlane.xlu0 %3462
    %3464 = vadd.xlane.f32.xlu0 %v3455
    %v3465 = vpop.xlane.xlu0 %3464
    %3466 = vadd.xlane.f32.xlu0 %v3456
    %v3467 = vpop.xlane.xlu0 %3466
    %3468 = vadd.xlane.f32.xlu0 %v3457
    %v3469 = vpop.xlane.xlu0 %3468
    %v3470 = vmul.f32 %v3441, 0.03125
    %v3471 = vmul.f32 %v3443, 0.03125
    %v3472 = vmul.f32 %v3445, 0.03125
    %v3473 = vmul.f32 %v3447, 0.03125
    %v3474 = vmul.f32 %v3449, 0.03125
    %v3475 = vmul.f32 %v3451, 0.03125
    %v3476 = vmul.f32 %v3459, 0.03125
    %v3477 = vmul.f32 %v3461, 0.03125
    %v3478 = vmul.f32 %v3463, 0.03125
    %v3479 = vmul.f32 %v3465, 0.03125
    %v3480 = vmul.f32 %v3467, 0.03125
    %v3481 = vmul.f32 %v3469, 0.03125
    %v3482 = vmul.f32 %v3470, %v3470
    %v3483 = vmul.f32 %v3471, %v3471
    %v3484 = vmul.f32 %v3472, %v3472
    %v3485 = vmul.f32 %v3473, %v3473
    %v3486 = vmul.f32 %v3474, %v3474
    %v3487 = vmul.f32 %v3475, %v3475
    %v3488 = vsub.f32 %v3476, %v3482
    %v3489 = vsub.f32 %v3477, %v3483
    %v3490 = vsub.f32 %v3478, %v3484
    %v3491 = vsub.f32 %v3479, %v3485
    %v3492 = vsub.f32 %v3480, %v3486
    %v3493 = vsub.f32 %v3481, %v3487
    %v3494 = vsub.f32 %v3434, %v3470
    %v3495 = vsub.f32 %v3435, %v3471
    %v3496 = vsub.f32 %v3436, %v3472
    %v3497 = vsub.f32 %v3437, %v3473
    %v3498 = vsub.f32 %v3438, %v3474
    %v3499 = vsub.f32 %v3439, %v3475
    %v3500 = vadd.f32 %v3488, 1e-12
    %v3501 = vadd.f32 %v3489, 1e-12
    %v3502 = vadd.f32 %v3490, 1e-12
    %v3503 = vadd.f32 %v3491, 1e-12
    %v3504 = vadd.f32 %v3492, 1e-12
    %v3505 = vadd.f32 %v3493, 1e-12
    %v3506 = vrsqrt.pop %v3500
    %v3507 = vrsqrt.pop %v3501
    %v3508 = vrsqrt.pop %v3502
    %v3509 = vrsqrt.pop %v3503
    %v3510 = vrsqrt.pop %v3504
    %v3511 = vrsqrt.pop %v3505
    %v3512 = vmul.f32 %v3494, %v3506
    %v3513 = vmul.f32 %v3495, %v3507
    %v3514 = vmul.f32 %v3496, %v3508
    %v3515 = vmul.f32 %v3497, %v3509
    %v3516 = vmul.f32 %v3498, %v3510
    %v3517 = vmul.f32 %v3499, %v3511
    %v3518 = vlaneseq
    %v3519 = vshrl.u32 %v3518, 7
    %v3520 = vsub.s32 0, %v3519
    %v3521 = vrot.slane %v2199, %v3520
    %v3522 = vmul.f32 %v3512, %v3521
    %v3523 = vmul.f32 %v3513, %v3521
    %v3524 = vmul.f32 %v3514, %v3521
    %v3525 = vmul.f32 %v3515, %v3521
    %v3526 = vmul.f32 %v3516, %v3521
    %v3527 = vmul.f32 %v3517, %v3521
    %v3528 = vlaneseq
    %v3529 = vshrl.u32 %v3528, 7
    %v3530 = vsub.s32 0, %v3529
    %v3531 = vrot.slane %v2200, %v3530
    %v3532 = vadd.f32 %v3522, %v3531
    %v3533 = vadd.f32 %v3523, %v3531
    %v3534 = vadd.f32 %v3524, %v3531
    %v3535 = vadd.f32 %v3525, %v3531
    %v3536 = vadd.f32 %v3526, %v3531
    %v3537 = vadd.f32 %v3527, %v3531
    %v3538 = vpack.c.bf16 %v3533, %v3532
    %v3539 = vpack.c.bf16 %v3535, %v3534
    %v3540 = vpack.c.bf16 %v3537, %v3536
    %v3541 = vlaneseq
    %v3542 = vshrl.u32 %v3541, 7
    %v3543 = vsub.s32 0, %v3542
    %v3544 = vrot.slane %v2197, %v3543
    %v3561 = vunpack.c.l.b16 %v2159
    %v3562 = vunpack.c.l.b16 %v2160
    %v3563 = vunpack.c.l.b16 %v2161
    %v3564 = vunpack.c.l.b16 %v2162
    %v3565 = vunpack.c.l.b16 %v2163
    %v3566 = vunpack.c.l.b16 %v2164
    %v3567 = vunpack.c.l.b16 %v2165
    %v3568 = vunpack.c.l.b16 %v2166
    %v3569 = vunpack.c.l.b16 %v2167
    %v3570 = vunpack.c.l.b16 %v2168
    %v3571 = vunpack.c.l.b16 %v2169
    %v3572 = vunpack.c.l.b16 %v2170
    %v3573 = vunpack.c.l.b16 %v2171
    %v3574 = vunpack.c.l.b16 %v2172
    %v3575 = vunpack.c.l.b16 %v2173
    %v3576 = vunpack.c.l.b16 %v2174
    %v3577 = vpack.c.b16 %v3562, %v3561
    %v3578 = vpack.c.b16 %v3564, %v3563
    %v3579 = vpack.c.b16 %v3566, %v3565
    %v3580 = vpack.c.b16 %v3568, %v3567
    %v3581 = vpack.c.b16 %v3570, %v3569
    %v3582 = vpack.c.b16 %v3572, %v3571
    %v3583 = vpack.c.b16 %v3574, %v3573
    %v3584 = vpack.c.b16 %v3576, %v3575
    %3593 = vmatprep.subr.bf16.mxu0 0
    %3594 = vmatpush1.bf16.msra.mxu0 %v3577
    %3595 = vmatprep.subr.bf16.mxu0 0
    %3596 = vmatpush1.bf16.msra.mxu0 %v3578
    %3597 = vmatprep.subr.bf16.mxu0 0
    %3598 = vmatpush1.bf16.msra.mxu0 %v3579
    %3599 = vmatprep.subr.bf16.mxu0 0
    %3600 = vmatpush1.bf16.msra.mxu0 %v3580
    %3601 = vmatprep.subr.bf16.mxu0 0
    %3602 = vmatpush1.bf16.msra.mxu0 %v3581
    %3603 = vmatprep.subr.bf16.mxu0 0
    %3604 = vmatpush1.bf16.msra.mxu0 %v3582
    %3605 = vmatprep.subr.bf16.mxu0 0
    %3606 = vmatpush1.bf16.msra.mxu0 %v3583
    %3607 = vmatprep.subr.bf16.mxu0 0
    %3608 = vmatpush1.bf16.msra.mxu0 %v3584
    %3609 = vmatprep.subr.bf16.mxu0 0
    %3610 = vmatpush1.bf16.msra.mxu0 0
    %3611 = vmatprep.subr.bf16.mxu0 0
    %3612 = vmatpush1.bf16.msra.mxu0 0
    %3613 = vmatprep.subr.bf16.mxu0 0
    %3614 = vmatpush1.bf16.msra.mxu0 0
    %3615 = vmatprep.subr.bf16.mxu0 0
    %3616 = vmatpush1.bf16.msra.mxu0 0
    %3617 = vmatprep.subr.bf16.mxu0 0
    %3618 = vmatpush1.bf16.msra.mxu0 0
    %3619 = vmatprep.subr.bf16.mxu0 0
    %3620 = vmatpush1.bf16.msra.mxu0 0
    %3621 = vmatprep.subr.bf16.mxu0 0
    %3622 = vmatpush1.bf16.msra.mxu0 0
    %3623 = vmatprep.subr.bf16.mxu0 0
    %3624 = vmatpush1.bf16.msra.mxu0 0
    %3625 = vmatprep.mubr.bf16.mxu0 0
    %3626 = vmatmul.mubr.bf16.gmra.mrb[0].mxu0 %v3538
    %v3627 = vpop.f32.mrb[0].mxu0
    %v3628 = vadd.f32 %v3544, %v3627
    %v3629 = vpop.f32.mrb[0].mxu0
    %v3630 = vpop.f32.mrb[0].mxu0
    %v3631 = vadd.f32 %v3544, %v3630
    %v3632 = vpop.f32.mrb[0].mxu0
    %3633 = vmatprep.mubr.bf16.mxu0 0
    %3634 = vmatmul.mubr.bf16.gmra.mrb[0].mxu0 %v3539
    %v3635 = vpop.f32.mrb[0].mxu0
    %v3636 = vadd.f32 %v3544, %v3635
    %v3637 = vpop.f32.mrb[0].mxu0
    %v3638 = vpop.f32.mrb[0].mxu0
    %v3639 = vadd.f32 %v3544, %v3638
    %v3640 = vpop.f32.mrb[0].mxu0
    %3641 = vmatprep.mubr.bf16.mxu0 0
    %3642 = vmatmul.mubr.bf16.gmra.mrb[0].mxu0 %v3540
    %v3643 = vpop.f32.mrb[0].mxu0
    %v3644 = vadd.f32 %v3544, %v3643
    %v3645 = vpop.f32.mrb[0].mxu0
    %v3646 = vpop.f32.mrb[0].mxu0
    %v3647 = vadd.f32 %v3544, %v3646
    %v3648 = vpop.f32.mrb[0].mxu0
    %3649 = vdwg.mxu0
    %v3650 = vmul.f32 %v3628, %v3628
    %v3651 = vmul.f32 %v3631, %v3631
    %v3652 = vmul.f32 %v3636, %v3636
    %v3653 = vmul.f32 %v3639, %v3639
    %v3654 = vmul.f32 %v3644, %v3644
    %v3655 = vmul.f32 %v3647, %v3647
    %v3656 = vmul.f32 %v3628, %v3650
    %v3657 = vmul.f32 %v3631, %v3651
    %v3658 = vmul.f32 %v3636, %v3652
    %v3659 = vmul.f32 %v3639, %v3653
    %v3660 = vmul.f32 %v3644, %v3654
    %v3661 = vmul.f32 %v3647, %v3655
    %v3662 = vmul.f32 %v3656, 0.044715
    %v3663 = vmul.f32 %v3657, 0.044715
    %v3664 = vmul.f32 %v3658, 0.044715
    %v3665 = vmul.f32 %v3659, 0.044715
    %v3666 = vmul.f32 %v3660, 0.044715
    %v3667 = vmul.f32 %v3661, 0.044715
    %v3668 = vadd.f32 %v3628, %v3662
    %v3669 = vadd.f32 %v3631, %v3663
    %v3670 = vadd.f32 %v3636, %v3664
    %v3671 = vadd.f32 %v3639, %v3665
    %v3672 = vadd.f32 %v3644, %v3666
    %v3673 = vadd.f32 %v3647, %v3667
    %v3674 = vmul.f32 %v3668, 0.7978846
    %v3675 = vmul.f32 %v3669, 0.7978846
    %v3676 = vmul.f32 %v3670, 0.7978846
    %v3677 = vmul.f32 %v3671, 0.7978846
    %v3678 = vmul.f32 %v3672, 0.7978846
    %v3679 = vmul.f32 %v3673, 0.7978846
    %v3680 = vtanh.pop %v3674
    %v3681 = vtanh.pop %v3675
    %v3682 = vtanh.pop %v3676
    %v3683 = vtanh.pop %v3677
    %v3684 = vtanh.pop %v3678
    %v3685 = vtanh.pop %v3679
    %v3686 = vadd.f32 %v3680, 1.0
    %v3687 = vadd.f32 %v3681, 1.0
    %v3688 = vadd.f32 %v3682, 1.0
    %v3689 = vadd.f32 %v3683, 1.0
    %v3690 = vadd.f32 %v3684, 1.0
    %v3691 = vadd.f32 %v3685, 1.0
    %v3692 = vmul.f32 %v3686, 0.5
    %v3693 = vmul.f32 %v3687, 0.5
    %v3694 = vmul.f32 %v3688, 0.5
    %v3695 = vmul.f32 %v3689, 0.5
    %v3696 = vmul.f32 %v3690, 0.5
    %v3697 = vmul.f32 %v3691, 0.5
    %v3698 = vmul.f32 %v3628, %v3692
    %v3699 = vmul.f32 %v3631, %v3693
    %v3700 = vmul.f32 %v3636, %v3694
    %v3701 = vmul.f32 %v3639, %v3695
    %v3702 = vmul.f32 %v3644, %v3696
    %v3703 = vmul.f32 %v3647, %v3697
    %v3704 = vpack.c.bf16 %v3699, %v3698
    %v3705 = vpack.c.bf16 %v3701, %v3700
    %v3706 = vpack.c.bf16 %v3703, %v3702
    %v3707 = vlaneseq
    %v3708 = vshrl.u32 %v3707, 7
    %v3709 = vsub.s32 0, %v3708
    %v3710 = vrot.slane %v2198, %v3709
    %v3727 = vunpack.c.l.b16 %v2175
    %v3728 = vunpack.c.l.b16 %v2176
    %v3729 = vunpack.c.l.b16 %v2177
    %v3730 = vunpack.c.l.b16 %v2178
    %v3731 = vunpack.c.l.b16 %v2179
    %v3732 = vunpack.c.l.b16 %v2180
    %v3733 = vunpack.c.l.b16 %v2181
    %v3734 = vunpack.c.l.b16 %v2182
    %v3735 = vunpack.c.l.b16 %v2183
    %v3736 = vunpack.c.l.b16 %v2184
    %v3737 = vunpack.c.l.b16 %v2185
    %v3738 = vunpack.c.l.b16 %v2186
    %v3739 = vunpack.c.l.b16 %v2187
    %v3740 = vunpack.c.l.b16 %v2188
    %v3741 = vunpack.c.l.b16 %v2189
    %v3742 = vunpack.c.l.b16 %v2190
    %v3743 = vpack.c.b16 %v3728, %v3727
    %v3744 = vpack.c.b16 %v3730, %v3729
    %v3745 = vpack.c.b16 %v3732, %v3731
    %v3746 = vpack.c.b16 %v3734, %v3733
    %v3747 = vpack.c.b16 %v3736, %v3735
    %v3748 = vpack.c.b16 %v3738, %v3737
    %v3749 = vpack.c.b16 %v3740, %v3739
    %v3750 = vpack.c.b16 %v3742, %v3741
    %3759 = vmatprep.subr.bf16.mxu0 0
    %3760 = vmatpush1.bf16.msra.mxu0 %v3743
    %3761 = vmatprep.subr.bf16.mxu0 0
    %3762 = vmatpush1.bf16.msra.mxu0 %v3744
    %3763 = vmatprep.subr.bf16.mxu0 0
    %3764 = vmatpush1.bf16.msra.mxu0 %v3745
    %3765 = vmatprep.subr.bf16.mxu0 0
    %3766 = vmatpush1.bf16.msra.mxu0 %v3746
    %3767 = vmatprep.subr.bf16.mxu0 0
    %3768 = vmatpush1.bf16.msra.mxu0 %v3747
    %3769 = vmatprep.subr.bf16.mxu0 0
    %3770 = vmatpush1.bf16.msra.mxu0 %v3748
    %3771 = vmatprep.subr.bf16.mxu0 0
    %3772 = vmatpush1.bf16.msra.mxu0 %v3749
    %3773 = vmatprep.subr.bf16.mxu0 0
    %3774 = vmatpush1.bf16.msra.mxu0 %v3750
    %3775 = vmatprep.subr.bf16.mxu0 0
    %3776 = vmatpush1.bf16.msra.mxu0 0
    %3777 = vmatprep.subr.bf16.mxu0 0
    %3778 = vmatpush1.bf16.msra.mxu0 0
    %3779 = vmatprep.subr.bf16.mxu0 0
    %3780 = vmatpush1.bf16.msra.mxu0 0
    %3781 = vmatprep.subr.bf16.mxu0 0
    %3782 = vmatpush1.bf16.msra.mxu0 0
    %3783 = vmatprep.subr.bf16.mxu0 0
    %3784 = vmatpush1.bf16.msra.mxu0 0
    %3785 = vmatprep.subr.bf16.mxu0 0
    %3786 = vmatpush1.bf16.msra.mxu0 0
    %3787 = vmatprep.subr.bf16.mxu0 0
    %3788 = vmatpush1.bf16.msra.mxu0 0
    %3789 = vmatprep.subr.bf16.mxu0 0
    %3790 = vmatpush1.bf16.msra.mxu0 0
    %3791 = vmatprep.mubr.bf16.mxu0 0
    %3792 = vmatmul.mubr.bf16.gmra.mrb[0].mxu0 %v3704
    %v3793 = vpop.f32.mrb[0].mxu0
    %v3794 = vadd.f32 %v3710, %v3793
    %v3795 = vpop.f32.mrb[0].mxu0
    %v3796 = vpop.f32.mrb[0].mxu0
    %v3797 = vadd.f32 %v3710, %v3796
    %v3798 = vpop.f32.mrb[0].mxu0
    %3799 = vmatprep.mubr.bf16.mxu0 0
    %3800 = vmatmul.mubr.bf16.gmra.mrb[0].mxu0 %v3705
    %v3801 = vpop.f32.mrb[0].mxu0
    %v3802 = vadd.f32 %v3710, %v3801
    %v3803 = vpop.f32.mrb[0].mxu0
    %v3804 = vpop.f32.mrb[0].mxu0
    %v3805 = vadd.f32 %v3710, %v3804
    %v3806 = vpop.f32.mrb[0].mxu0
    %3807 = vmatprep.mubr.bf16.mxu0 0
    %3808 = vmatmul.mubr.bf16.gmra.mrb[0].mxu0 %v3706
    %v3809 = vpop.f32.mrb[0].mxu0
    %v3810 = vadd.f32 %v3710, %v3809
    %v3811 = vpop.f32.mrb[0].mxu0
    %v3812 = vpop.f32.mrb[0].mxu0
    %v3813 = vadd.f32 %v3710, %v3812
    %v3814 = vpop.f32.mrb[0].mxu0
    %3815 = vdwg.mxu0
    %v3816 = vadd.f32 %v3794, %v3532
    %v3817 = vadd.f32 %v3797, %v3533
    %v3818 = vadd.f32 %v3802, %v3534
    %v3819 = vadd.f32 %v3805, %v3535
    %v3820 = vadd.f32 %v3810, %v3536
    %v3821 = vadd.f32 %v3813, %v3537
    %3822 = vadd.xlane.f32.xlu0 %v3816
    %v3823 = vpop.xlane.xlu0 %3822
    %3824 = vadd.xlane.f32.xlu0 %v3817
    %v3825 = vpop.xlane.xlu0 %3824
    %3826 = vadd.xlane.f32.xlu0 %v3818
    %v3827 = vpop.xlane.xlu0 %3826
    %3828 = vadd.xlane.f32.xlu0 %v3819
    %v3829 = vpop.xlane.xlu0 %3828
    %3830 = vadd.xlane.f32.xlu0 %v3820
    %v3831 = vpop.xlane.xlu0 %3830
    %3832 = vadd.xlane.f32.xlu0 %v3821
    %v3833 = vpop.xlane.xlu0 %3832
    %v3834 = vmul.f32 %v3816, %v3816
    %v3835 = vmul.f32 %v3817, %v3817
    %v3836 = vmul.f32 %v3818, %v3818
    %v3837 = vmul.f32 %v3819, %v3819
    %v3838 = vmul.f32 %v3820, %v3820
    %v3839 = vmul.f32 %v3821, %v3821
    %3840 = vadd.xlane.f32.xlu0 %v3834
    %v3841 = vpop.xlane.xlu0 %3840
    %3842 = vadd.xlane.f32.xlu0 %v3835
    %v3843 = vpop.xlane.xlu0 %3842
    %3844 = vadd.xlane.f32.xlu0 %v3836
    %v3845 = vpop.xlane.xlu0 %3844
    %3846 = vadd.xlane.f32.xlu0 %v3837
    %v3847 = vpop.xlane.xlu0 %3846
    %3848 = vadd.xlane.f32.xlu0 %v3838
    %v3849 = vpop.xlane.xlu0 %3848
    %3850 = vadd.xlane.f32.xlu0 %v3839
    %v3851 = vpop.xlane.xlu0 %3850
    %v3852 = vmul.f32 %v3823, 0.03125
    %v3853 = vmul.f32 %v3825, 0.03125
    %v3854 = vmul.f32 %v3827, 0.03125
    %v3855 = vmul.f32 %v3829, 0.03125
    %v3856 = vmul.f32 %v3831, 0.03125
    %v3857 = vmul.f32 %v3833, 0.03125
    %v3858 = vmul.f32 %v3841, 0.03125
    %v3859 = vmul.f32 %v3843, 0.03125
    %v3860 = vmul.f32 %v3845, 0.03125
    %v3861 = vmul.f32 %v3847, 0.03125
    %v3862 = vmul.f32 %v3849, 0.03125
    %v3863 = vmul.f32 %v3851, 0.03125
    %v3864 = vmul.f32 %v3852, %v3852
    %v3865 = vmul.f32 %v3853, %v3853
    %v3866 = vmul.f32 %v3854, %v3854
    %v3867 = vmul.f32 %v3855, %v3855
    %v3868 = vmul.f32 %v3856, %v3856
    %v3869 = vmul.f32 %v3857, %v3857
    %v3870 = vsub.f32 %v3858, %v3864
    %v3871 = vsub.f32 %v3859, %v3865
    %v3872 = vsub.f32 %v3860, %v3866
    %v3873 = vsub.f32 %v3861, %v3867
    %v3874 = vsub.f32 %v3862, %v3868
    %v3875 = vsub.f32 %v3863, %v3869
    %v3876 = vsub.f32 %v3816, %v3852
    %v3877 = vsub.f32 %v3817, %v3853
    %v3878 = vsub.f32 %v3818, %v3854
    %v3879 = vsub.f32 %v3819, %v3855
    %v3880 = vsub.f32 %v3820, %v3856
    %v3881 = vsub.f32 %v3821, %v3857
    %v3882 = vadd.f32 %v3870, 1e-12
    %v3883 = vadd.f32 %v3871, 1e-12
    %v3884 = vadd.f32 %v3872, 1e-12
    %v3885 = vadd.f32 %v3873, 1e-12
    %v3886 = vadd.f32 %v3874, 1e-12
    %v3887 = vadd.f32 %v3875, 1e-12
    %v3888 = vrsqrt.pop %v3882
    %v3889 = vrsqrt.pop %v3883
    %v3890 = vrsqrt.pop %v3884
    %v3891 = vrsqrt.pop %v3885
    %v3892 = vrsqrt.pop %v3886
    %v3893 = vrsqrt.pop %v3887
    %v3894 = vmul.f32 %v3876, %v3888
    %v3895 = vmul.f32 %v3877, %v3889
    %v3896 = vmul.f32 %v3878, %v3890
    %v3897 = vmul.f32 %v3879, %v3891
    %v3898 = vmul.f32 %v3880, %v3892
    %v3899 = vmul.f32 %v3881, %v3893
    %v3900 = vlaneseq
    %v3901 = vshrl.u32 %v3900, 7
    %v3902 = vsub.s32 0, %v3901
    %v3903 = vrot.slane %v2201, %v3902
    %v3904 = vmul.f32 %v3894, %v3903
    %v3905 = vmul.f32 %v3895, %v3903
    %v3906 = vmul.f32 %v3896, %v3903
    %v3907 = vmul.f32 %v3897, %v3903
    %v3908 = vmul.f32 %v3898, %v3903
    %v3909 = vmul.f32 %v3899, %v3903
    %v3910 = vlaneseq
    %v3911 = vshrl.u32 %v3910, 7
    %v3912 = vsub.s32 0, %v3911
    %v3913 = vrot.slane %v2202, %v3912
    %v3914 = vadd.f32 %v3904, %v3913
    %v3915 = vadd.f32 %v3905, %v3913
    %v3916 = vadd.f32 %v3906, %v3913
    %v3917 = vadd.f32 %v3907, %v3913
    %v3918 = vadd.f32 %v3908, %v3913
    %v3919 = vadd.f32 %v3909, %v3913
    %v3920 = vlaneseq
    %v3921 = vshrl.u32 %v3920, 7
    %v3922 = vsub.s32 0, %v3921
    %v3923 = vrot.slane %v106, %v3922
    %3924 = vmatprep.subr.mxu0 0.0
    %3925 = vmatpush1.xpose.msra.mxu0 %v3914
    %3926 = vmatprep.subr.mxu0 0.0
    %3927 = vmatpush1.xpose.msra.mxu0 %v3915
    %3928 = vmatprep.subr.mxu0 0.0
    %3929 = vmatpush1.xpose.msra.mxu0 %v3916
    %3930 = vmatprep.subr.mxu0 0.0
    %3931 = vmatpush1.xpose.msra.mxu0 %v3917
    %3932 = vmatprep.subr.mxu0 0.0
    %3933 = vmatpush1.xpose.msra.mxu0 %v3918
    %3934 = vmatprep.subr.mxu0 0.0
    %3935 = vmatpush1.xpose.msra.mxu0 %v3919
    %3936 = vmatprep.subr.mxu0 0.0
    %3937 = vmatpush1.xpose.msra.mxu0 0.0
    %3938 = vmatprep.subr.mxu0 0.0
    %3939 = vmatpush1.xpose.msra.mxu0 0.0
    %3940 = vmatprep.subr.mxu0 0.0
    %3941 = vmatpush1.xpose.msra.mxu0 0.0
    %3942 = vmatprep.subr.mxu0 0.0
    %3943 = vmatpush1.xpose.msra.mxu0 0.0
    %3944 = vmatprep.subr.mxu0 0.0
    %3945 = vmatpush1.xpose.msra.mxu0 0.0
    %3946 = vmatprep.subr.mxu0 0.0
    %3947 = vmatpush1.xpose.msra.mxu0 0.0
    %3948 = vmatprep.subr.mxu0 0.0
    %3949 = vmatpush1.xpose.msra.mxu0 0.0
    %3950 = vmatprep.subr.mxu0 0.0
    %3951 = vmatpush1.xpose.msra.mxu0 0.0
    %3952 = vmatprep.subr.mxu0 0.0
    %3953 = vmatpush1.xpose.msra.mxu0 0.0
    %3954 = vmatprep.subr.mxu0 0.0
    %3955 = vmatpush1.xpose.msra.mxu0 0.0
    %3956 = vmatprep.subr.mxu0 0.0
    %3957 = vmatpush1.xpose.msra.mxu0 0.0
    %3958 = vmatprep.subr.mxu0 0.0
    %3959 = vmatpush1.xpose.msra.mxu0 0.0
    %3960 = vmatprep.subr.mxu0 0.0
    %3961 = vmatpush1.xpose.msra.mxu0 0.0
    %3962 = vmatprep.subr.mxu0 0.0
    %3963 = vmatpush1.xpose.msra.mxu0 0.0
    %3964 = vmatprep.subr.mxu0 0.0
    %3965 = vmatpush1.xpose.msra.mxu0 0.0
    %3966 = vmatprep.subr.mxu0 0.0
    %3967 = vmatpush1.xpose.msra.mxu0 0.0
    %3968 = vmatprep.subr.mxu0 0.0
    %3969 = vmatpush1.xpose.msra.mxu0 0.0
    %3970 = vmatprep.subr.mxu0 0.0
    %3971 = vmatpush1.xpose.msra.mxu0 0.0
    %3972 = vmatprep.subr.mxu0 0.0
    %3973 = vmatpush1.xpose.msra.mxu0 0.0
    %3974 = vmatprep.subr.mxu0 0.0
    %3975 = vmatpush1.xpose.msra.mxu0 0.0
    %3976 = vmatprep.subr.mxu0 0.0
    %3977 = vmatpush1.xpose.msra.mxu0 0.0
    %3978 = vmatprep.subr.mxu0 0.0
    %3979 = vmatpush1.xpose.msra.mxu0 0.0
    %3980 = vmatprep.subr.mxu0 0.0
    %3981 = vmatpush1.xpose.msra.mxu0 0.0
    %3982 = vmatprep.subr.mxu0 0.0
    %3983 = vmatpush1.xpose.msra.mxu0 0.0
    %3984 = vmatprep.subr.mxu0 0.0
    %3985 = vmatpush1.xpose.msra.mxu0 0.0
    %3986 = vmatprep.subr.mxu0 0.0
    %3987 = vmatpush1.xpose.msra.mxu0 0.0
    %3988 = vmatprep.mubr.f32.mxu0 0.0
    %3989 = vmatmul.mubr.f32.gmra.mrb[0].mxu0 %v3923
    %v3990 = vpop.f32.mrb[0].mxu0
    %v3991 = vadd.f32 0.0, %v3990
    %v3992 = vpop.f32.mrb[0].mxu0
    %3993 = vdwg.mxu0
    %v3994 = vmul.f32 %v3991, 0.17677669
    %vm3995 = vcmp.gt.f32.partialorder %v103, 0.0
    %v3996 = vsel %vm3995, %v3994, -1e+30
    %vm3997 = vcmask 390144
    %v3998 = vsel %vm3997, %v3996, -inf
    %3999 = vmax.xlane.f32.xlu0 %v3998
    %v4000 = vpop.xlane.xlu0 %3999
    %v4001 = vsub.f32 %v3996, %v4000
    %v4002 = vmul.f32 %v4001, 1.442695
    %v4003 = vpow.pop %v4002
    %v4004 = vsel %vm3997, %v4003, 0.0
    %4005 = vadd.xlane.f32.xlu0 %v4004
    %v4006 = vpop.xlane.xlu0 %4005
    %v4007 = vrcp.pop %v4006
    %v4008 = vmul.f32 %v4003, %v4007
    %v4010 = vsel %vm1207, %v4008, 0
    %4012 = vmatprep.subr.mxu0 0.0
    %4013 = vmatpush1.msra.mxu0 %v3914
    %4014 = vmatprep.subr.mxu0 0.0
    %4015 = vmatpush1.msra.mxu0 %v3915
    %4016 = vmatprep.subr.mxu0 0.0
    %4017 = vmatpush1.msra.mxu0 %v3916
    %4018 = vmatprep.subr.mxu0 0.0
    %4019 = vmatpush1.msra.mxu0 %v3917
    %4020 = vmatprep.subr.mxu0 0.0
    %4021 = vmatpush1.msra.mxu0 %v3918
    %4022 = vmatprep.subr.mxu0 0.0
    %4023 = vmatpush1.msra.mxu0 %v3919
    %4024 = vmatprep.subr.mxu0 0.0
    %4025 = vmatpush1.msra.mxu0 0.0
    %4026 = vmatprep.subr.mxu0 0.0
    %4027 = vmatpush1.msra.mxu0 0.0
    %4028 = vmatprep.subr.mxu0 0.0
    %4029 = vmatpush1.msra.mxu0 0.0
    %4030 = vmatprep.subr.mxu0 0.0
    %4031 = vmatpush1.msra.mxu0 0.0
    %4032 = vmatprep.subr.mxu0 0.0
    %4033 = vmatpush1.msra.mxu0 0.0
    %4034 = vmatprep.subr.mxu0 0.0
    %4035 = vmatpush1.msra.mxu0 0.0
    %4036 = vmatprep.subr.mxu0 0.0
    %4037 = vmatpush1.msra.mxu0 0.0
    %4038 = vmatprep.subr.mxu0 0.0
    %4039 = vmatpush1.msra.mxu0 0.0
    %4040 = vmatprep.subr.mxu0 0.0
    %4041 = vmatpush1.msra.mxu0 0.0
    %4042 = vmatprep.subr.mxu0 0.0
    %4043 = vmatpush1.msra.mxu0 0.0
    %4044 = vmatprep.subr.mxu0 0.0
    %4045 = vmatpush1.msra.mxu0 0.0
    %4046 = vmatprep.subr.mxu0 0.0
    %4047 = vmatpush1.msra.mxu0 0.0
    %4048 = vmatprep.subr.mxu0 0.0
    %4049 = vmatpush1.msra.mxu0 0.0
    %4050 = vmatprep.subr.mxu0 0.0
    %4051 = vmatpush1.msra.mxu0 0.0
    %4052 = vmatprep.subr.mxu0 0.0
    %4053 = vmatpush1.msra.mxu0 0.0
    %4054 = vmatprep.subr.mxu0 0.0
    %4055 = vmatpush1.msra.mxu0 0.0
    %4056 = vmatprep.subr.mxu0 0.0
    %4057 = vmatpush1.msra.mxu0 0.0
    %4058 = vmatprep.subr.mxu0 0.0
    %4059 = vmatpush1.msra.mxu0 0.0
    %4060 = vmatprep.subr.mxu0 0.0
    %4061 = vmatpush1.msra.mxu0 0.0
    %4062 = vmatprep.subr.mxu0 0.0
    %4063 = vmatpush1.msra.mxu0 0.0
    %4064 = vmatprep.subr.mxu0 0.0
    %4065 = vmatpush1.msra.mxu0 0.0
    %4066 = vmatprep.subr.mxu0 0.0
    %4067 = vmatpush1.msra.mxu0 0.0
    %4068 = vmatprep.subr.mxu0 0.0
    %4069 = vmatpush1.msra.mxu0 0.0
    %4070 = vmatprep.subr.mxu0 0.0
    %4071 = vmatpush1.msra.mxu0 0.0
    %4072 = vmatprep.subr.mxu0 0.0
    %4073 = vmatpush1.msra.mxu0 0.0
    %4074 = vmatprep.subr.mxu0 0.0
    %4075 = vmatpush1.msra.mxu0 0.0
    %4076 = vmatprep.mubr.f32.mxu0 0.0
    %4077 = vmatmul.mubr.f32.gmra.mrb[0].mxu0 %v4010
    %v4078 = vpop.f32.mrb[0].mxu0
    %v4079 = vadd.f32 0.0, %v4078
    %v4080 = vpop.f32.mrb[0].mxu0
    %4081 = vdwg.mxu0
    %4082 = vst [vmem:[#allocation11] sm:$0x3f] %v4079
    // Predicated region
    $region46: #{tpu_custom_call.1} parent=1 // pred_check
      _
    $region47: #{tpu_custom_call.1} parent=1 // pred_check_branch
      %4084 = sbr.rel (0) target = $region49
    $region48: #{tpu_custom_call.1} parent=1 // pred_region
      %s4086 = ssub.s32 128, 128
      %4087 = vsyncadd [#allocation4], %s4086
      %s4089 = sshll.u32 [#allocation11], 4
      %s4090 = int_to_ptr.vmem [resolvable:$true] %s4089
      %4092 = dma.vmem_to_hbm [thread:$0]  %s4090, 128, %s6, [#allocation4]
    $region49: #{tpu_custom_call.1} parent=1 // pred_fallthru
      _
    // Predicated region
    $region50: #{tpu_custom_call.1} parent=1 // pred_check
      _
    $region51: #{tpu_custom_call.1} parent=1 // pred_check_branch
      %4094 = sbr.rel (0) target = $region53
    $region52: #{tpu_custom_call.1} parent=1 // pred_region
      %4095 = dma.done [#allocation4], 128
    $region53: #{tpu_custom_call.1} parent=1 // pred_fallthru
      _
    %4096 = vsyncpa [#allocation3], 1
    %4097 = vsyncpa [#allocation6], 1
    %4098 = vsyncpa [#allocation9], 1
    %4099 = vsyncpa [#allocation4], 1

</llo_original>
